<compile_context>
chip_gen: v7x
topology: tpu7x:2x2x1
jax: 0.10.0
libtpu: 0.0.40
codegen_flags: <defaults>
</compile_context>

<pallas_src>
import functools

import jax
import jax.numpy as jnp
from jax.experimental import pallas as pl
from jax.experimental.pallas import tpu as pltpu


LANE = 128
NEG_INF = -1e30


# ----------------------------- hardware helpers -----------------------------

def _vmem_capacity_bytes():
    """Physical VMEM per TensorCore; conservative fallback if the query fails."""
    try:
        return int(pltpu.get_tpu_info().vmem_capacity_bytes)
    except Exception:
        return 64 * 1024 * 1024          # v7x lower bound (v5e/v6e have 128 MiB)


def _default_vmem_limit():
    # ~48 MiB on v7x (64 MiB physical), ~96 MiB on v5e/v6e (128 MiB physical).
    return max(32 * 1024 * 1024, (_vmem_capacity_bytes() * 3) // 4)


def _x_resident_auto(n, f_in):
    # Pin the whole bf16 feature matrix in VMEM when it is comfortably small
    # (the pipeline may still double-buffer it).  On v5e/v6e with real
    # ogbn-arxiv (169K x 128 bf16 ~= 43 MiB) force x_resident=True explicitly
    # and raise vmem_limit_bytes; on v7x (64 MiB VMEM) keep X streamed.
    return 2 * (n * f_in * 2) <= _vmem_capacity_bytes() // 2


# ----------------------------- Pallas kernels ------------------------------

def _accumulate_agg(a_ref, x_ref, acc_ref, *, tile_k, x_resident):
    """acc += A_tile @ X_kslice  (int8 A upcast in-kernel, f32 accumulation)."""
    k = pl.program_id(1)

    @pl.when(k == 0)
    def _():
        acc_ref[...] = jnp.zeros_like(acc_ref)

    # A is stored as raw int8 edge counts (half the HBM bytes of bf16); the
    # upcast is free VPU filler while the kernel is HBM-bound on streaming A.
    # TODO(synk): on v7x store A as fp8 e4m3 and feed the MXU without upcast.
    a = a_ref[...].astype(jnp.float32).astype(jnp.bfloat16)
    if x_resident:
        start = pl.multiple_of(k * tile_k, tile_k)
        xk = x_ref[pl.ds(start, tile_k), :]
    else:
        xk = x_ref[...]
    acc_ref[...] += jnp.dot(a, xk, preferred_element_type=jnp.float32)


def _sage_hidden_kernel(a_ref, x_ref, xself_ref, deginv_ref, wl_ref, wr_ref,
                        b_ref, o_ref, acc_ref, *, tile_k, x_resident):
    """One SAGEConv layer + ReLU for a node tile; K-tiled mean aggregation."""
    _accumulate_agg(a_ref, x_ref, acc_ref, tile_k=tile_k, x_resident=x_resident)

    @pl.when(pl.program_id(1) == pl.num_programs(1) - 1)
    def _():
        # Deferred mean normalization: per-row 1/deg applied once, in f32.
        agg = (acc_ref[...] * deginv_ref[...]).astype(jnp.bfloat16)
        # Two dots on separate weight refs (no lane-axis concat temporary).
        h = (jnp.dot(agg, wl_ref[...], preferred_element_type=jnp.float32)
             + jnp.dot(xself_ref[...], wr_ref[...],
                       preferred_element_type=jnp.float32)
             + b_ref[...])
        o_ref[...] = jnp.maximum(h, 0.0).astype(o_ref.dtype)


def _sage_out_kernel(a_ref, x_ref, xself_ref, deginv_ref, wl_ref, wr_ref,
                     b_ref, wout_ref, bout_ref, o_ref, acc_ref,
                     *, tile_k, x_resident):
    """SAGEConv layer 2 + ReLU fused with the decode head (Linear + softmax)."""
    _accumulate_agg(a_ref, x_ref, acc_ref, tile_k=tile_k, x_resident=x_resident)

    @pl.when(pl.program_id(1) == pl.num_programs(1) - 1)
    def _():
        agg = (acc_ref[...] * deginv_ref[...]).astype(jnp.bfloat16)
        h = (jnp.dot(agg, wl_ref[...], preferred_element_type=jnp.float32)
             + jnp.dot(xself_ref[...], wr_ref[...],
                       preferred_element_type=jnp.float32)
             + b_ref[...])
        h = jnp.maximum(h, 0.0)             # ReLU in f32 (v5e has no bf16 VPU path)
        # F.dropout(p=0.5) is identity in eval mode.
        logits = (jnp.dot(h.astype(jnp.bfloat16), wout_ref[...],
                          preferred_element_type=jnp.float32) + bout_ref[...])
        m = jnp.max(logits, axis=-1, keepdims=True)
        e = jnp.exp(logits - m)             # padded classes: bias = -1e30 -> exp -> 0
        denom = jnp.sum(e, axis=-1, keepdims=True)
        o_ref[...] = e * pl.reciprocal(denom, approx=True)


# ------------------------------ host wrappers -------------------------------

def sage_conv(a_i8, x, deginv, wl, wr, b, head=None, *, tile_n, tile_k,
              x_resident=None, vmem_limit_bytes=None):
    """relu(mean_agg(x) @ wl + x @ wr + b), optionally fused Linear+softmax head.

    a_i8   : (N, N)  int8   un-normalized adjacency (edge counts, dst-major rows)
    x      : (N, Fin) bf16  node features
    deginv : (N, 1)  f32    1 / in-degree (0 for isolated nodes)
    wl, wr : (Fin, Fout) bf16 ; b : (1, Fout) f32
    head   : None, or (wout (Fout, C) bf16, bout (1, C) f32) for the fused decode.
    """
    n, f_in = x.shape
    f_out = wl.shape[1]
    tile_n = min(tile_n, n)
    tile_k = min(tile_k, n)
    # TODO(synk): real ogbn-arxiv (169,343 nodes) needs host-side node padding
    # (or pl.cdiv grids + in-kernel masking) so N is a tile multiple.
    assert n % tile_n == 0 and n % tile_k == 0
    grid = (n // tile_n, n // tile_k)

    if x_resident is None:
        x_resident = _x_resident_auto(n, f_in)
    if vmem_limit_bytes is None:
        vmem_limit_bytes = _default_vmem_limit()

    # Deeper buffering on the A stream only when the K axis is long enough for
    # the pipeline to be DMA-exposed (demo grids skip it).
    if grid[1] >= 4:
        a_spec = pl.BlockSpec((tile_n, tile_k), lambda i, k: (i, k),
                              pipeline_mode=pl.Buffered(3))
    else:
        a_spec = pl.BlockSpec((tile_n, tile_k), lambda i, k: (i, k))

    if x_resident:
        # Whole feature matrix pinned in VMEM (constant block index -> single
        # DMA); eliminates the N^2*Fin/tile_n X re-stream on v5e/v6e.
        x_spec = pl.BlockSpec((n, f_in), lambda i, k: (0, 0))
    else:
        x_spec = pl.BlockSpec((tile_k, f_in), lambda i, k: (k, 0))

    in_specs = [
        a_spec,                                               # A tile (int8)
        x_spec,                                               # X (k-slice or resident)
        pl.BlockSpec((tile_n, f_in), lambda i, k: (i, 0)),    # X self tile
        pl.BlockSpec((tile_n, 1), lambda i, k: (i, 0)),       # 1/deg (f32)
        pl.BlockSpec((f_in, f_out), lambda i, k: (0, 0)),     # Wl
        pl.BlockSpec((f_in, f_out), lambda i, k: (0, 0)),     # Wr
        pl.BlockSpec((1, f_out), lambda i, k: (0, 0)),        # bias
    ]
    operands = [a_i8, x, x, deginv, wl, wr, b]

    if head is None:
        kernel = functools.partial(_sage_hidden_kernel, tile_k=tile_k,
                                   x_resident=x_resident)
        out_cols, out_dtype = f_out, jnp.bfloat16
    else:
        wout, bout = head
        out_cols, out_dtype = wout.shape[1], jnp.float32
        in_specs += [pl.BlockSpec((f_out, out_cols), lambda i, k: (0, 0)),
                     pl.BlockSpec((1, out_cols), lambda i, k: (0, 0))]
        operands += [wout, bout]
        kernel = functools.partial(_sage_out_kernel, tile_k=tile_k,
                                   x_resident=x_resident)

    return pl.pallas_call(
        kernel,
        out_shape=jax.ShapeDtypeStruct((n, out_cols), out_dtype),
        grid_spec=pltpu.PrefetchScalarGridSpec(
            num_scalar_prefetch=0,
            grid=grid,
            in_specs=in_specs,
            out_specs=pl.BlockSpec((tile_n, out_cols), lambda i, k: (i, 0)),
            scratch_shapes=[pltpu.VMEM((tile_n, f_in), jnp.float32)],
        ),
        compiler_params=pltpu.CompilerParams(
            dimension_semantics=("parallel", "arbitrary"),
            vmem_limit_bytes=vmem_limit_bytes),
    )(*operands)


@functools.partial(jax.jit, static_argnames=("num_classes", "tile_n", "tile_k"))
def sage_forward(x, a_i8, deginv, params, *, num_classes,
                 tile_n=1024, tile_k=2048):
    xb = x.astype(jnp.bfloat16)
    h1 = sage_conv(a_i8, xb, deginv, params["wl1"], params["wr1"], params["b1"],
                   tile_n=tile_n, tile_k=tile_k)
    # F.dropout(p=0.5) between/after layers: identity in eval mode.
    probs = sage_conv(a_i8, h1, deginv, params["wl2"], params["wr2"],
                      params["b2"], head=(params["wout"], params["bout"]),
                      tile_n=tile_n, tile_k=tile_k)
    return probs[:, :num_classes]            # drop lane-padding columns


# --------------------------- graph / parameter prep --------------------------

def build_adjacency(edge_index, num_nodes):
    """Un-normalized dense adjacency (int8 edge counts) + f32 per-row 1/deg.

    A[dst, src] = #edges (src -> dst).  Mean normalization is deferred to the
    in-kernel f32 scale so A ships half the HBM bytes and 1/deg is never
    quantized to bf16.
    TODO(synk): at real ogbn-arxiv scale replace this dense A with a CSR /
    padded-neighbor gather (PrefetchScalarGridSpec + manual make_async_copy).
    """
    src, dst = edge_index[0], edge_index[1]
    counts = jnp.zeros((num_nodes, num_nodes), jnp.float32).at[dst, src].add(1.0)
    counts = jnp.minimum(counts, 127.0)      # int8 range; never hit on demo data
    deg = jnp.sum(counts, axis=1, keepdims=True)
    deginv = jnp.where(deg > 0, 1.0 / jnp.maximum(deg, 1.0), 0.0)
    return counts.astype(jnp.int8), deginv


def init_raw_params(key, num_features, hidden1, hidden2, num_classes):
    """Glorot-uniform raw params, stored pre-transposed [in, out], f32."""
    def glorot(k, fan_in, fan_out):
        lim = jnp.sqrt(6.0 / (fan_in + fan_out))
        return jax.random.uniform(k, (fan_in, fan_out), jnp.float32, -lim, lim)

    ks = jax.random.split(key, 8)
    return {
        "wl1": glorot(ks[0], num_features, hidden1),
        "wr1": glorot(ks[1], num_features, hidden1),
        "b1": jnp.zeros((1, hidden1), jnp.float32),
        "wl2": glorot(ks[2], hidden1, hidden2),
        "wr2": glorot(ks[3], hidden1, hidden2),
        "b2": jnp.zeros((1, hidden2), jnp.float32),
        "wout": glorot(ks[4], hidden2, num_classes),
        "bout": jnp.zeros((1, num_classes), jnp.float32),
    }


def _pad_cols(a, target):
    pad = target - a.shape[1]
    return a if pad == 0 else jnp.pad(a, ((0, 0), (0, pad)))


def _pad_rows(a, target):
    pad = target - a.shape[0]
    return a if pad == 0 else jnp.pad(a, ((0, pad), (0, 0)))


def prepare_params(raw):
    """Lane-pad narrow dims to 128 and cast matmul weights to bf16."""
    h2p = max(LANE, raw["wl2"].shape[1])     # hidden2 (64) -> 128
    cp = max(LANE, raw["wout"].shape[1])     # classes (40) -> 128

    nc = raw["bout"].shape[1]
    bout = jnp.full((1, cp), NEG_INF, jnp.float32).at[:, :nc].set(raw["bout"])

    return {
        "wl1": raw["wl1"].astype(jnp.bfloat16),
        "wr1": raw["wr1"].astype(jnp.bfloat16),
        "b1": raw["b1"].astype(jnp.float32),
        "wl2": _pad_cols(raw["wl2"], h2p).astype(jnp.bfloat16),
        "wr2": _pad_cols(raw["wr2"], h2p).astype(jnp.bfloat16),
        "b2": _pad_cols(raw["b2"], h2p).astype(jnp.float32),  # zero pad: relu(0)=0
        "wout": _pad_cols(_pad_rows(raw["wout"], h2p), cp).astype(jnp.bfloat16),
        "bout": bout,                                          # -inf pad -> softmax 0
    }


def sage_ref(x, a_i8, deginv, raw):
    """Pure-JAX f32 reference with the original module's (eval-mode) semantics."""
    adj = a_i8.astype(jnp.float32) * deginv

    def layer(h, wl, wr, b):
        return jax.nn.relu((adj @ h) @ wl + h @ wr + b)

    h1 = layer(x, raw["wl1"], raw["wr1"], raw["b1"])
    h2 = layer(h1, raw["wl2"], raw["wr2"], raw["b2"])
    return jax.nn.softmax(h2 @ raw["wout"] + raw["bout"], axis=1)


if __name__ == "__main__":
    # dataset='arxiv' -> num_features=128, num_classes=40; hidden 128 / 64.
    NUM_NODES = 256
    NUM_EDGES = 1024
    NUM_FEATURES = 128
    HIDDEN1 = 128
    HIDDEN2 = 64
    NUM_CLASSES = 40
    # Demo tiles: 2 node tiles keep both v7x TensorCores fed, 2 K steps exercise
    # the accumulator.  At real graph sizes use tile_n=1024-2048, tile_k=2048-4096.
    TILE_N = 128
    TILE_K = 128

    key = jax.random.PRNGKey(0)
    k_x, k_e, k_p = jax.random.split(key, 3)

    x = jax.random.normal(k_x, (NUM_NODES, NUM_FEATURES), jnp.float32)
    edge_index = jax.random.randint(k_e, (2, NUM_EDGES), 0, NUM_NODES,
                                    dtype=jnp.int32)
    a_i8, deginv = build_adjacency(edge_index, NUM_NODES)

    raw = init_raw_params(k_p, NUM_FEATURES, HIDDEN1, HIDDEN2, NUM_CLASSES)
    params = prepare_params(raw)

    out = sage_forward(x, a_i8, deginv, params, num_classes=NUM_CLASSES,
                       tile_n=TILE_N, tile_k=TILE_K)
    out = jax.block_until_ready(out)

    assert out.shape == (NUM_NODES, NUM_CLASSES)
    # softmax rows sum to ~1 (approx reciprocal -> loose tolerance)
    assert jnp.allclose(jnp.sum(out, axis=1), 1.0, atol=1e-2)
    # bf16 matmuls vs f32 reference
    ref = sage_ref(x, a_i8, deginv, raw)
    err = float(jnp.max(jnp.abs(out - ref)))
    assert err < 5e-2, err
    print("KERNEL_OK")
</pallas_src>

<mosaic_0001>
module attributes {stable_mosaic.version = 11 : i64} {
  func.func @_sage_hidden_kernel(%arg0: i32, %arg1: i32, %arg2: memref<128x128xi8, #tpu.memory_space<vmem>>, %arg3: memref<256x128xbf16, #tpu.memory_space<vmem>>, %arg4: memref<128x128xbf16, #tpu.memory_space<vmem>>, %arg5: memref<128x1xf32, #tpu.memory_space<vmem>>, %arg6: memref<128x128xbf16, #tpu.memory_space<vmem>>, %arg7: memref<128x128xbf16, #tpu.memory_space<vmem>>, %arg8: memref<1x128xf32, #tpu.memory_space<vmem>>, %arg9: memref<128x128xbf16, #tpu.memory_space<vmem>>, %arg10: memref<128x128xf32, #tpu.memory_space<vmem>>) attributes {dimension_semantics = [#tpu.dimension_semantics<parallel>, #tpu.dimension_semantics<arbitrary>], iteration_bounds = array<i64: 2, 2>, scalar_prefetch = 0 : i64, scratch_operands = 1 : i64, tpu.core_type = #tpu.core_type<tc>, window_params = [{transform_indices = @transform_0, window_bounds = array<i64: 128, 128>}, {pipeline_mode = #tpu.pipeline_mode<synchronous>, transform_indices = @transform_1, window_bounds = array<i64: 256, 128>}, {transform_indices = @transform_2, window_bounds = array<i64: 128, 128>}, {transform_indices = @transform_3, window_bounds = array<i64: 128, 1>}, {pipeline_mode = #tpu.pipeline_mode<synchronous>, transform_indices = @transform_4, window_bounds = array<i64: 128, 128>}, {pipeline_mode = #tpu.pipeline_mode<synchronous>, transform_indices = @transform_5, window_bounds = array<i64: 128, 128>}, {pipeline_mode = #tpu.pipeline_mode<synchronous>, transform_indices = @transform_6, window_bounds = array<i64: 1, 128>}, {transform_indices = @transform_7, window_bounds = array<i64: 128, 128>}]} {
    %c0_i32 = arith.constant 0 : i32
    %0 = arith.cmpi eq, %arg1, %c0_i32 : i32
    %1 = arith.extui %0 : i1 to i32
    %c0_i32_0 = arith.constant 0 : i32
    %2 = arith.cmpi ne, %1, %c0_i32_0 : i32
    scf.if %2 {
      %cst_8 = arith.constant 0.000000e+00 : f32
      %17 = vector.broadcast %cst_8 : f32 to vector<128x128xf32>
      %c0_9 = arith.constant 0 : index
      %c0_10 = arith.constant 0 : index
      %18 = vector.load %arg10[%c0_9, %c0_10] : memref<128x128xf32, #tpu.memory_space<vmem>>, vector<128x128xf32>
      tpu.vector_store %arg10[%c0_9, %c0_10], %17 {strides = array<i32>} : memref<128x128xf32, #tpu.memory_space<vmem>>, vector<128x128xf32>,
    } else {
    }
    %c0 = arith.constant 0 : index
    %c0_1 = arith.constant 0 : index
    %3 = vector.load %arg2[%c0, %c0_1] : memref<128x128xi8, #tpu.memory_space<vmem>>, vector<128x128xi8>
    %4 = arith.sitofp %3 : vector<128x128xi8> to vector<128x128xf32>
    %5 = arith.truncf %4 : vector<128x128xf32> to vector<128x128xbf16>
    %c128_i32 = arith.constant 128 : i32
    %6 = arith.muli %arg1, %c128_i32 : i32
    %7 = tpu.assume_multiple %6, 128 : i32
    %8 = arith.index_cast %7 : i32 to index
    %c0_2 = arith.constant 0 : index
    %9 = vector.load %arg3[%8, %c0_2] : memref<256x128xbf16, #tpu.memory_space<vmem>>, vector<128x128xbf16>
    %c0_3 = arith.constant 0 : index
    %c0_4 = arith.constant 0 : index
    %10 = vector.load %arg10[%c0_3, %c0_4] : memref<128x128xf32, #tpu.memory_space<vmem>>, vector<128x128xf32>
    %cst = arith.constant dense<0.000000e+00> : vector<128x128xf32>
    %11 = tpu.matmul %5, %9, %cst {dimension_numbers = #tpu.dot_dimension_numbers<[1], [0], [0], [1], [0, 0, 1, 1], [], []>} : vector<128x128xbf16>, vector<128x128xbf16>, vector<128x128xf32> -> vector<128x128xf32>
    %12 = arith.addf %10, %11 : vector<128x128xf32>
    %c0_5 = arith.constant 0 : index
    %c0_6 = arith.constant 0 : index
    %13 = vector.load %arg10[%c0_5, %c0_6] : memref<128x128xf32, #tpu.memory_space<vmem>>, vector<128x128xf32>
    tpu.vector_store %arg10[%c0_5, %c0_6], %12 {strides = array<i32>} : memref<128x128xf32, #tpu.memory_space<vmem>>, vector<128x128xf32>,
    %c1_i32 = arith.constant 1 : i32
    %14 = arith.cmpi eq, %arg1, %c1_i32 : i32
    %15 = arith.extui %14 : i1 to i32
    %c0_i32_7 = arith.constant 0 : i32
    %16 = arith.cmpi ne, %15, %c0_i32_7 : i32
    scf.if %16 {
      %c0_8 = arith.constant 0 : index
      %c0_9 = arith.constant 0 : index
      %17 = vector.load %arg10[%c0_8, %c0_9] : memref<128x128xf32, #tpu.memory_space<vmem>>, vector<128x128xf32>
      %c0_10 = arith.constant 0 : index
      %c0_11 = arith.constant 0 : index
      %18 = vector.load %arg5[%c0_10, %c0_11] : memref<128x1xf32, #tpu.memory_space<vmem>>, vector<128x1xf32>
      %19 = vector.broadcast %18 : vector<128x1xf32> to vector<128x128xf32>
      %20 = arith.mulf %17, %19 : vector<128x128xf32>
      %21 = arith.truncf %20 : vector<128x128xf32> to vector<128x128xbf16>
      %c0_12 = arith.constant 0 : index
      %c0_13 = arith.constant 0 : index
      %22 = vector.load %arg6[%c0_12, %c0_13] : memref<128x128xbf16, #tpu.memory_space<vmem>>, vector<128x128xbf16>
      %cst_14 = arith.constant dense<0.000000e+00> : vector<128x128xf32>
      %23 = tpu.matmul %21, %22, %cst_14 {dimension_numbers = #tpu.dot_dimension_numbers<[1], [0], [0], [1], [0, 0, 1, 1], [], []>} : vector<128x128xbf16>, vector<128x128xbf16>, vector<128x128xf32> -> vector<128x128xf32>
      %c0_15 = arith.constant 0 : index
      %c0_16 = arith.constant 0 : index
      %24 = vector.load %arg4[%c0_15, %c0_16] : memref<128x128xbf16, #tpu.memory_space<vmem>>, vector<128x128xbf16>
      %c0_17 = arith.constant 0 : index
      %c0_18 = arith.constant 0 : index
      %25 = vector.load %arg7[%c0_17, %c0_18] : memref<128x128xbf16, #tpu.memory_space<vmem>>, vector<128x128xbf16>
      %cst_19 = arith.constant dense<0.000000e+00> : vector<128x128xf32>
      %26 = tpu.matmul %24, %25, %cst_19 {dimension_numbers = #tpu.dot_dimension_numbers<[1], [0], [0], [1], [0, 0, 1, 1], [], []>} : vector<128x128xbf16>, vector<128x128xbf16>, vector<128x128xf32> -> vector<128x128xf32>
      %27 = arith.addf %23, %26 : vector<128x128xf32>
      %c0_20 = arith.constant 0 : index
      %c0_21 = arith.constant 0 : index
      %28 = vector.load %arg8[%c0_20, %c0_21] : memref<1x128xf32, #tpu.memory_space<vmem>>, vector<1x128xf32>
      %29 = vector.broadcast %28 : vector<1x128xf32> to vector<128x128xf32>
      %30 = arith.addf %27, %29 : vector<128x128xf32>
      %cst_22 = arith.constant 0.000000e+00 : f32
      %31 = vector.broadcast %cst_22 : f32 to vector<128x128xf32>
      %32 = arith.maximumf %30, %31 : vector<128x128xf32>
      %33 = arith.truncf %32 : vector<128x128xf32> to vector<128x128xbf16>
      %c0_23 = arith.constant 0 : index
      %c0_24 = arith.constant 0 : index
      %34 = vector.load %arg9[%c0_23, %c0_24] : memref<128x128xbf16, #tpu.memory_space<vmem>>, vector<128x128xbf16>
      tpu.vector_store %arg9[%c0_23, %c0_24], %33 {strides = array<i32>} : memref<128x128xbf16, #tpu.memory_space<vmem>>, vector<128x128xbf16>,
    } else {
    }
    return
  }
  func.func @transform_0(%arg0: i32, %arg1: i32) -> (i32, i32) {
    %c0_i32 = arith.constant 0 : i32
    return %arg0, %arg1 : i32, i32
  }
  func.func @transform_1(%arg0: i32, %arg1: i32) -> (i32, i32) {
    %c0_i32 = arith.constant 0 : i32
    %c0_i32_0 = arith.constant 0 : i32
    %c0_i32_1 = arith.constant 0 : i32
    return %c0_i32, %c0_i32_0 : i32, i32
  }
  func.func @transform_2(%arg0: i32, %arg1: i32) -> (i32, i32) {
    %c0_i32 = arith.constant 0 : i32
    %c0_i32_0 = arith.constant 0 : i32
    return %arg0, %c0_i32 : i32, i32
  }
  func.func @transform_3(%arg0: i32, %arg1: i32) -> (i32, i32) {
    %c0_i32 = arith.constant 0 : i32
    %c0_i32_0 = arith.constant 0 : i32
    return %arg0, %c0_i32 : i32, i32
  }
  func.func @transform_4(%arg0: i32, %arg1: i32) -> (i32, i32) {
    %c0_i32 = arith.constant 0 : i32
    %c0_i32_0 = arith.constant 0 : i32
    %c0_i32_1 = arith.constant 0 : i32
    return %c0_i32, %c0_i32_0 : i32, i32
  }
  func.func @transform_5(%arg0: i32, %arg1: i32) -> (i32, i32) {
    %c0_i32 = arith.constant 0 : i32
    %c0_i32_0 = arith.constant 0 : i32
    %c0_i32_1 = arith.constant 0 : i32
    return %c0_i32, %c0_i32_0 : i32, i32
  }
  func.func @transform_6(%arg0: i32, %arg1: i32) -> (i32, i32) {
    %c0_i32 = arith.constant 0 : i32
    %c0_i32_0 = arith.constant 0 : i32
    %c0_i32_1 = arith.constant 0 : i32
    return %c0_i32, %c0_i32_0 : i32, i32
  }
  func.func @transform_7(%arg0: i32, %arg1: i32) -> (i32, i32) {
    %c0_i32 = arith.constant 0 : i32
    %c0_i32_0 = arith.constant 0 : i32
    return %arg0, %c0_i32 : i32, i32
  }
}

module attributes {stable_mosaic.version = 11 : i64} {
  func.func @_sage_out_kernel(%arg0: i32, %arg1: i32, %arg2: memref<128x128xi8, #tpu.memory_space<vmem>>, %arg3: memref<256x128xbf16, #tpu.memory_space<vmem>>, %arg4: memref<128x128xbf16, #tpu.memory_space<vmem>>, %arg5: memref<128x1xf32, #tpu.memory_space<vmem>>, %arg6: memref<128x128xbf16, #tpu.memory_space<vmem>>, %arg7: memref<128x128xbf16, #tpu.memory_space<vmem>>, %arg8: memref<1x128xf32, #tpu.memory_space<vmem>>, %arg9: memref<128x128xbf16, #tpu.memory_space<vmem>>, %arg10: memref<1x128xf32, #tpu.memory_space<vmem>>, %arg11: memref<128x128xf32, #tpu.memory_space<vmem>>, %arg12: memref<128x128xf32, #tpu.memory_space<vmem>>) attributes {dimension_semantics = [#tpu.dimension_semantics<parallel>, #tpu.dimension_semantics<arbitrary>], iteration_bounds = array<i64: 2, 2>, scalar_prefetch = 0 : i64, scratch_operands = 1 : i64, tpu.core_type = #tpu.core_type<tc>, window_params = [{transform_indices = @transform_0, window_bounds = array<i64: 128, 128>}, {pipeline_mode = #tpu.pipeline_mode<synchronous>, transform_indices = @transform_1, window_bounds = array<i64: 256, 128>}, {transform_indices = @transform_2, window_bounds = array<i64: 128, 128>}, {transform_indices = @transform_3, window_bounds = array<i64: 128, 1>}, {pipeline_mode = #tpu.pipeline_mode<synchronous>, transform_indices = @transform_4, window_bounds = array<i64: 128, 128>}, {pipeline_mode = #tpu.pipeline_mode<synchronous>, transform_indices = @transform_5, window_bounds = array<i64: 128, 128>}, {pipeline_mode = #tpu.pipeline_mode<synchronous>, transform_indices = @transform_6, window_bounds = array<i64: 1, 128>}, {pipeline_mode = #tpu.pipeline_mode<synchronous>, transform_indices = @transform_7, window_bounds = array<i64: 128, 128>}, {pipeline_mode = #tpu.pipeline_mode<synchronous>, transform_indices = @transform_8, window_bounds = array<i64: 1, 128>}, {transform_indices = @transform_9, window_bounds = array<i64: 128, 128>}]} {
    %c0_i32 = arith.constant 0 : i32
    %0 = arith.cmpi eq, %arg1, %c0_i32 : i32
    %1 = arith.extui %0 : i1 to i32
    %c0_i32_0 = arith.constant 0 : i32
    %2 = arith.cmpi ne, %1, %c0_i32_0 : i32
    scf.if %2 {
      %cst_8 = arith.constant 0.000000e+00 : f32
      %17 = vector.broadcast %cst_8 : f32 to vector<128x128xf32>
      %c0_9 = arith.constant 0 : index
      %c0_10 = arith.constant 0 : index
      %18 = vector.load %arg12[%c0_9, %c0_10] : memref<128x128xf32, #tpu.memory_space<vmem>>, vector<128x128xf32>
      tpu.vector_store %arg12[%c0_9, %c0_10], %17 {strides = array<i32>} : memref<128x128xf32, #tpu.memory_space<vmem>>, vector<128x128xf32>,
    } else {
    }
    %c0 = arith.constant 0 : index
    %c0_1 = arith.constant 0 : index
    %3 = vector.load %arg2[%c0, %c0_1] : memref<128x128xi8, #tpu.memory_space<vmem>>, vector<128x128xi8>
    %4 = arith.sitofp %3 : vector<128x128xi8> to vector<128x128xf32>
    %5 = arith.truncf %4 : vector<128x128xf32> to vector<128x128xbf16>
    %c128_i32 = arith.constant 128 : i32
    %6 = arith.muli %arg1, %c128_i32 : i32
    %7 = tpu.assume_multiple %6, 128 : i32
    %8 = arith.index_cast %7 : i32 to index
    %c0_2 = arith.constant 0 : index
    %9 = vector.load %arg3[%8, %c0_2] : memref<256x128xbf16, #tpu.memory_space<vmem>>, vector<128x128xbf16>
    %c0_3 = arith.constant 0 : index
    %c0_4 = arith.constant 0 : index
    %10 = vector.load %arg12[%c0_3, %c0_4] : memref<128x128xf32, #tpu.memory_space<vmem>>, vector<128x128xf32>
    %cst = arith.constant dense<0.000000e+00> : vector<128x128xf32>
    %11 = tpu.matmul %5, %9, %cst {dimension_numbers = #tpu.dot_dimension_numbers<[1], [0], [0], [1], [0, 0, 1, 1], [], []>} : vector<128x128xbf16>, vector<128x128xbf16>, vector<128x128xf32> -> vector<128x128xf32>
    %12 = arith.addf %10, %11 : vector<128x128xf32>
    %c0_5 = arith.constant 0 : index
    %c0_6 = arith.constant 0 : index
    %13 = vector.load %arg12[%c0_5, %c0_6] : memref<128x128xf32, #tpu.memory_space<vmem>>, vector<128x128xf32>
    tpu.vector_store %arg12[%c0_5, %c0_6], %12 {strides = array<i32>} : memref<128x128xf32, #tpu.memory_space<vmem>>, vector<128x128xf32>,
    %c1_i32 = arith.constant 1 : i32
    %14 = arith.cmpi eq, %arg1, %c1_i32 : i32
    %15 = arith.extui %14 : i1 to i32
    %c0_i32_7 = arith.constant 0 : i32
    %16 = arith.cmpi ne, %15, %c0_i32_7 : i32
    scf.if %16 {
      %c0_8 = arith.constant 0 : index
      %c0_9 = arith.constant 0 : index
      %17 = vector.load %arg12[%c0_8, %c0_9] : memref<128x128xf32, #tpu.memory_space<vmem>>, vector<128x128xf32>
      %c0_10 = arith.constant 0 : index
      %c0_11 = arith.constant 0 : index
      %18 = vector.load %arg5[%c0_10, %c0_11] : memref<128x1xf32, #tpu.memory_space<vmem>>, vector<128x1xf32>
      %19 = vector.broadcast %18 : vector<128x1xf32> to vector<128x128xf32>
      %20 = arith.mulf %17, %19 : vector<128x128xf32>
      %21 = arith.truncf %20 : vector<128x128xf32> to vector<128x128xbf16>
      %c0_12 = arith.constant 0 : index
      %c0_13 = arith.constant 0 : index
      %22 = vector.load %arg6[%c0_12, %c0_13] : memref<128x128xbf16, #tpu.memory_space<vmem>>, vector<128x128xbf16>
      %cst_14 = arith.constant dense<0.000000e+00> : vector<128x128xf32>
      %23 = tpu.matmul %21, %22, %cst_14 {dimension_numbers = #tpu.dot_dimension_numbers<[1], [0], [0], [1], [0, 0, 1, 1], [], []>} : vector<128x128xbf16>, vector<128x128xbf16>, vector<128x128xf32> -> vector<128x128xf32>
      %c0_15 = arith.constant 0 : index
      %c0_16 = arith.constant 0 : index
      %24 = vector.load %arg4[%c0_15, %c0_16] : memref<128x128xbf16, #tpu.memory_space<vmem>>, vector<128x128xbf16>
      %c0_17 = arith.constant 0 : index
      %c0_18 = arith.constant 0 : index
      %25 = vector.load %arg7[%c0_17, %c0_18] : memref<128x128xbf16, #tpu.memory_space<vmem>>, vector<128x128xbf16>
      %cst_19 = arith.constant dense<0.000000e+00> : vector<128x128xf32>
      %26 = tpu.matmul %24, %25, %cst_19 {dimension_numbers = #tpu.dot_dimension_numbers<[1], [0], [0], [1], [0, 0, 1, 1], [], []>} : vector<128x128xbf16>, vector<128x128xbf16>, vector<128x128xf32> -> vector<128x128xf32>
      %27 = arith.addf %23, %26 : vector<128x128xf32>
      %c0_20 = arith.constant 0 : index
      %c0_21 = arith.constant 0 : index
      %28 = vector.load %arg8[%c0_20, %c0_21] : memref<1x128xf32, #tpu.memory_space<vmem>>, vector<1x128xf32>
      %29 = vector.broadcast %28 : vector<1x128xf32> to vector<128x128xf32>
      %30 = arith.addf %27, %29 : vector<128x128xf32>
      %cst_22 = arith.constant 0.000000e+00 : f32
      %31 = vector.broadcast %cst_22 : f32 to vector<128x128xf32>
      %32 = arith.maximumf %30, %31 : vector<128x128xf32>
      %33 = arith.truncf %32 : vector<128x128xf32> to vector<128x128xbf16>
      %c0_23 = arith.constant 0 : index
      %c0_24 = arith.constant 0 : index
      %34 = vector.load %arg9[%c0_23, %c0_24] : memref<128x128xbf16, #tpu.memory_space<vmem>>, vector<128x128xbf16>
      %cst_25 = arith.constant dense<0.000000e+00> : vector<128x128xf32>
      %35 = tpu.matmul %33, %34, %cst_25 {dimension_numbers = #tpu.dot_dimension_numbers<[1], [0], [0], [1], [0, 0, 1, 1], [], []>} : vector<128x128xbf16>, vector<128x128xbf16>, vector<128x128xf32> -> vector<128x128xf32>
      %c0_26 = arith.constant 0 : index
      %c0_27 = arith.constant 0 : index
      %36 = vector.load %arg10[%c0_26, %c0_27] : memref<1x128xf32, #tpu.memory_space<vmem>>, vector<1x128xf32>
      %37 = vector.broadcast %36 : vector<1x128xf32> to vector<128x128xf32>
      %38 = arith.addf %35, %37 : vector<128x128xf32>
      %cst_28 = arith.constant dense<0xFF800000> : vector<128xf32>
      %39 = vector.multi_reduction <maximumf>, %38, %cst_28 [1] : vector<128x128xf32> to vector<128xf32>
      %40 = vector.shape_cast %39 : vector<128xf32> to vector<128x1xf32>
      %41 = vector.broadcast %40 : vector<128x1xf32> to vector<128x128xf32>
      %42 = arith.subf %38, %41 : vector<128x128xf32>
      %43 = math.exp %42 : vector<128x128xf32>
      %cst_29 = arith.constant dense<0.000000e+00> : vector<128xf32>
      %44 = vector.multi_reduction <add>, %43, %cst_29 [1] : vector<128x128xf32> to vector<128xf32>
      %45 = vector.shape_cast %44 : vector<128xf32> to vector<128x1xf32>
      %46 = tpu.reciprocal %45 {approx = true} : vector<128x1xf32> -> vector<128x1xf32>
      %47 = vector.broadcast %46 : vector<128x1xf32> to vector<128x128xf32>
      %48 = arith.mulf %43, %47 : vector<128x128xf32>
      %c0_30 = arith.constant 0 : index
      %c0_31 = arith.constant 0 : index
      %49 = vector.load %arg11[%c0_30, %c0_31] : memref<128x128xf32, #tpu.memory_space<vmem>>, vector<128x128xf32>
      tpu.vector_store %arg11[%c0_30, %c0_31], %48 {strides = array<i32>} : memref<128x128xf32, #tpu.memory_space<vmem>>, vector<128x128xf32>,
    } else {
    }
    return
  }
  func.func @transform_0(%arg0: i32, %arg1: i32) -> (i32, i32) {
    %c0_i32 = arith.constant 0 : i32
    return %arg0, %arg1 : i32, i32
  }
  func.func @transform_1(%arg0: i32, %arg1: i32) -> (i32, i32) {
    %c0_i32 = arith.constant 0 : i32
    %c0_i32_0 = arith.constant 0 : i32
    %c0_i32_1 = arith.constant 0 : i32
    return %c0_i32, %c0_i32_0 : i32, i32
  }
  func.func @transform_2(%arg0: i32, %arg1: i32) -> (i32, i32) {
    %c0_i32 = arith.constant 0 : i32
    %c0_i32_0 = arith.constant 0 : i32
    return %arg0, %c0_i32 : i32, i32
  }
  func.func @transform_3(%arg0: i32, %arg1: i32) -> (i32, i32) {
    %c0_i32 = arith.constant 0 : i32
    %c0_i32_0 = arith.constant 0 : i32
    return %arg0, %c0_i32 : i32, i32
  }
  func.func @transform_4(%arg0: i32, %arg1: i32) -> (i32, i32) {
    %c0_i32 = arith.constant 0 : i32
    %c0_i32_0 = arith.constant 0 : i32
    %c0_i32_1 = arith.constant 0 : i32
    return %c0_i32, %c0_i32_0 : i32, i32
  }
  func.func @transform_5(%arg0: i32, %arg1: i32) -> (i32, i32) {
    %c0_i32 = arith.constant 0 : i32
    %c0_i32_0 = arith.constant 0 : i32
    %c0_i32_1 = arith.constant 0 : i32
    return %c0_i32, %c0_i32_0 : i32, i32
  }
  func.func @transform_6(%arg0: i32, %arg1: i32) -> (i32, i32) {
    %c0_i32 = arith.constant 0 : i32
    %c0_i32_0 = arith.constant 0 : i32
    %c0_i32_1 = arith.constant 0 : i32
    return %c0_i32, %c0_i32_0 : i32, i32
  }
  func.func @transform_7(%arg0: i32, %arg1: i32) -> (i32, i32) {
    %c0_i32 = arith.constant 0 : i32
    %c0_i32_0 = arith.constant 0 : i32
    %c0_i32_1 = arith.constant 0 : i32
    return %c0_i32, %c0_i32_0 : i32, i32
  }
  func.func @transform_8(%arg0: i32, %arg1: i32) -> (i32, i32) {
    %c0_i32 = arith.constant 0 : i32
    %c0_i32_0 = arith.constant 0 : i32
    %c0_i32_1 = arith.constant 0 : i32
    return %c0_i32, %c0_i32_0 : i32, i32
  }
  func.func @transform_9(%arg0: i32, %arg1: i32) -> (i32, i32) {
    %c0_i32 = arith.constant 0 : i32
    %c0_i32_0 = arith.constant 0 : i32
    return %arg0, %c0_i32 : i32, i32
  }
}

</mosaic_0001>

<llo_original>
// kernel: sage_forward.2
$region0: #{sage_forward.2}
  #allocation0 [shape = 'u32[]', space=smem, size = 0x4, offset = 0x4, fixed_abs, tag = 'smem constant byte address 0x4 - core index']
  #allocation1 [shape = 'u32[144,128]{1,0:T(1,128)}', space=vmem, size = 0x12000, scoped, tag = 'internal scratch']
  #allocation2 [shape = 'f32[128,128]{1,0:T(8,128)}', space=vmem, size = 0x10000, scoped, tag = 'scratch operand']
  %s0 = inlined_call_operand.vmem [shape: s8[256,256], index: 0, kind: input, shape index: {}]
  %s1 = inlined_call_operand.vmem [shape: bf16[256,128], index: 1, kind: input, shape index: {}, may-alias: {1,2}]
  %s2 = inlined_call_operand.vmem [shape: bf16[256,128], index: 2, kind: input, shape index: {}, may-alias: {1,2}]
  %s3 = inlined_call_operand.vmem [shape: f32[256,1], index: 3, kind: input, shape index: {}]
  %s4 = inlined_call_operand.vmem [shape: bf16[128,128], index: 4, kind: input, shape index: {}]
  %s5 = inlined_call_operand.vmem [shape: bf16[128,128], index: 5, kind: input, shape index: {}]
  %s6 = inlined_call_operand.vmem [shape: f32[1,128], index: 6, kind: input, shape index: {}]
  %s7 = inlined_call_operand.vmem [shape: bf16[256,128], index: 7, kind: output, shape index: {}]
  %s8 = sld [smem:[#allocation0]]
  $region107: #{sage_forward.2} parent=0
    _
  %s10 = ssub.s32 1, %s8
  %s11 = scalar_select 0, %s10, %s8
  $region1: #{sage_forward.2} parent=0
    #allocation3 [shape = 'u8[32768]{0}', space=vmem, size = 0x8000, scoped, tag = 'input window, operand 0']
    loop: start=0, step=1, limit=6
    $region2: #{sage_forward.2} parent=1 // loop_pre_header
      _
    $region3: #{sage_forward.2} parent=1 // loop_header
      %s13 = sphi 0, %s17
      %p14 = scmp.ge.s32.totalorder %s13, 6
      %s20 = sphi 0, %s32
      %s21 = sphi 0, %s28
      %s22 = sphi 0, %s20
      %s23 = sphi 0, %s21
      %s24 = sphi 0, %s22
      %s25 = sphi 0, %s23
      %s37 = sphi 0, %s39
      %s40 = sphi 0, %s37
      %s41 = sphi 0, %s40
      %s57 = sphi 0, %s41
      %s61 = sphi 0, %s61
      %s63 = sphi 0, %s61
      %s64 = sphi 0, %s63
      %s78 = sphi 0, %s64
      %s84 = sphi 0, %s86
      %s87 = sphi 0, %s84
      %s88 = sphi 0, %s87
      %s104 = sphi 0, %s88
      %s110 = sphi 0, %s112
      %s113 = sphi 0, %s110
      %s114 = sphi 0, %s113
      %s130 = sphi 0, %s114
      %s134 = sphi 0, %s134
      %s136 = sphi 0, %s134
      %s137 = sphi 0, %s136
      %s151 = sphi 0, %s137
      %s155 = sphi 0, %s155
      %s157 = sphi 0, %s155
      %s158 = sphi 0, %s157
      %s172 = sphi 0, %s158
      %s176 = sphi 0, %s176
      %s178 = sphi 0, %s176
      %s179 = sphi 0, %s178
      %s193 = sphi 0, %s179
      %s199 = sphi 0, %s201
      %s202 = sphi 0, %s199
      %s203 = sphi 0, %s202
      %s219 = sphi 0, %s203
    $region4: #{sage_forward.2} parent=1 // loop_header_branch
      %16 = sbr.rel (%p14) target = $region8
    $region5: #{sage_forward.2} parent=1 // loop_body
      %s18 = ssub.s32 %s13, 1
      %s19 = ssub.s32 %s13, 2
      %s26 = sadd.s32 1, %s21
      %p27 = scmp.ge.s32.totalorder %s26, 2
      %s28 = scalar_select %p27, 0, %s26
      %s29 = sadd.s32 1, %s20
      %s30 = scalar_select %p27, %s29, %s20
      %p31 = scmp.ge.s32.totalorder %s30, 2
      %s32 = scalar_select %p31, 0, %s30
      %s33 = ssub.s32 %s20, %s32
      %s34 = ssub.s32 %s21, %s28
      %s35 = sor.u32 %s33, %s34
      %p36 = scmp.eq.s32.totalorder %s35, 0
      %s38 = sadd.s32 %s37, 1
      %s39 = scalar_select %p36, %s37, %s38
      %p42 = pneg %p36
      %p43 = scmp.eq.s32.totalorder %s13, 3
      %p44 = por %p42, %p43
      %p45 = scmp.ne.s32.totalorder %s37, %s40
      %p46 = scmp.eq.s32.totalorder %s13, 0
      %p47 = por %p45, %p46
      %p48 = scmp.ne.s32.totalorder %s37, %s40
      %p49 = scmp.eq.s32.totalorder %s18, 3
      %p50 = por %p48, %p49
      %p51 = scmp.ne.s32.totalorder %s40, %s41
      %p52 = scmp.eq.s32.totalorder %s18, 0
      %p53 = por %p51, %p52
      %p54 = scmp.ne.s32.totalorder %s40, %s41
      %p55 = scmp.eq.s32.totalorder %s19, 3
      %p56 = por %p54, %p55
      %p58 = scmp.ne.s32.totalorder %s41, %s57
      %p59 = scmp.eq.s32.totalorder %s19, 0
      %p60 = por %p58, %p59
      %s62 = sadd.s32 %s61, 1
      %p65 = scmp.eq.s32.totalorder %s13, 3
      %p66 = scmp.ne.s32.totalorder %s61, %s63
      %p67 = scmp.eq.s32.totalorder %s13, 0
      %p68 = por %p66, %p67
      %p69 = scmp.ne.s32.totalorder %s61, %s63
      %p70 = scmp.eq.s32.totalorder %s18, 3
      %p71 = por %p69, %p70
      %p72 = scmp.ne.s32.totalorder %s63, %s64
      %p73 = scmp.eq.s32.totalorder %s18, 0
      %p74 = por %p72, %p73
      %p75 = scmp.ne.s32.totalorder %s63, %s64
      %p76 = scmp.eq.s32.totalorder %s19, 3
      %p77 = por %p75, %p76
      %p79 = scmp.ne.s32.totalorder %s64, %s78
      %p80 = scmp.eq.s32.totalorder %s19, 0
      %p81 = por %p79, %p80
      %s82 = ssub.s32 %s20, %s32
      %p83 = scmp.eq.s32.totalorder %s82, 0
      %s85 = sadd.s32 %s84, 1
      %s86 = scalar_select %p83, %s84, %s85
      %p89 = pneg %p83
      %p90 = scmp.eq.s32.totalorder %s13, 3
      %p91 = por %p89, %p90
      %p92 = scmp.ne.s32.totalorder %s84, %s87
      %p93 = scmp.eq.s32.totalorder %s13, 0
      %p94 = por %p92, %p93
      %p95 = scmp.ne.s32.totalorder %s84, %s87
      %p96 = scmp.eq.s32.totalorder %s18, 3
      %p97 = por %p95, %p96
      %p98 = scmp.ne.s32.totalorder %s87, %s88
      %p99 = scmp.eq.s32.totalorder %s18, 0
      %p100 = por %p98, %p99
      %p101 = scmp.ne.s32.totalorder %s87, %s88
      %p102 = scmp.eq.s32.totalorder %s19, 3
      %p103 = por %p101, %p102
      %p105 = scmp.ne.s32.totalorder %s88, %s104
      %p106 = scmp.eq.s32.totalorder %s19, 0
      %p107 = por %p105, %p106
      %s108 = ssub.s32 %s20, %s32
      %p109 = scmp.eq.s32.totalorder %s108, 0
      %s111 = sadd.s32 %s110, 1
      %s112 = scalar_select %p109, %s110, %s111
      %p115 = pneg %p109
      %p116 = scmp.eq.s32.totalorder %s13, 3
      %p117 = por %p115, %p116
      %p118 = scmp.ne.s32.totalorder %s110, %s113
      %p119 = scmp.eq.s32.totalorder %s13, 0
      %p120 = por %p118, %p119
      %p121 = scmp.ne.s32.totalorder %s110, %s113
      %p122 = scmp.eq.s32.totalorder %s18, 3
      %p123 = por %p121, %p122
      %p124 = scmp.ne.s32.totalorder %s113, %s114
      %p125 = scmp.eq.s32.totalorder %s18, 0
      %p126 = por %p124, %p125
      %p127 = scmp.ne.s32.totalorder %s113, %s114
      %p128 = scmp.eq.s32.totalorder %s19, 3
      %p129 = por %p127, %p128
      %p131 = scmp.ne.s32.totalorder %s114, %s130
      %p132 = scmp.eq.s32.totalorder %s19, 0
      %p133 = por %p131, %p132
      %s135 = sadd.s32 %s134, 1
      %p138 = scmp.eq.s32.totalorder %s13, 3
      %p139 = scmp.ne.s32.totalorder %s134, %s136
      %p140 = scmp.eq.s32.totalorder %s13, 0
      %p141 = por %p139, %p140
      %p142 = scmp.ne.s32.totalorder %s134, %s136
      %p143 = scmp.eq.s32.totalorder %s18, 3
      %p144 = por %p142, %p143
      %p145 = scmp.ne.s32.totalorder %s136, %s137
      %p146 = scmp.eq.s32.totalorder %s18, 0
      %p147 = por %p145, %p146
      %p148 = scmp.ne.s32.totalorder %s136, %s137
      %p149 = scmp.eq.s32.totalorder %s19, 3
      %p150 = por %p148, %p149
      %p152 = scmp.ne.s32.totalorder %s137, %s151
      %p153 = scmp.eq.s32.totalorder %s19, 0
      %p154 = por %p152, %p153
      %s156 = sadd.s32 %s155, 1
      %p159 = scmp.eq.s32.totalorder %s13, 3
      %p160 = scmp.ne.s32.totalorder %s155, %s157
      %p161 = scmp.eq.s32.totalorder %s13, 0
      %p162 = por %p160, %p161
      %p163 = scmp.ne.s32.totalorder %s155, %s157
      %p164 = scmp.eq.s32.totalorder %s18, 3
      %p165 = por %p163, %p164
      %p166 = scmp.ne.s32.totalorder %s157, %s158
      %p167 = scmp.eq.s32.totalorder %s18, 0
      %p168 = por %p166, %p167
      %p169 = scmp.ne.s32.totalorder %s157, %s158
      %p170 = scmp.eq.s32.totalorder %s19, 3
      %p171 = por %p169, %p170
      %p173 = scmp.ne.s32.totalorder %s158, %s172
      %p174 = scmp.eq.s32.totalorder %s19, 0
      %p175 = por %p173, %p174
      %s177 = sadd.s32 %s176, 1
      %p180 = scmp.eq.s32.totalorder %s13, 3
      %p181 = scmp.ne.s32.totalorder %s176, %s178
      %p182 = scmp.eq.s32.totalorder %s13, 0
      %p183 = por %p181, %p182
      %p184 = scmp.ne.s32.totalorder %s176, %s178
      %p185 = scmp.eq.s32.totalorder %s18, 3
      %p186 = por %p184, %p185
      %p187 = scmp.ne.s32.totalorder %s178, %s179
      %p188 = scmp.eq.s32.totalorder %s18, 0
      %p189 = por %p187, %p188
      %p190 = scmp.ne.s32.totalorder %s178, %s179
      %p191 = scmp.eq.s32.totalorder %s19, 3
      %p192 = por %p190, %p191
      %p194 = scmp.ne.s32.totalorder %s179, %s193
      %p195 = scmp.eq.s32.totalorder %s19, 0
      %p196 = por %p194, %p195
      %s197 = ssub.s32 %s20, %s32
      %p198 = scmp.eq.s32.totalorder %s197, 0
      %s200 = sadd.s32 %s199, 1
      %s201 = scalar_select %p198, %s199, %s200
      %p204 = pneg %p198
      %p205 = scmp.eq.s32.totalorder %s13, 3
      %p206 = por %p204, %p205
      %p207 = scmp.ne.s32.totalorder %s199, %s202
      %p208 = scmp.eq.s32.totalorder %s13, 0
      %p209 = por %p207, %p208
      %p210 = scmp.ne.s32.totalorder %s199, %s202
      %p211 = scmp.eq.s32.totalorder %s18, 3
      %p212 = por %p210, %p211
      %p213 = scmp.ne.s32.totalorder %s202, %s203
      %p214 = scmp.eq.s32.totalorder %s18, 0
      %p215 = por %p213, %p214
      %p216 = scmp.ne.s32.totalorder %s202, %s203
      %p217 = scmp.eq.s32.totalorder %s19, 3
      %p218 = por %p216, %p217
      %p220 = scmp.ne.s32.totalorder %s203, %s219
      %p221 = scmp.eq.s32.totalorder %s19, 0
      %p222 = por %p220, %p221
      %p223 = scmp.le.s32.totalorder 1, %s13
      %p224 = scmp.lt.s32.totalorder %s13, 5
      %p225 = pnand %p223, %p224
      %p226 = pneg %p225
      // Predicated region
      $region9: #{sage_forward.2} parent=5 // pred_check
        _
      $region10: #{sage_forward.2} parent=5 // pred_check_branch
        %228 = sbr.rel (%p225) target = $region12
      $region11: #{sage_forward.2} parent=5 // pred_region
        %s229 = ssub.s32 %s13, 1
        // Predicated region
        $region13: #{sage_forward.2} parent=11 // pred_check
          %p230 = pneg %p74
        $region14: #{sage_forward.2} parent=11 // pred_check_branch
          %232 = sbr.rel (%p230) target = $region16
        $region15: #{sage_forward.2} parent=11 // pred_region
          _
        $region16: #{sage_forward.2} parent=11 // pred_fallthru
          _
        // Predicated region
        $region17: #{sage_forward.2} parent=11 // pred_check
          %p233 = pneg %p147
        $region18: #{sage_forward.2} parent=11 // pred_check_branch
          %235 = sbr.rel (%p233) target = $region20
        $region19: #{sage_forward.2} parent=11 // pred_region
          _
        $region20: #{sage_forward.2} parent=11 // pred_fallthru
          _
        // Predicated region
        $region21: #{sage_forward.2} parent=11 // pred_check
          %p236 = pneg %p168
        $region22: #{sage_forward.2} parent=11 // pred_check_branch
          %238 = sbr.rel (%p236) target = $region24
        $region23: #{sage_forward.2} parent=11 // pred_region
          _
        $region24: #{sage_forward.2} parent=11 // pred_fallthru
          _
        // Predicated region
        $region25: #{sage_forward.2} parent=11 // pred_check
          %p239 = pneg %p189
        $region26: #{sage_forward.2} parent=11 // pred_check_branch
          %241 = sbr.rel (%p239) target = $region28
        $region27: #{sage_forward.2} parent=11 // pred_region
          _
        $region28: #{sage_forward.2} parent=11 // pred_fallthru
          _
      $region12: #{sage_forward.2} parent=5 // pred_fallthru
        _
      %p242 = scmp.lt.s32.totalorder %s13, 4
      // Predicated region
      $region29: #{sage_forward.2} parent=5 // pred_check
        %p243 = pneg %p242
      $region30: #{sage_forward.2} parent=5 // pred_check_branch
        %245 = sbr.rel (%p243) target = $region32
      $region31: #{sage_forward.2} parent=5 // pred_region
        // Predicated region
        $region33: #{sage_forward.2} parent=31 // pred_check
          %p246 = pneg %p47
        $region34: #{sage_forward.2} parent=31 // pred_check_branch
          %248 = sbr.rel (%p246) target = $region36
        $region35: #{sage_forward.2} parent=31 // pred_region
          %s249 = sand.u32 %s37, 1
          %s250 = sand.u32 %s37, 1
          %s251 = smul.addr %s250, 32
          %s252 = scalar_lea.vmem [#allocation3], %s251
          %s253 = smul.u32 4, %s20
          %s254 = smul.addr %s253, 2
          %s255 = sadd.s32 %s21, %s254
          %s256 = smul.addr %s255, 8
          %s257 = scalar_lea.vmem %s0, %s256
          // Predicated region
          $region37: #{sage_forward.2} parent=35 // pred_check
            _
          $region38: #{sage_forward.2} parent=35 // pred_check_branch
            %259 = sbr.rel (0) target = $region40
          $region39: #{sage_forward.2} parent=35 // pred_region
            // Predicated region
            $region41: #{sage_forward.2} parent=39 // pred_check
              _
            $region42: #{sage_forward.2} parent=39 // pred_check_branch
              %261 = sbr.rel (0) target = $region44
            $region43: #{sage_forward.2} parent=39 // pred_region
              // Predicated region
              $region56: #{sage_forward.2} parent=43 // pred_check
                _
              $region57: #{sage_forward.2} parent=43 // pred_check_branch
                %282 = sbr.rel (0) target = $region59
              $region58: #{sage_forward.2} parent=43 // pred_region
                loop: start=0, step=1, limit=1
                $region60: #{sage_forward.2} parent=58 // loop_pre_header
                  _
                $region61: #{sage_forward.2} parent=58 // loop_header
                  %s284 = sphi 0, %s288
                  %p285 = scmp.ge.s32.totalorder %s284, 1
                  %s289 = sphi %s257, %s257
                  %s290 = sphi %s252, %s252
                $region62: #{sage_forward.2} parent=58 // loop_header_branch
                  %287 = sbr.rel (%p285) target = $region66
                $region63: #{sage_forward.2} parent=58 // loop_body
                  %v291 = vld [vmem:[%s289] sm:$0xff]
                  %292 = vst [vmem:[%s290] sm:$0xff] %v291
                  %v293 = vld [vmem:[%s289 + $0x10] sm:$0xff]
                  %294 = vst [vmem:[%s290 + $0x8] sm:$0xff] %v293
                  %v295 = vld [vmem:[%s289 + $0x20] sm:$0xff]
                  %296 = vst [vmem:[%s290 + $0x10] sm:$0xff] %v295
                  %v297 = vld [vmem:[%s289 + $0x30] sm:$0xff]
                  %298 = vst [vmem:[%s290 + $0x18] sm:$0xff] %v297
                $region64: #{sage_forward.2} parent=58 // loop_footer
                  %s288 = sadd.s32 1, %s284
                $region65: #{sage_forward.2} parent=58 // loop_footer_branch
                  %283 = sbr.rel target = $region61
                $region66: #{sage_forward.2} parent=58 // loop_exit
                  _
              $region59: #{sage_forward.2} parent=43 // pred_fallthru
                _
              // Predicated region
              $region67: #{sage_forward.2} parent=43 // pred_check
                _
              $region68: #{sage_forward.2} parent=43 // pred_check_branch
                %300 = sbr.rel target = $region70
              $region69: #{sage_forward.2} parent=43 // pred_region
                _
              $region70: #{sage_forward.2} parent=43 // pred_fallthru
                _
            $region44: #{sage_forward.2} parent=39 // pred_fallthru
              _
            // Predicated region
            $region45: #{sage_forward.2} parent=39 // pred_check
              _
            $region46: #{sage_forward.2} parent=39 // pred_check_branch
              %263 = sbr.rel target = $region48
            $region47: #{sage_forward.2} parent=39 // pred_region
              loop: start=0, step=1, limit=1
              $region49: #{sage_forward.2} parent=47 // loop_pre_header
                _
              $region50: #{sage_forward.2} parent=47 // loop_header
                %s266 = sphi 0, %s270
                %p267 = scmp.ge.s32.totalorder %s266, 1
                %s271 = sphi %s257, %s257
                %s272 = sphi %s252, %s252
              $region51: #{sage_forward.2} parent=47 // loop_header_branch
                %269 = sbr.rel (%p267) target = $region55
              $region52: #{sage_forward.2} parent=47 // loop_body
                %v273 = vld [vmem:[%s271] sm:$0xff]
                %274 = vst [vmem:[%s272] sm:$0xff] %v273
                %v275 = vld [vmem:[%s271 + $0x10] sm:$0xff]
                %276 = vst [vmem:[%s272 + $0x8] sm:$0xff] %v275
                %v277 = vld [vmem:[%s271 + $0x20] sm:$0xff]
                %278 = vst [vmem:[%s272 + $0x10] sm:$0xff] %v277
                %v279 = vld [vmem:[%s271 + $0x30] sm:$0xff]
                %280 = vst [vmem:[%s272 + $0x18] sm:$0xff] %v279
              $region53: #{sage_forward.2} parent=47 // loop_footer
                %s270 = sadd.s32 1, %s266
              $region54: #{sage_forward.2} parent=47 // loop_footer_branch
                %265 = sbr.rel target = $region50
              $region55: #{sage_forward.2} parent=47 // loop_exit
                _
            $region48: #{sage_forward.2} parent=39 // pred_fallthru
              _
          $region40: #{sage_forward.2} parent=35 // pred_fallthru
            _
          %301 = vnop
        $region36: #{sage_forward.2} parent=31 // pred_fallthru
          _
        // Predicated region
        $region71: #{sage_forward.2} parent=31 // pred_check
          %p302 = pneg %p94
        $region72: #{sage_forward.2} parent=31 // pred_check_branch
          %304 = sbr.rel (%p302) target = $region74
        $region73: #{sage_forward.2} parent=31 // pred_region
          %s305 = smul.u32 16, %s20
          %p306 = scmp.lt.s32.totalorder %s305, 31
          %s307 = scalar_select %p306, %s305, 31
          %s308 = smul.addr %s307, 4
          %s309 = scalar_lea.vmem %s2, %s308
          %s310 = smul.u32 16, %s20
        $region74: #{sage_forward.2} parent=31 // pred_fallthru
          _
        // Predicated region
        $region75: #{sage_forward.2} parent=31 // pred_check
          %p311 = pneg %p120
        $region76: #{sage_forward.2} parent=31 // pred_check_branch
          %313 = sbr.rel (%p311) target = $region78
        $region77: #{sage_forward.2} parent=31 // pred_region
          %s314 = smul.u32 16, %s20
          %p315 = scmp.lt.s32.totalorder %s314, 31
          %s316 = scalar_select %p315, %s314, 31
          %s317 = smul.addr %s316, 8
          %s318 = scalar_lea.vmem %s3, %s317
          %s319 = smul.u32 16, %s20
        $region78: #{sage_forward.2} parent=31 // pred_fallthru
          _
      $region32: #{sage_forward.2} parent=5 // pred_fallthru
        _
      %p320 = scmp.le.s32.totalorder 1, %s13
      %p321 = scmp.lt.s32.totalorder %s13, 5
      %p322 = pnand %p320, %p321
      %p323 = pneg %p322
      // Predicated region
      $region79: #{sage_forward.2} parent=5 // pred_check
        _
      $region80: #{sage_forward.2} parent=5 // pred_check_branch
        %325 = sbr.rel (%p322) target = $region82
      $region81: #{sage_forward.2} parent=5 // pred_region
        %s326 = ssub.s32 %s13, 1
        %s327 = sand.u32 %s40, 1
        %s328 = sand.u32 %s40, 1
        %s329 = smul.addr %s328, 32
        %s330 = scalar_lea.vmem [#allocation3], %s329
        // Predicated region
        $region83: #{sage_forward.2} parent=81 // pred_check
          %p331 = pneg %p53
        $region84: #{sage_forward.2} parent=81 // pred_check_branch
          %333 = sbr.rel (%p331) target = $region86
        $region85: #{sage_forward.2} parent=81 // pred_region
          _
        $region86: #{sage_forward.2} parent=81 // pred_fallthru
          _
        %s334 = sand.u32 %s40, 1
        %s335 = sand.u32 %s40, 1
        %s336 = smul.addr %s335, 32
        %s337 = scalar_lea.vmem [#allocation3], %s336
        %p338 = pneg %p53
        %p339 = pneg %p50
        %p340 = pneg %p74
        %p341 = pneg %p71
        %s342 = smul.u32 16, %s22
        %p343 = scmp.lt.s32.totalorder %s342, 31
        %s344 = scalar_select %p343, %s342, 31
        %s345 = smul.addr %s344, 4
        %s346 = scalar_lea.vmem %s2, %s345
        %p347 = pneg %p100
        %p348 = pneg %p97
        %s349 = smul.u32 16, %s22
        %p350 = scmp.lt.s32.totalorder %s349, 31
        %s351 = scalar_select %p350, %s349, 31
        %s352 = smul.addr %s351, 8
        %s353 = scalar_lea.vmem %s3, %s352
        %p354 = pneg %p126
        %p355 = pneg %p123
        %p356 = pneg %p147
        %p357 = pneg %p144
        %p358 = pneg %p168
        %p359 = pneg %p165
        %p360 = pneg %p189
        %p361 = pneg %p186
        %p362 = pneg %p215
        %p363 = pneg %p212
        %s364 = smul.u32 16, %s22
        %p365 = scmp.lt.s32.totalorder %s364, 31
        %s366 = scalar_select %p365, %s364, 31
        %s367 = smul.addr %s366, 4
        %s368 = scalar_lea.vmem %s7, %s367
        %s369 = smul.u32 4, %s22
        %s370 = smul.u32 16, %s22
        %p371 = scmp.lt.s32.totalorder %s370, 31
        %s372 = scalar_select %p371, %s370, 31
        %s373 = smul.addr %s372, 4
        %s374 = scalar_lea.vmem %s2, %s373
        %s375 = smul.u32 16, %s22
        %s376 = smul.u32 16, %s22
        %p377 = scmp.lt.s32.totalorder %s376, 31
        %s378 = scalar_select %p377, %s376, 31
        %s379 = smul.addr %s378, 8
        %s380 = scalar_lea.vmem %s3, %s379
        %s381 = smul.u32 16, %s22
        %s382 = smul.u32 16, %s22
        %p383 = scmp.lt.s32.totalorder %s382, 31
        %s384 = scalar_select %p383, %s382, 31
        %s385 = smul.addr %s384, 4
        %s386 = scalar_lea.vmem %s7, %s385
        %s387 = smul.u32 16, %s22
        %p389 = scmp.eq.s32.totalorder %s23, 0
        // Predicated region
        $region87: #{sage_forward.2} parent=81 // pred_check
          %p390 = pneg %p389
        $region88: #{sage_forward.2} parent=81 // pred_check_branch
          %392 = sbr.rel (%p390) target = $region90
        $region89: #{sage_forward.2} parent=81 // pred_region
          %393 = vst [vmem:[#allocation2] sm:$0xff] 0.0
          %394 = vst [vmem:[#allocation2 + $0x8] sm:$0xff] 0.0
          %395 = vst [vmem:[#allocation2 + $0x10] sm:$0xff] 0.0
          %396 = vst [vmem:[#allocation2 + $0x18] sm:$0xff] 0.0
          %397 = vst [vmem:[#allocation2 + $0x20] sm:$0xff] 0.0
          %398 = vst [vmem:[#allocation2 + $0x28] sm:$0xff] 0.0
          %399 = vst [vmem:[#allocation2 + $0x30] sm:$0xff] 0.0
          %400 = vst [vmem:[#allocation2 + $0x38] sm:$0xff] 0.0
          %401 = vst [vmem:[#allocation2 + $0x40] sm:$0xff] 0.0
          %402 = vst [vmem:[#allocation2 + $0x48] sm:$0xff] 0.0
          %403 = vst [vmem:[#allocation2 + $0x50] sm:$0xff] 0.0
          %404 = vst [vmem:[#allocation2 + $0x58] sm:$0xff] 0.0
          %405 = vst [vmem:[#allocation2 + $0x60] sm:$0xff] 0.0
          %406 = vst [vmem:[#allocation2 + $0x68] sm:$0xff] 0.0
          %407 = vst [vmem:[#allocation2 + $0x70] sm:$0xff] 0.0
          %408 = vst [vmem:[#allocation2 + $0x78] sm:$0xff] 0.0
        $region90: #{sage_forward.2} parent=81 // pred_fallthru
          _
        %v409 = vld [vmem:[%s330] sm:$0xff]
        %v410 = vld [vmem:[%s330 + $0x8] sm:$0xff]
        %v411 = vld [vmem:[%s330 + $0x10] sm:$0xff]
        %v412 = vld [vmem:[%s330 + $0x18] sm:$0xff]
        %v413 = vunpack.c.l.s8.bf16 %v409
        %v414 = vunpack.c.h.s8.bf16 %v409
        %v415 = vunpack.c.l.s8.bf16 %v410
        %v416 = vunpack.c.h.s8.bf16 %v410
        %v417 = vunpack.c.l.s8.bf16 %v411
        %v418 = vunpack.c.h.s8.bf16 %v411
        %v419 = vunpack.c.l.s8.bf16 %v412
        %v420 = vunpack.c.h.s8.bf16 %v412
        %s421 = smul.u32 %s23, 128
        %s422 = sshra.s32 %s421, 3
        %s423 = sand.u32 %s421, 7
        %s424 = smul.addr %s422, 4
        %s425 = scalar_lea.vmem %s1, %s424
        %v426 = vld [vmem:[%s425] sm:$0xf]
        %v427 = vld [vmem:[%s425 + $0x4] sm:$0xf]
        %v428 = vld [vmem:[%s425 + $0x8] sm:$0xf]
        %v429 = vld [vmem:[%s425 + $0xc] sm:$0xf]
        %v430 = vld [vmem:[%s425 + $0x10] sm:$0xf]
        %v431 = vld [vmem:[%s425 + $0x14] sm:$0xf]
        %v432 = vld [vmem:[%s425 + $0x18] sm:$0xf]
        %v433 = vld [vmem:[%s425 + $0x1c] sm:$0xf]
        %v434 = vld [vmem:[%s425 + $0x20] sm:$0xf]
        %v435 = vld [vmem:[%s425 + $0x24] sm:$0xf]
        %v436 = vld [vmem:[%s425 + $0x28] sm:$0xf]
        %v437 = vld [vmem:[%s425 + $0x2c] sm:$0xf]
        %v438 = vld [vmem:[%s425 + $0x30] sm:$0xf]
        %v439 = vld [vmem:[%s425 + $0x34] sm:$0xf]
        %v440 = vld [vmem:[%s425 + $0x38] sm:$0xf]
        %v441 = vld [vmem:[%s425 + $0x3c] sm:$0xf]
        %v442 = vld [vmem:[#allocation2] sm:$0xff]
        %v443 = vld [vmem:[#allocation2 + $0x8] sm:$0xff]
        %v444 = vld [vmem:[#allocation2 + $0x10] sm:$0xff]
        %v445 = vld [vmem:[#allocation2 + $0x18] sm:$0xff]
        %v446 = vld [vmem:[#allocation2 + $0x20] sm:$0xff]
        %v447 = vld [vmem:[#allocation2 + $0x28] sm:$0xff]
        %v448 = vld [vmem:[#allocation2 + $0x30] sm:$0xff]
        %v449 = vld [vmem:[#allocation2 + $0x38] sm:$0xff]
        %v450 = vld [vmem:[#allocation2 + $0x40] sm:$0xff]
        %v451 = vld [vmem:[#allocation2 + $0x48] sm:$0xff]
        %v452 = vld [vmem:[#allocation2 + $0x50] sm:$0xff]
        %v453 = vld [vmem:[#allocation2 + $0x58] sm:$0xff]
        %v454 = vld [vmem:[#allocation2 + $0x60] sm:$0xff]
        %v455 = vld [vmem:[#allocation2 + $0x68] sm:$0xff]
        %v456 = vld [vmem:[#allocation2 + $0x70] sm:$0xff]
        %v457 = vld [vmem:[#allocation2 + $0x78] sm:$0xff]
        %v474 = vunpack.c.l.b16 %v426
        %v475 = vunpack.c.l.b16 %v427
        %v476 = vunpack.c.l.b16 %v428
        %v477 = vunpack.c.l.b16 %v429
        %v478 = vunpack.c.l.b16 %v430
        %v479 = vunpack.c.l.b16 %v431
        %v480 = vunpack.c.l.b16 %v432
        %v481 = vunpack.c.l.b16 %v433
        %v482 = vunpack.c.l.b16 %v434
        %v483 = vunpack.c.l.b16 %v435
        %v484 = vunpack.c.l.b16 %v436
        %v485 = vunpack.c.l.b16 %v437
        %v486 = vunpack.c.l.b16 %v438
        %v487 = vunpack.c.l.b16 %v439
        %v488 = vunpack.c.l.b16 %v440
        %v489 = vunpack.c.l.b16 %v441
        %v490 = vpack.c.b16 %v475, %v474
        %v491 = vpack.c.b16 %v477, %v476
        %v492 = vpack.c.b16 %v479, %v478
        %v493 = vpack.c.b16 %v481, %v480
        %v494 = vpack.c.b16 %v483, %v482
        %v495 = vpack.c.b16 %v485, %v484
        %v496 = vpack.c.b16 %v487, %v486
        %v497 = vpack.c.b16 %v489, %v488
        %506 = vmatprep.subr.bf16.mxu0 0
        %507 = vmatpush1.bf16.msra.mxu0 %v490
        %508 = vmatprep.subr.bf16.mxu0 0
        %509 = vmatpush1.bf16.msra.mxu0 %v491
        %510 = vmatprep.subr.bf16.mxu0 0
        %511 = vmatpush1.bf16.msra.mxu0 %v492
        %512 = vmatprep.subr.bf16.mxu0 0
        %513 = vmatpush1.bf16.msra.mxu0 %v493
        %514 = vmatprep.subr.bf16.mxu0 0
        %515 = vmatpush1.bf16.msra.mxu0 %v494
        %516 = vmatprep.subr.bf16.mxu0 0
        %517 = vmatpush1.bf16.msra.mxu0 %v495
        %518 = vmatprep.subr.bf16.mxu0 0
        %519 = vmatpush1.bf16.msra.mxu0 %v496
        %520 = vmatprep.subr.bf16.mxu0 0
        %521 = vmatpush1.bf16.msra.mxu0 %v497
        %522 = vmatprep.subr.bf16.mxu0 0
        %523 = vmatpush1.bf16.msra.mxu0 0
        %524 = vmatprep.subr.bf16.mxu0 0
        %525 = vmatpush1.bf16.msra.mxu0 0
        %526 = vmatprep.subr.bf16.mxu0 0
        %527 = vmatpush1.bf16.msra.mxu0 0
        %528 = vmatprep.subr.bf16.mxu0 0
        %529 = vmatpush1.bf16.msra.mxu0 0
        %530 = vmatprep.subr.bf16.mxu0 0
        %531 = vmatpush1.bf16.msra.mxu0 0
        %532 = vmatprep.subr.bf16.mxu0 0
        %533 = vmatpush1.bf16.msra.mxu0 0
        %534 = vmatprep.subr.bf16.mxu0 0
        %535 = vmatpush1.bf16.msra.mxu0 0
        %536 = vmatprep.subr.bf16.mxu0 0
        %537 = vmatpush1.bf16.msra.mxu0 0
        %538 = vmatprep.mubr.bf16.mxu0 0
        %539 = vmatmul.mubr.bf16.gmra.mrb[0].mxu0 %v413
        %v540 = vpop.f32.mrb[0].mxu0
        %v541 = vadd.f32 0.0, %v540
        %v542 = vpop.f32.mrb[0].mxu0
        %v543 = vpop.f32.mrb[0].mxu0
        %v544 = vadd.f32 0.0, %v543
        %v545 = vpop.f32.mrb[0].mxu0
        %546 = vmatprep.mubr.bf16.mxu0 0
        %547 = vmatmul.mubr.bf16.gmra.mrb[0].mxu0 %v414
        %v548 = vpop.f32.mrb[0].mxu0
        %v549 = vadd.f32 0.0, %v548
        %v550 = vpop.f32.mrb[0].mxu0
        %v551 = vpop.f32.mrb[0].mxu0
        %v552 = vadd.f32 0.0, %v551
        %v553 = vpop.f32.mrb[0].mxu0
        %554 = vmatprep.mubr.bf16.mxu0 0
        %555 = vmatmul.mubr.bf16.gmra.mrb[0].mxu0 %v415
        %v556 = vpop.f32.mrb[0].mxu0
        %v557 = vadd.f32 0.0, %v556
        %v558 = vpop.f32.mrb[0].mxu0
        %v559 = vpop.f32.mrb[0].mxu0
        %v560 = vadd.f32 0.0, %v559
        %v561 = vpop.f32.mrb[0].mxu0
        %562 = vmatprep.mubr.bf16.mxu0 0
        %563 = vmatmul.mubr.bf16.gmra.mrb[0].mxu0 %v416
        %v564 = vpop.f32.mrb[0].mxu0
        %v565 = vadd.f32 0.0, %v564
        %v566 = vpop.f32.mrb[0].mxu0
        %v567 = vpop.f32.mrb[0].mxu0
        %v568 = vadd.f32 0.0, %v567
        %v569 = vpop.f32.mrb[0].mxu0
        %570 = vmatprep.mubr.bf16.mxu0 0
        %571 = vmatmul.mubr.bf16.gmra.mrb[0].mxu0 %v417
        %v572 = vpop.f32.mrb[0].mxu0
        %v573 = vadd.f32 0.0, %v572
        %v574 = vpop.f32.mrb[0].mxu0
        %v575 = vpop.f32.mrb[0].mxu0
        %v576 = vadd.f32 0.0, %v575
        %v577 = vpop.f32.mrb[0].mxu0
        %578 = vmatprep.mubr.bf16.mxu0 0
        %579 = vmatmul.mubr.bf16.gmra.mrb[0].mxu0 %v418
        %v580 = vpop.f32.mrb[0].mxu0
        %v581 = vadd.f32 0.0, %v580
        %v582 = vpop.f32.mrb[0].mxu0
        %v583 = vpop.f32.mrb[0].mxu0
        %v584 = vadd.f32 0.0, %v583
        %v585 = vpop.f32.mrb[0].mxu0
        %586 = vmatprep.mubr.bf16.mxu0 0
        %587 = vmatmul.mubr.bf16.gmra.mrb[0].mxu0 %v419
        %v588 = vpop.f32.mrb[0].mxu0
        %v589 = vadd.f32 0.0, %v588
        %v590 = vpop.f32.mrb[0].mxu0
        %v591 = vpop.f32.mrb[0].mxu0
        %v592 = vadd.f32 0.0, %v591
        %v593 = vpop.f32.mrb[0].mxu0
        %594 = vmatprep.mubr.bf16.mxu0 0
        %595 = vmatmul.mubr.bf16.gmra.mrb[0].mxu0 %v420
        %v596 = vpop.f32.mrb[0].mxu0
        %v597 = vadd.f32 0.0, %v596
        %v598 = vpop.f32.mrb[0].mxu0
        %v599 = vpop.f32.mrb[0].mxu0
        %v600 = vadd.f32 0.0, %v599
        %v601 = vpop.f32.mrb[0].mxu0
        %602 = vdwg.mxu0
        %v603 = vadd.f32 %v442, %v541
        %v604 = vadd.f32 %v443, %v544
        %v605 = vadd.f32 %v444, %v549
        %v606 = vadd.f32 %v445, %v552
        %v607 = vadd.f32 %v446, %v557
        %v608 = vadd.f32 %v447, %v560
        %v609 = vadd.f32 %v448, %v565
        %v610 = vadd.f32 %v449, %v568
        %v611 = vadd.f32 %v450, %v573
        %v612 = vadd.f32 %v451, %v576
        %v613 = vadd.f32 %v452, %v581
        %v614 = vadd.f32 %v453, %v584
        %v615 = vadd.f32 %v454, %v589
        %v616 = vadd.f32 %v455, %v592
        %v617 = vadd.f32 %v456, %v597
        %v618 = vadd.f32 %v457, %v600
        %619 = vst [vmem:[#allocation2] sm:$0xff] %v603
        %620 = vst [vmem:[#allocation2 + $0x8] sm:$0xff] %v604
        %621 = vst [vmem:[#allocation2 + $0x10] sm:$0xff] %v605
        %622 = vst [vmem:[#allocation2 + $0x18] sm:$0xff] %v606
        %623 = vst [vmem:[#allocation2 + $0x20] sm:$0xff] %v607
        %624 = vst [vmem:[#allocation2 + $0x28] sm:$0xff] %v608
        %625 = vst [vmem:[#allocation2 + $0x30] sm:$0xff] %v609
        %626 = vst [vmem:[#allocation2 + $0x38] sm:$0xff] %v610
        %627 = vst [vmem:[#allocation2 + $0x40] sm:$0xff] %v611
        %628 = vst [vmem:[#allocation2 + $0x48] sm:$0xff] %v612
        %629 = vst [vmem:[#allocation2 + $0x50] sm:$0xff] %v613
        %630 = vst [vmem:[#allocation2 + $0x58] sm:$0xff] %v614
        %631 = vst [vmem:[#allocation2 + $0x60] sm:$0xff] %v615
        %632 = vst [vmem:[#allocation2 + $0x68] sm:$0xff] %v616
        %633 = vst [vmem:[#allocation2 + $0x70] sm:$0xff] %v617
        %634 = vst [vmem:[#allocation2 + $0x78] sm:$0xff] %v618
        %p635 = scmp.eq.s32.totalorder %s23, 1
        // Predicated region
        $region91: #{sage_forward.2} parent=81 // pred_check
          %p636 = pneg %p635
        $region92: #{sage_forward.2} parent=81 // pred_check_branch
          %638 = sbr.rel (%p636) target = $region94
        $region93: #{sage_forward.2} parent=81 // pred_region
          %v639 = vld [vmem:[#allocation2] sm:$0xff]
          %v640 = vld [vmem:[#allocation2 + $0x8] sm:$0xff]
          %v641 = vld [vmem:[#allocation2 + $0x10] sm:$0xff]
          %v642 = vld [vmem:[#allocation2 + $0x18] sm:$0xff]
          %v643 = vld [vmem:[#allocation2 + $0x20] sm:$0xff]
          %v644 = vld [vmem:[#allocation2 + $0x28] sm:$0xff]
          %v645 = vld [vmem:[#allocation2 + $0x30] sm:$0xff]
          %v646 = vld [vmem:[#allocation2 + $0x38] sm:$0xff]
          %v647 = vld [vmem:[#allocation2 + $0x40] sm:$0xff]
          %v648 = vld [vmem:[#allocation2 + $0x48] sm:$0xff]
          %v649 = vld [vmem:[#allocation2 + $0x50] sm:$0xff]
          %v650 = vld [vmem:[#allocation2 + $0x58] sm:$0xff]
          %v651 = vld [vmem:[#allocation2 + $0x60] sm:$0xff]
          %v652 = vld [vmem:[#allocation2 + $0x68] sm:$0xff]
          %v653 = vld [vmem:[#allocation2 + $0x70] sm:$0xff]
          %v654 = vld [vmem:[#allocation2 + $0x78] sm:$0xff]
          %v655 = vld [vmem:[%s380] sm:$0xff]
          %v656 = vld [vmem:[%s380 + $0x8] sm:$0xff]
          %v657 = vld [vmem:[%s380 + $0x10] sm:$0xff]
          %v658 = vld [vmem:[%s380 + $0x18] sm:$0xff]
          %v659 = vld [vmem:[%s380 + $0x20] sm:$0xff]
          %v660 = vld [vmem:[%s380 + $0x28] sm:$0xff]
          %v661 = vld [vmem:[%s380 + $0x30] sm:$0xff]
          %v662 = vld [vmem:[%s380 + $0x38] sm:$0xff]
          %v663 = vld [vmem:[%s380 + $0x40] sm:$0xff]
          %v664 = vld [vmem:[%s380 + $0x48] sm:$0xff]
          %v665 = vld [vmem:[%s380 + $0x50] sm:$0xff]
          %v666 = vld [vmem:[%s380 + $0x58] sm:$0xff]
          %v667 = vld [vmem:[%s380 + $0x60] sm:$0xff]
          %v668 = vld [vmem:[%s380 + $0x68] sm:$0xff]
          %v669 = vld [vmem:[%s380 + $0x70] sm:$0xff]
          %v670 = vld [vmem:[%s380 + $0x78] sm:$0xff]
          %672 = vset.pattern.permute.xlu0 0
          %673 = vperm.xlu0 %672, %v655
          %v674 = vpop.permute.xlu0 %673
          %677 = vset.pattern.permute.xlu0 0
          %678 = vperm.xlu0 %677, %v656
          %v679 = vpop.permute.xlu0 %678
          %682 = vset.pattern.permute.xlu0 0
          %683 = vperm.xlu0 %682, %v657
          %v684 = vpop.permute.xlu0 %683
          %687 = vset.pattern.permute.xlu0 0
          %688 = vperm.xlu0 %687, %v658
          %v689 = vpop.permute.xlu0 %688
          %692 = vset.pattern.permute.xlu0 0
          %693 = vperm.xlu0 %692, %v659
          %v694 = vpop.permute.xlu0 %693
          %697 = vset.pattern.permute.xlu0 0
          %698 = vperm.xlu0 %697, %v660
          %v699 = vpop.permute.xlu0 %698
          %702 = vset.pattern.permute.xlu0 0
          %703 = vperm.xlu0 %702, %v661
          %v704 = vpop.permute.xlu0 %703
          %707 = vset.pattern.permute.xlu0 0
          %708 = vperm.xlu0 %707, %v662
          %v709 = vpop.permute.xlu0 %708
          %712 = vset.pattern.permute.xlu0 0
          %713 = vperm.xlu0 %712, %v663
          %v714 = vpop.permute.xlu0 %713
          %717 = vset.pattern.permute.xlu0 0
          %718 = vperm.xlu0 %717, %v664
          %v719 = vpop.permute.xlu0 %718
          %722 = vset.pattern.permute.xlu0 0
          %723 = vperm.xlu0 %722, %v665
          %v724 = vpop.permute.xlu0 %723
          %727 = vset.pattern.permute.xlu0 0
          %728 = vperm.xlu0 %727, %v666
          %v729 = vpop.permute.xlu0 %728
          %732 = vset.pattern.permute.xlu0 0
          %733 = vperm.xlu0 %732, %v667
          %v734 = vpop.permute.xlu0 %733
          %737 = vset.pattern.permute.xlu0 0
          %738 = vperm.xlu0 %737, %v668
          %v739 = vpop.permute.xlu0 %738
          %742 = vset.pattern.permute.xlu0 0
          %743 = vperm.xlu0 %742, %v669
          %v744 = vpop.permute.xlu0 %743
          %747 = vset.pattern.permute.xlu0 0
          %748 = vperm.xlu0 %747, %v670
          %v749 = vpop.permute.xlu0 %748
          %v751 = vmul.f32 %v639, %v674
          %v752 = vmul.f32 %v640, %v679
          %v753 = vmul.f32 %v641, %v684
          %v754 = vmul.f32 %v642, %v689
          %v755 = vmul.f32 %v643, %v694
          %v756 = vmul.f32 %v644, %v699
          %v757 = vmul.f32 %v645, %v704
          %v758 = vmul.f32 %v646, %v709
          %v759 = vmul.f32 %v647, %v714
          %v760 = vmul.f32 %v648, %v719
          %v761 = vmul.f32 %v649, %v724
          %v762 = vmul.f32 %v650, %v729
          %v763 = vmul.f32 %v651, %v734
          %v764 = vmul.f32 %v652, %v739
          %v765 = vmul.f32 %v653, %v744
          %v766 = vmul.f32 %v654, %v749
          %v767 = vpack.c.bf16 %v752, %v751
          %v768 = vpack.c.bf16 %v754, %v753
          %v769 = vpack.c.bf16 %v756, %v755
          %v770 = vpack.c.bf16 %v758, %v757
          %v771 = vpack.c.bf16 %v760, %v759
          %v772 = vpack.c.bf16 %v762, %v761
          %v773 = vpack.c.bf16 %v764, %v763
          %v774 = vpack.c.bf16 %v766, %v765
          %v775 = vld [vmem:[%s4] sm:$0xf]
          %v776 = vld [vmem:[%s4 + $0x4] sm:$0xf]
          %v777 = vld [vmem:[%s4 + $0x8] sm:$0xf]
          %v778 = vld [vmem:[%s4 + $0xc] sm:$0xf]
          %v779 = vld [vmem:[%s4 + $0x10] sm:$0xf]
          %v780 = vld [vmem:[%s4 + $0x14] sm:$0xf]
          %v781 = vld [vmem:[%s4 + $0x18] sm:$0xf]
          %v782 = vld [vmem:[%s4 + $0x1c] sm:$0xf]
          %v783 = vld [vmem:[%s4 + $0x20] sm:$0xf]
          %v784 = vld [vmem:[%s4 + $0x24] sm:$0xf]
          %v785 = vld [vmem:[%s4 + $0x28] sm:$0xf]
          %v786 = vld [vmem:[%s4 + $0x2c] sm:$0xf]
          %v787 = vld [vmem:[%s4 + $0x30] sm:$0xf]
          %v788 = vld [vmem:[%s4 + $0x34] sm:$0xf]
          %v789 = vld [vmem:[%s4 + $0x38] sm:$0xf]
          %v790 = vld [vmem:[%s4 + $0x3c] sm:$0xf]
          %v791 = vld [vmem:[%s374] sm:$0xf]
          %v792 = vld [vmem:[%s374 + $0x4] sm:$0xf]
          %v793 = vld [vmem:[%s374 + $0x8] sm:$0xf]
          %v794 = vld [vmem:[%s374 + $0xc] sm:$0xf]
          %v795 = vld [vmem:[%s374 + $0x10] sm:$0xf]
          %v796 = vld [vmem:[%s374 + $0x14] sm:$0xf]
          %v797 = vld [vmem:[%s374 + $0x18] sm:$0xf]
          %v798 = vld [vmem:[%s374 + $0x1c] sm:$0xf]
          %v799 = vld [vmem:[%s374 + $0x20] sm:$0xf]
          %v800 = vld [vmem:[%s374 + $0x24] sm:$0xf]
          %v801 = vld [vmem:[%s374 + $0x28] sm:$0xf]
          %v802 = vld [vmem:[%s374 + $0x2c] sm:$0xf]
          %v803 = vld [vmem:[%s374 + $0x30] sm:$0xf]
          %v804 = vld [vmem:[%s374 + $0x34] sm:$0xf]
          %v805 = vld [vmem:[%s374 + $0x38] sm:$0xf]
          %v806 = vld [vmem:[%s374 + $0x3c] sm:$0xf]
          %v807 = vld [vmem:[%s5] sm:$0xf]
          %v808 = vld [vmem:[%s5 + $0x4] sm:$0xf]
          %v809 = vld [vmem:[%s5 + $0x8] sm:$0xf]
          %v810 = vld [vmem:[%s5 + $0xc] sm:$0xf]
          %v811 = vld [vmem:[%s5 + $0x10] sm:$0xf]
          %v812 = vld [vmem:[%s5 + $0x14] sm:$0xf]
          %v813 = vld [vmem:[%s5 + $0x18] sm:$0xf]
          %v814 = vld [vmem:[%s5 + $0x1c] sm:$0xf]
          %v815 = vld [vmem:[%s5 + $0x20] sm:$0xf]
          %v816 = vld [vmem:[%s5 + $0x24] sm:$0xf]
          %v817 = vld [vmem:[%s5 + $0x28] sm:$0xf]
          %v818 = vld [vmem:[%s5 + $0x2c] sm:$0xf]
          %v819 = vld [vmem:[%s5 + $0x30] sm:$0xf]
          %v820 = vld [vmem:[%s5 + $0x34] sm:$0xf]
          %v821 = vld [vmem:[%s5 + $0x38] sm:$0xf]
          %v822 = vld [vmem:[%s5 + $0x3c] sm:$0xf]
          %v839 = vunpack.c.l.b16 %v791
          %v840 = vunpack.c.l.b16 %v792
          %v841 = vunpack.c.l.b16 %v793
          %v842 = vunpack.c.l.b16 %v794
          %v843 = vunpack.c.l.b16 %v795
          %v844 = vunpack.c.l.b16 %v796
          %v845 = vunpack.c.l.b16 %v797
          %v846 = vunpack.c.l.b16 %v798
          %v847 = vunpack.c.l.b16 %v799
          %v848 = vunpack.c.l.b16 %v800
          %v849 = vunpack.c.l.b16 %v801
          %v850 = vunpack.c.l.b16 %v802
          %v851 = vunpack.c.l.b16 %v803
          %v852 = vunpack.c.l.b16 %v804
          %v853 = vunpack.c.l.b16 %v805
          %v854 = vunpack.c.l.b16 %v806
          %v855 = vpack.c.b16 %v840, %v839
          %v856 = vpack.c.b16 %v842, %v841
          %v857 = vpack.c.b16 %v844, %v843
          %v858 = vpack.c.b16 %v846, %v845
          %v859 = vpack.c.b16 %v848, %v847
          %v860 = vpack.c.b16 %v850, %v849
          %v861 = vpack.c.b16 %v852, %v851
          %v862 = vpack.c.b16 %v854, %v853
          %v887 = vunpack.c.l.b16 %v807
          %v888 = vunpack.c.l.b16 %v808
          %v889 = vunpack.c.l.b16 %v809
          %v890 = vunpack.c.l.b16 %v810
          %v891 = vunpack.c.l.b16 %v811
          %v892 = vunpack.c.l.b16 %v812
          %v893 = vunpack.c.l.b16 %v813
          %v894 = vunpack.c.l.b16 %v814
          %v895 = vunpack.c.l.b16 %v815
          %v896 = vunpack.c.l.b16 %v816
          %v897 = vunpack.c.l.b16 %v817
          %v898 = vunpack.c.l.b16 %v818
          %v899 = vunpack.c.l.b16 %v819
          %v900 = vunpack.c.l.b16 %v820
          %v901 = vunpack.c.l.b16 %v821
          %v902 = vunpack.c.l.b16 %v822
          %v903 = vpack.c.b16 %v888, %v887
          %v904 = vpack.c.b16 %v890, %v889
          %v905 = vpack.c.b16 %v892, %v891
          %v906 = vpack.c.b16 %v894, %v893
          %v907 = vpack.c.b16 %v896, %v895
          %v908 = vpack.c.b16 %v898, %v897
          %v909 = vpack.c.b16 %v900, %v899
          %v910 = vpack.c.b16 %v902, %v901
          %919 = vmatprep.subr.bf16.mxu0 0
          %920 = vmatpush1.bf16.msra.mxu0 %v903
          %921 = vmatprep.subr.bf16.mxu0 0
          %922 = vmatpush1.bf16.msra.mxu0 %v904
          %923 = vmatprep.subr.bf16.mxu0 0
          %924 = vmatpush1.bf16.msra.mxu0 %v905
          %925 = vmatprep.subr.bf16.mxu0 0
          %926 = vmatpush1.bf16.msra.mxu0 %v906
          %927 = vmatprep.subr.bf16.mxu0 0
          %928 = vmatpush1.bf16.msra.mxu0 %v907
          %929 = vmatprep.subr.bf16.mxu0 0
          %930 = vmatpush1.bf16.msra.mxu0 %v908
          %931 = vmatprep.subr.bf16.mxu0 0
          %932 = vmatpush1.bf16.msra.mxu0 %v909
          %933 = vmatprep.subr.bf16.mxu0 0
          %934 = vmatpush1.bf16.msra.mxu0 %v910
          %935 = vmatprep.subr.bf16.mxu0 0
          %936 = vmatpush1.bf16.msra.mxu0 0
          %937 = vmatprep.subr.bf16.mxu0 0
          %938 = vmatpush1.bf16.msra.mxu0 0
          %939 = vmatprep.subr.bf16.mxu0 0
          %940 = vmatpush1.bf16.msra.mxu0 0
          %941 = vmatprep.subr.bf16.mxu0 0
          %942 = vmatpush1.bf16.msra.mxu0 0
          %943 = vmatprep.subr.bf16.mxu0 0
          %944 = vmatpush1.bf16.msra.mxu0 0
          %945 = vmatprep.subr.bf16.mxu0 0
          %946 = vmatpush1.bf16.msra.mxu0 0
          %947 = vmatprep.subr.bf16.mxu0 0
          %948 = vmatpush1.bf16.msra.mxu0 0
          %949 = vmatprep.subr.bf16.mxu0 0
          %950 = vmatpush1.bf16.msra.mxu0 0
          %951 = vmatprep.mubr.bf16.mxu0 0
          %952 = vmatmul.mubr.bf16.gmra.mrb[0].mxu0 %v855
          %v953 = vpop.f32.mrb[0].mxu0
          %v954 = vadd.f32 0.0, %v953
          %v955 = vpop.f32.mrb[0].mxu0
          %v956 = vpop.f32.mrb[0].mxu0
          %v957 = vadd.f32 0.0, %v956
          %v958 = vpop.f32.mrb[0].mxu0
          %959 = vmatprep.mubr.bf16.mxu0 0
          %960 = vmatmul.mubr.bf16.gmra.mrb[0].mxu0 %v856
          %v961 = vpop.f32.mrb[0].mxu0
          %v962 = vadd.f32 0.0, %v961
          %v963 = vpop.f32.mrb[0].mxu0
          %v964 = vpop.f32.mrb[0].mxu0
          %v965 = vadd.f32 0.0, %v964
          %v966 = vpop.f32.mrb[0].mxu0
          %967 = vmatprep.mubr.bf16.mxu0 0
          %968 = vmatmul.mubr.bf16.gmra.mrb[0].mxu0 %v857
          %v969 = vpop.f32.mrb[0].mxu0
          %v970 = vadd.f32 0.0, %v969
          %v971 = vpop.f32.mrb[0].mxu0
          %v972 = vpop.f32.mrb[0].mxu0
          %v973 = vadd.f32 0.0, %v972
          %v974 = vpop.f32.mrb[0].mxu0
          %975 = vmatprep.mubr.bf16.mxu0 0
          %976 = vmatmul.mubr.bf16.gmra.mrb[0].mxu0 %v858
          %v977 = vpop.f32.mrb[0].mxu0
          %v978 = vadd.f32 0.0, %v977
          %v979 = vpop.f32.mrb[0].mxu0
          %v980 = vpop.f32.mrb[0].mxu0
          %v981 = vadd.f32 0.0, %v980
          %v982 = vpop.f32.mrb[0].mxu0
          %983 = vmatprep.mubr.bf16.mxu0 0
          %984 = vmatmul.mubr.bf16.gmra.mrb[0].mxu0 %v859
          %v985 = vpop.f32.mrb[0].mxu0
          %v986 = vadd.f32 0.0, %v985
          %v987 = vpop.f32.mrb[0].mxu0
          %v988 = vpop.f32.mrb[0].mxu0
          %v989 = vadd.f32 0.0, %v988
          %v990 = vpop.f32.mrb[0].mxu0
          %991 = vmatprep.mubr.bf16.mxu0 0
          %992 = vmatmul.mubr.bf16.gmra.mrb[0].mxu0 %v860
          %v993 = vpop.f32.mrb[0].mxu0
          %v994 = vadd.f32 0.0, %v993
          %v995 = vpop.f32.mrb[0].mxu0
          %v996 = vpop.f32.mrb[0].mxu0
          %v997 = vadd.f32 0.0, %v996
          %v998 = vpop.f32.mrb[0].mxu0
          %999 = vmatprep.mubr.bf16.mxu0 0
          %1000 = vmatmul.mubr.bf16.gmra.mrb[0].mxu0 %v861
          %v1001 = vpop.f32.mrb[0].mxu0
          %v1002 = vadd.f32 0.0, %v1001
          %v1003 = vpop.f32.mrb[0].mxu0
          %v1004 = vpop.f32.mrb[0].mxu0
          %v1005 = vadd.f32 0.0, %v1004
          %v1006 = vpop.f32.mrb[0].mxu0
          %1007 = vmatprep.mubr.bf16.mxu0 0
          %1008 = vmatmul.mubr.bf16.gmra.mrb[0].mxu0 %v862
          %v1009 = vpop.f32.mrb[0].mxu0
          %v1010 = vadd.f32 0.0, %v1009
          %v1011 = vpop.f32.mrb[0].mxu0
          %v1012 = vpop.f32.mrb[0].mxu0
          %v1013 = vadd.f32 0.0, %v1012
          %v1014 = vpop.f32.mrb[0].mxu0
          %1015 = vdwg.mxu0
          %v1032 = vunpack.c.l.b16 %v775
          %v1033 = vunpack.c.l.b16 %v776
          %v1034 = vunpack.c.l.b16 %v777
          %v1035 = vunpack.c.l.b16 %v778
          %v1036 = vunpack.c.l.b16 %v779
          %v1037 = vunpack.c.l.b16 %v780
          %v1038 = vunpack.c.l.b16 %v781
          %v1039 = vunpack.c.l.b16 %v782
          %v1040 = vunpack.c.l.b16 %v783
          %v1041 = vunpack.c.l.b16 %v784
          %v1042 = vunpack.c.l.b16 %v785
          %v1043 = vunpack.c.l.b16 %v786
          %v1044 = vunpack.c.l.b16 %v787
          %v1045 = vunpack.c.l.b16 %v788
          %v1046 = vunpack.c.l.b16 %v789
          %v1047 = vunpack.c.l.b16 %v790
          %v1048 = vpack.c.b16 %v1033, %v1032
          %v1049 = vpack.c.b16 %v1035, %v1034
          %v1050 = vpack.c.b16 %v1037, %v1036
          %v1051 = vpack.c.b16 %v1039, %v1038
          %v1052 = vpack.c.b16 %v1041, %v1040
          %v1053 = vpack.c.b16 %v1043, %v1042
          %v1054 = vpack.c.b16 %v1045, %v1044
          %v1055 = vpack.c.b16 %v1047, %v1046
          %1064 = vmatprep.subr.bf16.mxu0 0
          %1065 = vmatpush1.bf16.msra.mxu0 %v1048
          %1066 = vmatprep.subr.bf16.mxu0 0
          %1067 = vmatpush1.bf16.msra.mxu0 %v1049
          %1068 = vmatprep.subr.bf16.mxu0 0
          %1069 = vmatpush1.bf16.msra.mxu0 %v1050
          %1070 = vmatprep.subr.bf16.mxu0 0
          %1071 = vmatpush1.bf16.msra.mxu0 %v1051
          %1072 = vmatprep.subr.bf16.mxu0 0
          %1073 = vmatpush1.bf16.msra.mxu0 %v1052
          %1074 = vmatprep.subr.bf16.mxu0 0
          %1075 = vmatpush1.bf16.msra.mxu0 %v1053
          %1076 = vmatprep.subr.bf16.mxu0 0
          %1077 = vmatpush1.bf16.msra.mxu0 %v1054
          %1078 = vmatprep.subr.bf16.mxu0 0
          %1079 = vmatpush1.bf16.msra.mxu0 %v1055
          %1080 = vmatprep.subr.bf16.mxu0 0
          %1081 = vmatpush1.bf16.msra.mxu0 0
          %1082 = vmatprep.subr.bf16.mxu0 0
          %1083 = vmatpush1.bf16.msra.mxu0 0
          %1084 = vmatprep.subr.bf16.mxu0 0
          %1085 = vmatpush1.bf16.msra.mxu0 0
          %1086 = vmatprep.subr.bf16.mxu0 0
          %1087 = vmatpush1.bf16.msra.mxu0 0
          %1088 = vmatprep.subr.bf16.mxu0 0
          %1089 = vmatpush1.bf16.msra.mxu0 0
          %1090 = vmatprep.subr.bf16.mxu0 0
          %1091 = vmatpush1.bf16.msra.mxu0 0
          %1092 = vmatprep.subr.bf16.mxu0 0
          %1093 = vmatpush1.bf16.msra.mxu0 0
          %1094 = vmatprep.subr.bf16.mxu0 0
          %1095 = vmatpush1.bf16.msra.mxu0 0
          %1096 = vmatprep.mubr.bf16.mxu0 0
          %1097 = vmatmul.mubr.bf16.gmra.mrb[0].mxu0 %v767
          %v1098 = vpop.f32.mrb[0].mxu0
          %v1099 = vadd.f32 %v954, %v1098
          %v1100 = vpop.f32.mrb[0].mxu0
          %v1101 = vpop.f32.mrb[0].mxu0
          %v1102 = vadd.f32 %v957, %v1101
          %v1103 = vpop.f32.mrb[0].mxu0
          %1104 = vmatprep.mubr.bf16.mxu0 0
          %1105 = vmatmul.mubr.bf16.gmra.mrb[0].mxu0 %v768
          %v1106 = vpop.f32.mrb[0].mxu0
          %v1107 = vadd.f32 %v962, %v1106
          %v1108 = vpop.f32.mrb[0].mxu0
          %v1109 = vpop.f32.mrb[0].mxu0
          %v1110 = vadd.f32 %v965, %v1109
          %v1111 = vpop.f32.mrb[0].mxu0
          %1112 = vmatprep.mubr.bf16.mxu0 0
          %1113 = vmatmul.mubr.bf16.gmra.mrb[0].mxu0 %v769
          %v1114 = vpop.f32.mrb[0].mxu0
          %v1115 = vadd.f32 %v970, %v1114
          %v1116 = vpop.f32.mrb[0].mxu0
          %v1117 = vpop.f32.mrb[0].mxu0
          %v1118 = vadd.f32 %v973, %v1117
          %v1119 = vpop.f32.mrb[0].mxu0
          %1120 = vmatprep.mubr.bf16.mxu0 0
          %1121 = vmatmul.mubr.bf16.gmra.mrb[0].mxu0 %v770
          %v1122 = vpop.f32.mrb[0].mxu0
          %v1123 = vadd.f32 %v978, %v1122
          %v1124 = vpop.f32.mrb[0].mxu0
          %v1125 = vpop.f32.mrb[0].mxu0
          %v1126 = vadd.f32 %v981, %v1125
          %v1127 = vpop.f32.mrb[0].mxu0
          %1128 = vmatprep.mubr.bf16.mxu0 0
          %1129 = vmatmul.mubr.bf16.gmra.mrb[0].mxu0 %v771
          %v1130 = vpop.f32.mrb[0].mxu0
          %v1131 = vadd.f32 %v986, %v1130
          %v1132 = vpop.f32.mrb[0].mxu0
          %v1133 = vpop.f32.mrb[0].mxu0
          %v1134 = vadd.f32 %v989, %v1133
          %v1135 = vpop.f32.mrb[0].mxu0
          %1136 = vmatprep.mubr.bf16.mxu0 0
          %1137 = vmatmul.mubr.bf16.gmra.mrb[0].mxu0 %v772
          %v1138 = vpop.f32.mrb[0].mxu0
          %v1139 = vadd.f32 %v994, %v1138
          %v1140 = vpop.f32.mrb[0].mxu0
          %v1141 = vpop.f32.mrb[0].mxu0
          %v1142 = vadd.f32 %v997, %v1141
          %v1143 = vpop.f32.mrb[0].mxu0
          %1144 = vmatprep.mubr.bf16.mxu0 0
          %1145 = vmatmul.mubr.bf16.gmra.mrb[0].mxu0 %v773
          %v1146 = vpop.f32.mrb[0].mxu0
          %v1147 = vadd.f32 %v1002, %v1146
          %v1148 = vpop.f32.mrb[0].mxu0
          %v1149 = vpop.f32.mrb[0].mxu0
          %v1150 = vadd.f32 %v1005, %v1149
          %v1151 = vpop.f32.mrb[0].mxu0
          %1152 = vmatprep.mubr.bf16.mxu0 0
          %1153 = vmatmul.mubr.bf16.gmra.mrb[0].mxu0 %v774
          %v1154 = vpop.f32.mrb[0].mxu0
          %v1155 = vadd.f32 %v1010, %v1154
          %v1156 = vpop.f32.mrb[0].mxu0
          %v1157 = vpop.f32.mrb[0].mxu0
          %v1158 = vadd.f32 %v1013, %v1157
          %v1159 = vpop.f32.mrb[0].mxu0
          %1160 = vdwg.mxu0
          %v1161 = vld [vmem:[%s6] sm:$0x1]
          %v1163 = vlaneseq
          %v1164 = vshrl.u32 %v1163, 7
          %v1165 = vsub.s32 0, %v1164
          %v1166 = vrot.slane %v1161, %v1165
          %v1168 = vadd.f32 %v1099, %v1166
          %v1169 = vadd.f32 %v1102, %v1166
          %v1170 = vadd.f32 %v1107, %v1166
          %v1171 = vadd.f32 %v1110, %v1166
          %v1172 = vadd.f32 %v1115, %v1166
          %v1173 = vadd.f32 %v1118, %v1166
          %v1174 = vadd.f32 %v1123, %v1166
          %v1175 = vadd.f32 %v1126, %v1166
          %v1176 = vadd.f32 %v1131, %v1166
          %v1177 = vadd.f32 %v1134, %v1166
          %v1178 = vadd.f32 %v1139, %v1166
          %v1179 = vadd.f32 %v1142, %v1166
          %v1180 = vadd.f32 %v1147, %v1166
          %v1181 = vadd.f32 %v1150, %v1166
          %v1182 = vadd.f32 %v1155, %v1166
          %v1183 = vadd.f32 %v1158, %v1166
          %v1184 = vmax.f32 %v1168, 0.0
          %v1185 = vmax.f32 %v1169, 0.0
          %v1186 = vmax.f32 %v1170, 0.0
          %v1187 = vmax.f32 %v1171, 0.0
          %v1188 = vmax.f32 %v1172, 0.0
          %v1189 = vmax.f32 %v1173, 0.0
          %v1190 = vmax.f32 %v1174, 0.0
          %v1191 = vmax.f32 %v1175, 0.0
          %v1192 = vmax.f32 %v1176, 0.0
          %v1193 = vmax.f32 %v1177, 0.0
          %v1194 = vmax.f32 %v1178, 0.0
          %v1195 = vmax.f32 %v1179, 0.0
          %v1196 = vmax.f32 %v1180, 0.0
          %v1197 = vmax.f32 %v1181, 0.0
          %v1198 = vmax.f32 %v1182, 0.0
          %v1199 = vmax.f32 %v1183, 0.0
          %v1200 = vpack.c.bf16 %v1185, %v1184
          %v1201 = vpack.c.bf16 %v1187, %v1186
          %v1202 = vpack.c.bf16 %v1189, %v1188
          %v1203 = vpack.c.bf16 %v1191, %v1190
          %v1204 = vpack.c.bf16 %v1193, %v1192
          %v1205 = vpack.c.bf16 %v1195, %v1194
          %v1206 = vpack.c.bf16 %v1197, %v1196
          %v1207 = vpack.c.bf16 %v1199, %v1198
          %v1216 = vunpack.c.l.b16 %v1200
          %v1217 = vunpack.c.h.b16 %v1200
          %v1218 = vunpack.c.l.b16 %v1201
          %v1219 = vunpack.c.h.b16 %v1201
          %v1220 = vunpack.c.l.b16 %v1202
          %v1221 = vunpack.c.h.b16 %v1202
          %v1222 = vunpack.c.l.b16 %v1203
          %v1223 = vunpack.c.h.b16 %v1203
          %v1224 = vunpack.c.l.b16 %v1204
          %v1225 = vunpack.c.h.b16 %v1204
          %v1226 = vunpack.c.l.b16 %v1205
          %v1227 = vunpack.c.h.b16 %v1205
          %v1228 = vunpack.c.l.b16 %v1206
          %v1229 = vunpack.c.h.b16 %v1206
          %v1230 = vunpack.c.l.b16 %v1207
          %v1231 = vunpack.c.h.b16 %v1207
          %v1232 = vpack.c.b16 %v1216, %v1216
          %v1233 = vpack.c.b16 %v1217, %v1217
          %v1234 = vpack.c.b16 %v1218, %v1218
          %v1235 = vpack.c.b16 %v1219, %v1219
          %v1236 = vpack.c.b16 %v1220, %v1220
          %v1237 = vpack.c.b16 %v1221, %v1221
          %v1238 = vpack.c.b16 %v1222, %v1222
          %v1239 = vpack.c.b16 %v1223, %v1223
          %v1240 = vpack.c.b16 %v1224, %v1224
          %v1241 = vpack.c.b16 %v1225, %v1225
          %v1242 = vpack.c.b16 %v1226, %v1226
          %v1243 = vpack.c.b16 %v1227, %v1227
          %v1244 = vpack.c.b16 %v1228, %v1228
          %v1245 = vpack.c.b16 %v1229, %v1229
          %v1246 = vpack.c.b16 %v1230, %v1230
          %v1247 = vpack.c.b16 %v1231, %v1231
          %1264 = vst [vmem:[%s386] sm:$0xf] %v1232
          %1265 = vst [vmem:[%s386 + $0x4] sm:$0xf] %v1233
          %1266 = vst [vmem:[%s386 + $0x8] sm:$0xf] %v1234
          %1267 = vst [vmem:[%s386 + $0xc] sm:$0xf] %v1235
          %1268 = vst [vmem:[%s386 + $0x10] sm:$0xf] %v1236
          %1269 = vst [vmem:[%s386 + $0x14] sm:$0xf] %v1237
          %1270 = vst [vmem:[%s386 + $0x18] sm:$0xf] %v1238
          %1271 = vst [vmem:[%s386 + $0x1c] sm:$0xf] %v1239
          %1272 = vst [vmem:[%s386 + $0x20] sm:$0xf] %v1240
          %1273 = vst [vmem:[%s386 + $0x24] sm:$0xf] %v1241
          %1274 = vst [vmem:[%s386 + $0x28] sm:$0xf] %v1242
          %1275 = vst [vmem:[%s386 + $0x2c] sm:$0xf] %v1243
          %1276 = vst [vmem:[%s386 + $0x30] sm:$0xf] %v1244
          %1277 = vst [vmem:[%s386 + $0x34] sm:$0xf] %v1245
          %1278 = vst [vmem:[%s386 + $0x38] sm:$0xf] %v1246
          %1279 = vst [vmem:[%s386 + $0x3c] sm:$0xf] %v1247
        $region94: #{sage_forward.2} parent=81 // pred_fallthru
          _
        %s1280 = smul.u32 16, %s22
        %p1281 = scmp.lt.s32.totalorder %s1280, 31
        %s1282 = scalar_select %p1281, %s1280, 31
        %s1283 = smul.addr %s1282, 4
        %s1284 = scalar_lea.vmem %s7, %s1283
        // Predicated region
        $region95: #{sage_forward.2} parent=81 // pred_check
          %p1285 = pneg %p212
        $region96: #{sage_forward.2} parent=81 // pred_check_branch
          %1287 = sbr.rel (%p1285) target = $region98
        $region97: #{sage_forward.2} parent=81 // pred_region
          %s1288 = smul.u32 16, %s22
        $region98: #{sage_forward.2} parent=81 // pred_fallthru
          _
      $region82: #{sage_forward.2} parent=5 // pred_fallthru
        _
      %p1289 = scmp.le.s32.totalorder 2, %s13
      // Predicated region
      $region99: #{sage_forward.2} parent=5 // pred_check
        %p1290 = pneg %p1289
      $region100: #{sage_forward.2} parent=5 // pred_check_branch
        %1292 = sbr.rel (%p1290) target = $region102
      $region101: #{sage_forward.2} parent=5 // pred_region
        %s1293 = ssub.s32 %s13, 2
        // Predicated region
        $region103: #{sage_forward.2} parent=101 // pred_check
          %p1294 = pneg %p218
        $region104: #{sage_forward.2} parent=101 // pred_check_branch
          %1296 = sbr.rel (%p1294) target = $region106
        $region105: #{sage_forward.2} parent=101 // pred_region
          %s1297 = smul.u32 16, %s24
          %p1298 = scmp.lt.s32.totalorder %s1297, 31
          %s1299 = scalar_select %p1298, %s1297, 31
          %s1300 = smul.addr %s1299, 4
          %s1301 = scalar_lea.vmem %s7, %s1300
        $region106: #{sage_forward.2} parent=101 // pred_fallthru
          _
      $region102: #{sage_forward.2} parent=5 // pred_fallthru
        _
    $region6: #{sage_forward.2} parent=1 // loop_footer
      %s17 = sadd.s32 1, %s13
    $region7: #{sage_forward.2} parent=1 // loop_footer_branch
      %12 = sbr.rel target = $region3
    $region8: #{sage_forward.2} parent=1 // loop_exit
      _

// kernel: sage_forward.3
$region0: #{sage_forward.3}
  #allocation0 [shape = 'u32[]', space=smem, size = 0x4, offset = 0x4, fixed_abs, tag = 'smem constant byte address 0x4 - core index']
  #allocation1 [shape = 'u32[144,128]{1,0:T(1,128)}', space=vmem, size = 0x12000, scoped, tag = 'internal scratch']
  #allocation2 [shape = 'f32[128,128]{1,0:T(8,128)}', space=vmem, size = 0x10000, scoped, tag = 'scratch operand']
  %s0 = inlined_call_operand.vmem [shape: s8[256,256], index: 0, kind: input, shape index: {}]
  %s1 = inlined_call_operand.vmem [shape: bf16[256,128], index: 1, kind: input, shape index: {}, may-alias: {1,2}]
  %s2 = inlined_call_operand.vmem [shape: bf16[256,128], index: 2, kind: input, shape index: {}, may-alias: {1,2}]
  %s3 = inlined_call_operand.vmem [shape: f32[256,1], index: 3, kind: input, shape index: {}]
  %s4 = inlined_call_operand.vmem [shape: bf16[128,128], index: 4, kind: input, shape index: {}]
  %s5 = inlined_call_operand.vmem [shape: bf16[128,128], index: 5, kind: input, shape index: {}]
  %s6 = inlined_call_operand.vmem [shape: f32[1,128], index: 6, kind: input, shape index: {}]
  %s7 = inlined_call_operand.vmem [shape: bf16[128,128], index: 7, kind: input, shape index: {}]
  %s8 = inlined_call_operand.vmem [shape: f32[1,128], index: 8, kind: input, shape index: {}]
  %s9 = inlined_call_operand.vmem [shape: f32[256,128], index: 9, kind: output, shape index: {}]
  %s10 = sld [smem:[#allocation0]]
  $region115: #{sage_forward.3} parent=0
    _
  %s12 = ssub.s32 1, %s10
  %s13 = scalar_select 0, %s12, %s10
  $region1: #{sage_forward.3} parent=0
    #allocation3 [shape = 'u8[32768]{0}', space=vmem, size = 0x8000, scoped, tag = 'input window, operand 0']
    loop: start=0, step=1, limit=6
    $region2: #{sage_forward.3} parent=1 // loop_pre_header
      _
    $region3: #{sage_forward.3} parent=1 // loop_header
      %s15 = sphi 0, %s19
      %p16 = scmp.ge.s32.totalorder %s15, 6
      %s22 = sphi 0, %s34
      %s23 = sphi 0, %s30
      %s24 = sphi 0, %s22
      %s25 = sphi 0, %s23
      %s26 = sphi 0, %s24
      %s27 = sphi 0, %s25
      %s39 = sphi 0, %s41
      %s42 = sphi 0, %s39
      %s43 = sphi 0, %s42
      %s59 = sphi 0, %s43
      %s63 = sphi 0, %s63
      %s65 = sphi 0, %s63
      %s66 = sphi 0, %s65
      %s80 = sphi 0, %s66
      %s86 = sphi 0, %s88
      %s89 = sphi 0, %s86
      %s90 = sphi 0, %s89
      %s106 = sphi 0, %s90
      %s112 = sphi 0, %s114
      %s115 = sphi 0, %s112
      %s116 = sphi 0, %s115
      %s132 = sphi 0, %s116
      %s136 = sphi 0, %s136
      %s138 = sphi 0, %s136
      %s139 = sphi 0, %s138
      %s153 = sphi 0, %s139
      %s157 = sphi 0, %s157
      %s159 = sphi 0, %s157
      %s160 = sphi 0, %s159
      %s174 = sphi 0, %s160
      %s178 = sphi 0, %s178
      %s180 = sphi 0, %s178
      %s181 = sphi 0, %s180
      %s195 = sphi 0, %s181
      %s199 = sphi 0, %s199
      %s201 = sphi 0, %s199
      %s202 = sphi 0, %s201
      %s216 = sphi 0, %s202
      %s220 = sphi 0, %s220
      %s222 = sphi 0, %s220
      %s223 = sphi 0, %s222
      %s237 = sphi 0, %s223
      %s243 = sphi 0, %s245
      %s246 = sphi 0, %s243
      %s247 = sphi 0, %s246
      %s263 = sphi 0, %s247
    $region4: #{sage_forward.3} parent=1 // loop_header_branch
      %18 = sbr.rel (%p16) target = $region8
    $region5: #{sage_forward.3} parent=1 // loop_body
      %s20 = ssub.s32 %s15, 1
      %s21 = ssub.s32 %s15, 2
      %s28 = sadd.s32 1, %s23
      %p29 = scmp.ge.s32.totalorder %s28, 2
      %s30 = scalar_select %p29, 0, %s28
      %s31 = sadd.s32 1, %s22
      %s32 = scalar_select %p29, %s31, %s22
      %p33 = scmp.ge.s32.totalorder %s32, 2
      %s34 = scalar_select %p33, 0, %s32
      %s35 = ssub.s32 %s22, %s34
      %s36 = ssub.s32 %s23, %s30
      %s37 = sor.u32 %s35, %s36
      %p38 = scmp.eq.s32.totalorder %s37, 0
      %s40 = sadd.s32 %s39, 1
      %s41 = scalar_select %p38, %s39, %s40
      %p44 = pneg %p38
      %p45 = scmp.eq.s32.totalorder %s15, 3
      %p46 = por %p44, %p45
      %p47 = scmp.ne.s32.totalorder %s39, %s42
      %p48 = scmp.eq.s32.totalorder %s15, 0
      %p49 = por %p47, %p48
      %p50 = scmp.ne.s32.totalorder %s39, %s42
      %p51 = scmp.eq.s32.totalorder %s20, 3
      %p52 = por %p50, %p51
      %p53 = scmp.ne.s32.totalorder %s42, %s43
      %p54 = scmp.eq.s32.totalorder %s20, 0
      %p55 = por %p53, %p54
      %p56 = scmp.ne.s32.totalorder %s42, %s43
      %p57 = scmp.eq.s32.totalorder %s21, 3
      %p58 = por %p56, %p57
      %p60 = scmp.ne.s32.totalorder %s43, %s59
      %p61 = scmp.eq.s32.totalorder %s21, 0
      %p62 = por %p60, %p61
      %s64 = sadd.s32 %s63, 1
      %p67 = scmp.eq.s32.totalorder %s15, 3
      %p68 = scmp.ne.s32.totalorder %s63, %s65
      %p69 = scmp.eq.s32.totalorder %s15, 0
      %p70 = por %p68, %p69
      %p71 = scmp.ne.s32.totalorder %s63, %s65
      %p72 = scmp.eq.s32.totalorder %s20, 3
      %p73 = por %p71, %p72
      %p74 = scmp.ne.s32.totalorder %s65, %s66
      %p75 = scmp.eq.s32.totalorder %s20, 0
      %p76 = por %p74, %p75
      %p77 = scmp.ne.s32.totalorder %s65, %s66
      %p78 = scmp.eq.s32.totalorder %s21, 3
      %p79 = por %p77, %p78
      %p81 = scmp.ne.s32.totalorder %s66, %s80
      %p82 = scmp.eq.s32.totalorder %s21, 0
      %p83 = por %p81, %p82
      %s84 = ssub.s32 %s22, %s34
      %p85 = scmp.eq.s32.totalorder %s84, 0
      %s87 = sadd.s32 %s86, 1
      %s88 = scalar_select %p85, %s86, %s87
      %p91 = pneg %p85
      %p92 = scmp.eq.s32.totalorder %s15, 3
      %p93 = por %p91, %p92
      %p94 = scmp.ne.s32.totalorder %s86, %s89
      %p95 = scmp.eq.s32.totalorder %s15, 0
      %p96 = por %p94, %p95
      %p97 = scmp.ne.s32.totalorder %s86, %s89
      %p98 = scmp.eq.s32.totalorder %s20, 3
      %p99 = por %p97, %p98
      %p100 = scmp.ne.s32.totalorder %s89, %s90
      %p101 = scmp.eq.s32.totalorder %s20, 0
      %p102 = por %p100, %p101
      %p103 = scmp.ne.s32.totalorder %s89, %s90
      %p104 = scmp.eq.s32.totalorder %s21, 3
      %p105 = por %p103, %p104
      %p107 = scmp.ne.s32.totalorder %s90, %s106
      %p108 = scmp.eq.s32.totalorder %s21, 0
      %p109 = por %p107, %p108
      %s110 = ssub.s32 %s22, %s34
      %p111 = scmp.eq.s32.totalorder %s110, 0
      %s113 = sadd.s32 %s112, 1
      %s114 = scalar_select %p111, %s112, %s113
      %p117 = pneg %p111
      %p118 = scmp.eq.s32.totalorder %s15, 3
      %p119 = por %p117, %p118
      %p120 = scmp.ne.s32.totalorder %s112, %s115
      %p121 = scmp.eq.s32.totalorder %s15, 0
      %p122 = por %p120, %p121
      %p123 = scmp.ne.s32.totalorder %s112, %s115
      %p124 = scmp.eq.s32.totalorder %s20, 3
      %p125 = por %p123, %p124
      %p126 = scmp.ne.s32.totalorder %s115, %s116
      %p127 = scmp.eq.s32.totalorder %s20, 0
      %p128 = por %p126, %p127
      %p129 = scmp.ne.s32.totalorder %s115, %s116
      %p130 = scmp.eq.s32.totalorder %s21, 3
      %p131 = por %p129, %p130
      %p133 = scmp.ne.s32.totalorder %s116, %s132
      %p134 = scmp.eq.s32.totalorder %s21, 0
      %p135 = por %p133, %p134
      %s137 = sadd.s32 %s136, 1
      %p140 = scmp.eq.s32.totalorder %s15, 3
      %p141 = scmp.ne.s32.totalorder %s136, %s138
      %p142 = scmp.eq.s32.totalorder %s15, 0
      %p143 = por %p141, %p142
      %p144 = scmp.ne.s32.totalorder %s136, %s138
      %p145 = scmp.eq.s32.totalorder %s20, 3
      %p146 = por %p144, %p145
      %p147 = scmp.ne.s32.totalorder %s138, %s139
      %p148 = scmp.eq.s32.totalorder %s20, 0
      %p149 = por %p147, %p148
      %p150 = scmp.ne.s32.totalorder %s138, %s139
      %p151 = scmp.eq.s32.totalorder %s21, 3
      %p152 = por %p150, %p151
      %p154 = scmp.ne.s32.totalorder %s139, %s153
      %p155 = scmp.eq.s32.totalorder %s21, 0
      %p156 = por %p154, %p155
      %s158 = sadd.s32 %s157, 1
      %p161 = scmp.eq.s32.totalorder %s15, 3
      %p162 = scmp.ne.s32.totalorder %s157, %s159
      %p163 = scmp.eq.s32.totalorder %s15, 0
      %p164 = por %p162, %p163
      %p165 = scmp.ne.s32.totalorder %s157, %s159
      %p166 = scmp.eq.s32.totalorder %s20, 3
      %p167 = por %p165, %p166
      %p168 = scmp.ne.s32.totalorder %s159, %s160
      %p169 = scmp.eq.s32.totalorder %s20, 0
      %p170 = por %p168, %p169
      %p171 = scmp.ne.s32.totalorder %s159, %s160
      %p172 = scmp.eq.s32.totalorder %s21, 3
      %p173 = por %p171, %p172
      %p175 = scmp.ne.s32.totalorder %s160, %s174
      %p176 = scmp.eq.s32.totalorder %s21, 0
      %p177 = por %p175, %p176
      %s179 = sadd.s32 %s178, 1
      %p182 = scmp.eq.s32.totalorder %s15, 3
      %p183 = scmp.ne.s32.totalorder %s178, %s180
      %p184 = scmp.eq.s32.totalorder %s15, 0
      %p185 = por %p183, %p184
      %p186 = scmp.ne.s32.totalorder %s178, %s180
      %p187 = scmp.eq.s32.totalorder %s20, 3
      %p188 = por %p186, %p187
      %p189 = scmp.ne.s32.totalorder %s180, %s181
      %p190 = scmp.eq.s32.totalorder %s20, 0
      %p191 = por %p189, %p190
      %p192 = scmp.ne.s32.totalorder %s180, %s181
      %p193 = scmp.eq.s32.totalorder %s21, 3
      %p194 = por %p192, %p193
      %p196 = scmp.ne.s32.totalorder %s181, %s195
      %p197 = scmp.eq.s32.totalorder %s21, 0
      %p198 = por %p196, %p197
      %s200 = sadd.s32 %s199, 1
      %p203 = scmp.eq.s32.totalorder %s15, 3
      %p204 = scmp.ne.s32.totalorder %s199, %s201
      %p205 = scmp.eq.s32.totalorder %s15, 0
      %p206 = por %p204, %p205
      %p207 = scmp.ne.s32.totalorder %s199, %s201
      %p208 = scmp.eq.s32.totalorder %s20, 3
      %p209 = por %p207, %p208
      %p210 = scmp.ne.s32.totalorder %s201, %s202
      %p211 = scmp.eq.s32.totalorder %s20, 0
      %p212 = por %p210, %p211
      %p213 = scmp.ne.s32.totalorder %s201, %s202
      %p214 = scmp.eq.s32.totalorder %s21, 3
      %p215 = por %p213, %p214
      %p217 = scmp.ne.s32.totalorder %s202, %s216
      %p218 = scmp.eq.s32.totalorder %s21, 0
      %p219 = por %p217, %p218
      %s221 = sadd.s32 %s220, 1
      %p224 = scmp.eq.s32.totalorder %s15, 3
      %p225 = scmp.ne.s32.totalorder %s220, %s222
      %p226 = scmp.eq.s32.totalorder %s15, 0
      %p227 = por %p225, %p226
      %p228 = scmp.ne.s32.totalorder %s220, %s222
      %p229 = scmp.eq.s32.totalorder %s20, 3
      %p230 = por %p228, %p229
      %p231 = scmp.ne.s32.totalorder %s222, %s223
      %p232 = scmp.eq.s32.totalorder %s20, 0
      %p233 = por %p231, %p232
      %p234 = scmp.ne.s32.totalorder %s222, %s223
      %p235 = scmp.eq.s32.totalorder %s21, 3
      %p236 = por %p234, %p235
      %p238 = scmp.ne.s32.totalorder %s223, %s237
      %p239 = scmp.eq.s32.totalorder %s21, 0
      %p240 = por %p238, %p239
      %s241 = ssub.s32 %s22, %s34
      %p242 = scmp.eq.s32.totalorder %s241, 0
      %s244 = sadd.s32 %s243, 1
      %s245 = scalar_select %p242, %s243, %s244
      %p248 = pneg %p242
      %p249 = scmp.eq.s32.totalorder %s15, 3
      %p250 = por %p248, %p249
      %p251 = scmp.ne.s32.totalorder %s243, %s246
      %p252 = scmp.eq.s32.totalorder %s15, 0
      %p253 = por %p251, %p252
      %p254 = scmp.ne.s32.totalorder %s243, %s246
      %p255 = scmp.eq.s32.totalorder %s20, 3
      %p256 = por %p254, %p255
      %p257 = scmp.ne.s32.totalorder %s246, %s247
      %p258 = scmp.eq.s32.totalorder %s20, 0
      %p259 = por %p257, %p258
      %p260 = scmp.ne.s32.totalorder %s246, %s247
      %p261 = scmp.eq.s32.totalorder %s21, 3
      %p262 = por %p260, %p261
      %p264 = scmp.ne.s32.totalorder %s247, %s263
      %p265 = scmp.eq.s32.totalorder %s21, 0
      %p266 = por %p264, %p265
      %p267 = scmp.le.s32.totalorder 1, %s15
      %p268 = scmp.lt.s32.totalorder %s15, 5
      %p269 = pnand %p267, %p268
      %p270 = pneg %p269
      // Predicated region
      $region9: #{sage_forward.3} parent=5 // pred_check
        _
      $region10: #{sage_forward.3} parent=5 // pred_check_branch
        %272 = sbr.rel (%p269) target = $region12
      $region11: #{sage_forward.3} parent=5 // pred_region
        %s273 = ssub.s32 %s15, 1
        // Predicated region
        $region13: #{sage_forward.3} parent=11 // pred_check
          %p274 = pneg %p76
        $region14: #{sage_forward.3} parent=11 // pred_check_branch
          %276 = sbr.rel (%p274) target = $region16
        $region15: #{sage_forward.3} parent=11 // pred_region
          _
        $region16: #{sage_forward.3} parent=11 // pred_fallthru
          _
        // Predicated region
        $region17: #{sage_forward.3} parent=11 // pred_check
          %p277 = pneg %p149
        $region18: #{sage_forward.3} parent=11 // pred_check_branch
          %279 = sbr.rel (%p277) target = $region20
        $region19: #{sage_forward.3} parent=11 // pred_region
          _
        $region20: #{sage_forward.3} parent=11 // pred_fallthru
          _
        // Predicated region
        $region21: #{sage_forward.3} parent=11 // pred_check
          %p280 = pneg %p170
        $region22: #{sage_forward.3} parent=11 // pred_check_branch
          %282 = sbr.rel (%p280) target = $region24
        $region23: #{sage_forward.3} parent=11 // pred_region
          _
        $region24: #{sage_forward.3} parent=11 // pred_fallthru
          _
        // Predicated region
        $region25: #{sage_forward.3} parent=11 // pred_check
          %p283 = pneg %p191
        $region26: #{sage_forward.3} parent=11 // pred_check_branch
          %285 = sbr.rel (%p283) target = $region28
        $region27: #{sage_forward.3} parent=11 // pred_region
          _
        $region28: #{sage_forward.3} parent=11 // pred_fallthru
          _
        // Predicated region
        $region29: #{sage_forward.3} parent=11 // pred_check
          %p286 = pneg %p212
        $region30: #{sage_forward.3} parent=11 // pred_check_branch
          %288 = sbr.rel (%p286) target = $region32
        $region31: #{sage_forward.3} parent=11 // pred_region
          _
        $region32: #{sage_forward.3} parent=11 // pred_fallthru
          _
        // Predicated region
        $region33: #{sage_forward.3} parent=11 // pred_check
          %p289 = pneg %p233
        $region34: #{sage_forward.3} parent=11 // pred_check_branch
          %291 = sbr.rel (%p289) target = $region36
        $region35: #{sage_forward.3} parent=11 // pred_region
          _
        $region36: #{sage_forward.3} parent=11 // pred_fallthru
          _
      $region12: #{sage_forward.3} parent=5 // pred_fallthru
        _
      %p292 = scmp.lt.s32.totalorder %s15, 4
      // Predicated region
      $region37: #{sage_forward.3} parent=5 // pred_check
        %p293 = pneg %p292
      $region38: #{sage_forward.3} parent=5 // pred_check_branch
        %295 = sbr.rel (%p293) target = $region40
      $region39: #{sage_forward.3} parent=5 // pred_region
        // Predicated region
        $region41: #{sage_forward.3} parent=39 // pred_check
          %p296 = pneg %p49
        $region42: #{sage_forward.3} parent=39 // pred_check_branch
          %298 = sbr.rel (%p296) target = $region44
        $region43: #{sage_forward.3} parent=39 // pred_region
          %s299 = sand.u32 %s39, 1
          %s300 = sand.u32 %s39, 1
          %s301 = smul.addr %s300, 32
          %s302 = scalar_lea.vmem [#allocation3], %s301
          %s303 = smul.u32 4, %s22
          %s304 = smul.addr %s303, 2
          %s305 = sadd.s32 %s23, %s304
          %s306 = smul.addr %s305, 8
          %s307 = scalar_lea.vmem %s0, %s306
          // Predicated region
          $region45: #{sage_forward.3} parent=43 // pred_check
            _
          $region46: #{sage_forward.3} parent=43 // pred_check_branch
            %309 = sbr.rel (0) target = $region48
          $region47: #{sage_forward.3} parent=43 // pred_region
            // Predicated region
            $region49: #{sage_forward.3} parent=47 // pred_check
              _
            $region50: #{sage_forward.3} parent=47 // pred_check_branch
              %311 = sbr.rel (0) target = $region52
            $region51: #{sage_forward.3} parent=47 // pred_region
              // Predicated region
              $region64: #{sage_forward.3} parent=51 // pred_check
                _
              $region65: #{sage_forward.3} parent=51 // pred_check_branch
                %332 = sbr.rel (0) target = $region67
              $region66: #{sage_forward.3} parent=51 // pred_region
                loop: start=0, step=1, limit=1
                $region68: #{sage_forward.3} parent=66 // loop_pre_header
                  _
                $region69: #{sage_forward.3} parent=66 // loop_header
                  %s334 = sphi 0, %s338
                  %p335 = scmp.ge.s32.totalorder %s334, 1
                  %s339 = sphi %s307, %s307
                  %s340 = sphi %s302, %s302
                $region70: #{sage_forward.3} parent=66 // loop_header_branch
                  %337 = sbr.rel (%p335) target = $region74
                $region71: #{sage_forward.3} parent=66 // loop_body
                  %v341 = vld [vmem:[%s339] sm:$0xff]
                  %342 = vst [vmem:[%s340] sm:$0xff] %v341
                  %v343 = vld [vmem:[%s339 + $0x10] sm:$0xff]
                  %344 = vst [vmem:[%s340 + $0x8] sm:$0xff] %v343
                  %v345 = vld [vmem:[%s339 + $0x20] sm:$0xff]
                  %346 = vst [vmem:[%s340 + $0x10] sm:$0xff] %v345
                  %v347 = vld [vmem:[%s339 + $0x30] sm:$0xff]
                  %348 = vst [vmem:[%s340 + $0x18] sm:$0xff] %v347
                $region72: #{sage_forward.3} parent=66 // loop_footer
                  %s338 = sadd.s32 1, %s334
                $region73: #{sage_forward.3} parent=66 // loop_footer_branch
                  %333 = sbr.rel target = $region69
                $region74: #{sage_forward.3} parent=66 // loop_exit
                  _
              $region67: #{sage_forward.3} parent=51 // pred_fallthru
                _
              // Predicated region
              $region75: #{sage_forward.3} parent=51 // pred_check
                _
              $region76: #{sage_forward.3} parent=51 // pred_check_branch
                %350 = sbr.rel target = $region78
              $region77: #{sage_forward.3} parent=51 // pred_region
                _
              $region78: #{sage_forward.3} parent=51 // pred_fallthru
                _
            $region52: #{sage_forward.3} parent=47 // pred_fallthru
              _
            // Predicated region
            $region53: #{sage_forward.3} parent=47 // pred_check
              _
            $region54: #{sage_forward.3} parent=47 // pred_check_branch
              %313 = sbr.rel target = $region56
            $region55: #{sage_forward.3} parent=47 // pred_region
              loop: start=0, step=1, limit=1
              $region57: #{sage_forward.3} parent=55 // loop_pre_header
                _
              $region58: #{sage_forward.3} parent=55 // loop_header
                %s316 = sphi 0, %s320
                %p317 = scmp.ge.s32.totalorder %s316, 1
                %s321 = sphi %s307, %s307
                %s322 = sphi %s302, %s302
              $region59: #{sage_forward.3} parent=55 // loop_header_branch
                %319 = sbr.rel (%p317) target = $region63
              $region60: #{sage_forward.3} parent=55 // loop_body
                %v323 = vld [vmem:[%s321] sm:$0xff]
                %324 = vst [vmem:[%s322] sm:$0xff] %v323
                %v325 = vld [vmem:[%s321 + $0x10] sm:$0xff]
                %326 = vst [vmem:[%s322 + $0x8] sm:$0xff] %v325
                %v327 = vld [vmem:[%s321 + $0x20] sm:$0xff]
                %328 = vst [vmem:[%s322 + $0x10] sm:$0xff] %v327
                %v329 = vld [vmem:[%s321 + $0x30] sm:$0xff]
                %330 = vst [vmem:[%s322 + $0x18] sm:$0xff] %v329
              $region61: #{sage_forward.3} parent=55 // loop_footer
                %s320 = sadd.s32 1, %s316
              $region62: #{sage_forward.3} parent=55 // loop_footer_branch
                %315 = sbr.rel target = $region58
              $region63: #{sage_forward.3} parent=55 // loop_exit
                _
            $region56: #{sage_forward.3} parent=47 // pred_fallthru
              _
          $region48: #{sage_forward.3} parent=43 // pred_fallthru
            _
          %351 = vnop
        $region44: #{sage_forward.3} parent=39 // pred_fallthru
          _
        // Predicated region
        $region79: #{sage_forward.3} parent=39 // pred_check
          %p352 = pneg %p96
        $region80: #{sage_forward.3} parent=39 // pred_check_branch
          %354 = sbr.rel (%p352) target = $region82
        $region81: #{sage_forward.3} parent=39 // pred_region
          %s355 = smul.u32 16, %s22
          %p356 = scmp.lt.s32.totalorder %s355, 31
          %s357 = scalar_select %p356, %s355, 31
          %s358 = smul.addr %s357, 4
          %s359 = scalar_lea.vmem %s2, %s358
          %s360 = smul.u32 16, %s22
        $region82: #{sage_forward.3} parent=39 // pred_fallthru
          _
        // Predicated region
        $region83: #{sage_forward.3} parent=39 // pred_check
          %p361 = pneg %p122
        $region84: #{sage_forward.3} parent=39 // pred_check_branch
          %363 = sbr.rel (%p361) target = $region86
        $region85: #{sage_forward.3} parent=39 // pred_region
          %s364 = smul.u32 16, %s22
          %p365 = scmp.lt.s32.totalorder %s364, 31
          %s366 = scalar_select %p365, %s364, 31
          %s367 = smul.addr %s366, 8
          %s368 = scalar_lea.vmem %s3, %s367
          %s369 = smul.u32 16, %s22
        $region86: #{sage_forward.3} parent=39 // pred_fallthru
          _
      $region40: #{sage_forward.3} parent=5 // pred_fallthru
        _
      %p370 = scmp.le.s32.totalorder 1, %s15
      %p371 = scmp.lt.s32.totalorder %s15, 5
      %p372 = pnand %p370, %p371
      %p373 = pneg %p372
      // Predicated region
      $region87: #{sage_forward.3} parent=5 // pred_check
        _
      $region88: #{sage_forward.3} parent=5 // pred_check_branch
        %375 = sbr.rel (%p372) target = $region90
      $region89: #{sage_forward.3} parent=5 // pred_region
        %s376 = ssub.s32 %s15, 1
        %s377 = sand.u32 %s42, 1
        %s378 = sand.u32 %s42, 1
        %s379 = smul.addr %s378, 32
        %s380 = scalar_lea.vmem [#allocation3], %s379
        // Predicated region
        $region91: #{sage_forward.3} parent=89 // pred_check
          %p381 = pneg %p55
        $region92: #{sage_forward.3} parent=89 // pred_check_branch
          %383 = sbr.rel (%p381) target = $region94
        $region93: #{sage_forward.3} parent=89 // pred_region
          _
        $region94: #{sage_forward.3} parent=89 // pred_fallthru
          _
        %s384 = sand.u32 %s42, 1
        %s385 = sand.u32 %s42, 1
        %s386 = smul.addr %s385, 32
        %s387 = scalar_lea.vmem [#allocation3], %s386
        %p388 = pneg %p55
        %p389 = pneg %p52
        %p390 = pneg %p76
        %p391 = pneg %p73
        %s392 = smul.u32 16, %s24
        %p393 = scmp.lt.s32.totalorder %s392, 31
        %s394 = scalar_select %p393, %s392, 31
        %s395 = smul.addr %s394, 4
        %s396 = scalar_lea.vmem %s2, %s395
        %p397 = pneg %p102
        %p398 = pneg %p99
        %s399 = smul.u32 16, %s24
        %p400 = scmp.lt.s32.totalorder %s399, 31
        %s401 = scalar_select %p400, %s399, 31
        %s402 = smul.addr %s401, 8
        %s403 = scalar_lea.vmem %s3, %s402
        %p404 = pneg %p128
        %p405 = pneg %p125
        %p406 = pneg %p149
        %p407 = pneg %p146
        %p408 = pneg %p170
        %p409 = pneg %p167
        %p410 = pneg %p191
        %p411 = pneg %p188
        %p412 = pneg %p212
        %p413 = pneg %p209
        %p414 = pneg %p233
        %p415 = pneg %p230
        %p416 = pneg %p259
        %p417 = pneg %p256
        %s418 = smul.u32 16, %s24
        %p419 = scmp.lt.s32.totalorder %s418, 31
        %s420 = scalar_select %p419, %s418, 31
        %s421 = smul.addr %s420, 8
        %s422 = scalar_lea.vmem %s9, %s421
        %s423 = smul.u32 4, %s24
        %s424 = smul.u32 16, %s24
        %p425 = scmp.lt.s32.totalorder %s424, 31
        %s426 = scalar_select %p425, %s424, 31
        %s427 = smul.addr %s426, 4
        %s428 = scalar_lea.vmem %s2, %s427
        %s429 = smul.u32 16, %s24
        %s430 = smul.u32 16, %s24
        %p431 = scmp.lt.s32.totalorder %s430, 31
        %s432 = scalar_select %p431, %s430, 31
        %s433 = smul.addr %s432, 8
        %s434 = scalar_lea.vmem %s3, %s433
        %s435 = smul.u32 16, %s24
        %s436 = smul.u32 16, %s24
        %p437 = scmp.lt.s32.totalorder %s436, 31
        %s438 = scalar_select %p437, %s436, 31
        %s439 = smul.addr %s438, 8
        %s440 = scalar_lea.vmem %s9, %s439
        %s441 = smul.u32 16, %s24
        %p443 = scmp.eq.s32.totalorder %s25, 0
        // Predicated region
        $region95: #{sage_forward.3} parent=89 // pred_check
          %p444 = pneg %p443
        $region96: #{sage_forward.3} parent=89 // pred_check_branch
          %446 = sbr.rel (%p444) target = $region98
        $region97: #{sage_forward.3} parent=89 // pred_region
          %447 = vst [vmem:[#allocation2] sm:$0xff] 0.0
          %448 = vst [vmem:[#allocation2 + $0x8] sm:$0xff] 0.0
          %449 = vst [vmem:[#allocation2 + $0x10] sm:$0xff] 0.0
          %450 = vst [vmem:[#allocation2 + $0x18] sm:$0xff] 0.0
          %451 = vst [vmem:[#allocation2 + $0x20] sm:$0xff] 0.0
          %452 = vst [vmem:[#allocation2 + $0x28] sm:$0xff] 0.0
          %453 = vst [vmem:[#allocation2 + $0x30] sm:$0xff] 0.0
          %454 = vst [vmem:[#allocation2 + $0x38] sm:$0xff] 0.0
          %455 = vst [vmem:[#allocation2 + $0x40] sm:$0xff] 0.0
          %456 = vst [vmem:[#allocation2 + $0x48] sm:$0xff] 0.0
          %457 = vst [vmem:[#allocation2 + $0x50] sm:$0xff] 0.0
          %458 = vst [vmem:[#allocation2 + $0x58] sm:$0xff] 0.0
          %459 = vst [vmem:[#allocation2 + $0x60] sm:$0xff] 0.0
          %460 = vst [vmem:[#allocation2 + $0x68] sm:$0xff] 0.0
          %461 = vst [vmem:[#allocation2 + $0x70] sm:$0xff] 0.0
          %462 = vst [vmem:[#allocation2 + $0x78] sm:$0xff] 0.0
        $region98: #{sage_forward.3} parent=89 // pred_fallthru
          _
        %v463 = vld [vmem:[%s380] sm:$0xff]
        %v464 = vld [vmem:[%s380 + $0x8] sm:$0xff]
        %v465 = vld [vmem:[%s380 + $0x10] sm:$0xff]
        %v466 = vld [vmem:[%s380 + $0x18] sm:$0xff]
        %v467 = vunpack.c.l.s8.bf16 %v463
        %v468 = vunpack.c.h.s8.bf16 %v463
        %v469 = vunpack.c.l.s8.bf16 %v464
        %v470 = vunpack.c.h.s8.bf16 %v464
        %v471 = vunpack.c.l.s8.bf16 %v465
        %v472 = vunpack.c.h.s8.bf16 %v465
        %v473 = vunpack.c.l.s8.bf16 %v466
        %v474 = vunpack.c.h.s8.bf16 %v466
        %s475 = smul.u32 %s25, 128
        %s476 = sshra.s32 %s475, 3
        %s477 = sand.u32 %s475, 7
        %s478 = smul.addr %s476, 4
        %s479 = scalar_lea.vmem %s1, %s478
        %v480 = vld [vmem:[%s479] sm:$0xf]
        %v481 = vld [vmem:[%s479 + $0x4] sm:$0xf]
        %v482 = vld [vmem:[%s479 + $0x8] sm:$0xf]
        %v483 = vld [vmem:[%s479 + $0xc] sm:$0xf]
        %v484 = vld [vmem:[%s479 + $0x10] sm:$0xf]
        %v485 = vld [vmem:[%s479 + $0x14] sm:$0xf]
        %v486 = vld [vmem:[%s479 + $0x18] sm:$0xf]
        %v487 = vld [vmem:[%s479 + $0x1c] sm:$0xf]
        %v488 = vld [vmem:[%s479 + $0x20] sm:$0xf]
        %v489 = vld [vmem:[%s479 + $0x24] sm:$0xf]
        %v490 = vld [vmem:[%s479 + $0x28] sm:$0xf]
        %v491 = vld [vmem:[%s479 + $0x2c] sm:$0xf]
        %v492 = vld [vmem:[%s479 + $0x30] sm:$0xf]
        %v493 = vld [vmem:[%s479 + $0x34] sm:$0xf]
        %v494 = vld [vmem:[%s479 + $0x38] sm:$0xf]
        %v495 = vld [vmem:[%s479 + $0x3c] sm:$0xf]
        %v496 = vld [vmem:[#allocation2] sm:$0xff]
        %v497 = vld [vmem:[#allocation2 + $0x8] sm:$0xff]
        %v498 = vld [vmem:[#allocation2 + $0x10] sm:$0xff]
        %v499 = vld [vmem:[#allocation2 + $0x18] sm:$0xff]
        %v500 = vld [vmem:[#allocation2 + $0x20] sm:$0xff]
        %v501 = vld [vmem:[#allocation2 + $0x28] sm:$0xff]
        %v502 = vld [vmem:[#allocation2 + $0x30] sm:$0xff]
        %v503 = vld [vmem:[#allocation2 + $0x38] sm:$0xff]
        %v504 = vld [vmem:[#allocation2 + $0x40] sm:$0xff]
        %v505 = vld [vmem:[#allocation2 + $0x48] sm:$0xff]
        %v506 = vld [vmem:[#allocation2 + $0x50] sm:$0xff]
        %v507 = vld [vmem:[#allocation2 + $0x58] sm:$0xff]
        %v508 = vld [vmem:[#allocation2 + $0x60] sm:$0xff]
        %v509 = vld [vmem:[#allocation2 + $0x68] sm:$0xff]
        %v510 = vld [vmem:[#allocation2 + $0x70] sm:$0xff]
        %v511 = vld [vmem:[#allocation2 + $0x78] sm:$0xff]
        %v528 = vunpack.c.l.b16 %v480
        %v529 = vunpack.c.l.b16 %v481
        %v530 = vunpack.c.l.b16 %v482
        %v531 = vunpack.c.l.b16 %v483
        %v532 = vunpack.c.l.b16 %v484
        %v533 = vunpack.c.l.b16 %v485
        %v534 = vunpack.c.l.b16 %v486
        %v535 = vunpack.c.l.b16 %v487
        %v536 = vunpack.c.l.b16 %v488
        %v537 = vunpack.c.l.b16 %v489
        %v538 = vunpack.c.l.b16 %v490
        %v539 = vunpack.c.l.b16 %v491
        %v540 = vunpack.c.l.b16 %v492
        %v541 = vunpack.c.l.b16 %v493
        %v542 = vunpack.c.l.b16 %v494
        %v543 = vunpack.c.l.b16 %v495
        %v544 = vpack.c.b16 %v529, %v528
        %v545 = vpack.c.b16 %v531, %v530
        %v546 = vpack.c.b16 %v533, %v532
        %v547 = vpack.c.b16 %v535, %v534
        %v548 = vpack.c.b16 %v537, %v536
        %v549 = vpack.c.b16 %v539, %v538
        %v550 = vpack.c.b16 %v541, %v540
        %v551 = vpack.c.b16 %v543, %v542
        %560 = vmatprep.subr.bf16.mxu0 0
        %561 = vmatpush1.bf16.msra.mxu0 %v544
        %562 = vmatprep.subr.bf16.mxu0 0
        %563 = vmatpush1.bf16.msra.mxu0 %v545
        %564 = vmatprep.subr.bf16.mxu0 0
        %565 = vmatpush1.bf16.msra.mxu0 %v546
        %566 = vmatprep.subr.bf16.mxu0 0
        %567 = vmatpush1.bf16.msra.mxu0 %v547
        %568 = vmatprep.subr.bf16.mxu0 0
        %569 = vmatpush1.bf16.msra.mxu0 %v548
        %570 = vmatprep.subr.bf16.mxu0 0
        %571 = vmatpush1.bf16.msra.mxu0 %v549
        %572 = vmatprep.subr.bf16.mxu0 0
        %573 = vmatpush1.bf16.msra.mxu0 %v550
        %574 = vmatprep.subr.bf16.mxu0 0
        %575 = vmatpush1.bf16.msra.mxu0 %v551
        %576 = vmatprep.subr.bf16.mxu0 0
        %577 = vmatpush1.bf16.msra.mxu0 0
        %578 = vmatprep.subr.bf16.mxu0 0
        %579 = vmatpush1.bf16.msra.mxu0 0
        %580 = vmatprep.subr.bf16.mxu0 0
        %581 = vmatpush1.bf16.msra.mxu0 0
        %582 = vmatprep.subr.bf16.mxu0 0
        %583 = vmatpush1.bf16.msra.mxu0 0
        %584 = vmatprep.subr.bf16.mxu0 0
        %585 = vmatpush1.bf16.msra.mxu0 0
        %586 = vmatprep.subr.bf16.mxu0 0
        %587 = vmatpush1.bf16.msra.mxu0 0
        %588 = vmatprep.subr.bf16.mxu0 0
        %589 = vmatpush1.bf16.msra.mxu0 0
        %590 = vmatprep.subr.bf16.mxu0 0
        %591 = vmatpush1.bf16.msra.mxu0 0
        %592 = vmatprep.mubr.bf16.mxu0 0
        %593 = vmatmul.mubr.bf16.gmra.mrb[0].mxu0 %v467
        %v594 = vpop.f32.mrb[0].mxu0
        %v595 = vadd.f32 0.0, %v594
        %v596 = vpop.f32.mrb[0].mxu0
        %v597 = vpop.f32.mrb[0].mxu0
        %v598 = vadd.f32 0.0, %v597
        %v599 = vpop.f32.mrb[0].mxu0
        %600 = vmatprep.mubr.bf16.mxu0 0
        %601 = vmatmul.mubr.bf16.gmra.mrb[0].mxu0 %v468
        %v602 = vpop.f32.mrb[0].mxu0
        %v603 = vadd.f32 0.0, %v602
        %v604 = vpop.f32.mrb[0].mxu0
        %v605 = vpop.f32.mrb[0].mxu0
        %v606 = vadd.f32 0.0, %v605
        %v607 = vpop.f32.mrb[0].mxu0
        %608 = vmatprep.mubr.bf16.mxu0 0
        %609 = vmatmul.mubr.bf16.gmra.mrb[0].mxu0 %v469
        %v610 = vpop.f32.mrb[0].mxu0
        %v611 = vadd.f32 0.0, %v610
        %v612 = vpop.f32.mrb[0].mxu0
        %v613 = vpop.f32.mrb[0].mxu0
        %v614 = vadd.f32 0.0, %v613
        %v615 = vpop.f32.mrb[0].mxu0
        %616 = vmatprep.mubr.bf16.mxu0 0
        %617 = vmatmul.mubr.bf16.gmra.mrb[0].mxu0 %v470
        %v618 = vpop.f32.mrb[0].mxu0
        %v619 = vadd.f32 0.0, %v618
        %v620 = vpop.f32.mrb[0].mxu0
        %v621 = vpop.f32.mrb[0].mxu0
        %v622 = vadd.f32 0.0, %v621
        %v623 = vpop.f32.mrb[0].mxu0
        %624 = vmatprep.mubr.bf16.mxu0 0
        %625 = vmatmul.mubr.bf16.gmra.mrb[0].mxu0 %v471
        %v626 = vpop.f32.mrb[0].mxu0
        %v627 = vadd.f32 0.0, %v626
        %v628 = vpop.f32.mrb[0].mxu0
        %v629 = vpop.f32.mrb[0].mxu0
        %v630 = vadd.f32 0.0, %v629
        %v631 = vpop.f32.mrb[0].mxu0
        %632 = vmatprep.mubr.bf16.mxu0 0
        %633 = vmatmul.mubr.bf16.gmra.mrb[0].mxu0 %v472
        %v634 = vpop.f32.mrb[0].mxu0
        %v635 = vadd.f32 0.0, %v634
        %v636 = vpop.f32.mrb[0].mxu0
        %v637 = vpop.f32.mrb[0].mxu0
        %v638 = vadd.f32 0.0, %v637
        %v639 = vpop.f32.mrb[0].mxu0
        %640 = vmatprep.mubr.bf16.mxu0 0
        %641 = vmatmul.mubr.bf16.gmra.mrb[0].mxu0 %v473
        %v642 = vpop.f32.mrb[0].mxu0
        %v643 = vadd.f32 0.0, %v642
        %v644 = vpop.f32.mrb[0].mxu0
        %v645 = vpop.f32.mrb[0].mxu0
        %v646 = vadd.f32 0.0, %v645
        %v647 = vpop.f32.mrb[0].mxu0
        %648 = vmatprep.mubr.bf16.mxu0 0
        %649 = vmatmul.mubr.bf16.gmra.mrb[0].mxu0 %v474
        %v650 = vpop.f32.mrb[0].mxu0
        %v651 = vadd.f32 0.0, %v650
        %v652 = vpop.f32.mrb[0].mxu0
        %v653 = vpop.f32.mrb[0].mxu0
        %v654 = vadd.f32 0.0, %v653
        %v655 = vpop.f32.mrb[0].mxu0
        %656 = vdwg.mxu0
        %v657 = vadd.f32 %v496, %v595
        %v658 = vadd.f32 %v497, %v598
        %v659 = vadd.f32 %v498, %v603
        %v660 = vadd.f32 %v499, %v606
        %v661 = vadd.f32 %v500, %v611
        %v662 = vadd.f32 %v501, %v614
        %v663 = vadd.f32 %v502, %v619
        %v664 = vadd.f32 %v503, %v622
        %v665 = vadd.f32 %v504, %v627
        %v666 = vadd.f32 %v505, %v630
        %v667 = vadd.f32 %v506, %v635
        %v668 = vadd.f32 %v507, %v638
        %v669 = vadd.f32 %v508, %v643
        %v670 = vadd.f32 %v509, %v646
        %v671 = vadd.f32 %v510, %v651
        %v672 = vadd.f32 %v511, %v654
        %673 = vst [vmem:[#allocation2] sm:$0xff] %v657
        %674 = vst [vmem:[#allocation2 + $0x8] sm:$0xff] %v658
        %675 = vst [vmem:[#allocation2 + $0x10] sm:$0xff] %v659
        %676 = vst [vmem:[#allocation2 + $0x18] sm:$0xff] %v660
        %677 = vst [vmem:[#allocation2 + $0x20] sm:$0xff] %v661
        %678 = vst [vmem:[#allocation2 + $0x28] sm:$0xff] %v662
        %679 = vst [vmem:[#allocation2 + $0x30] sm:$0xff] %v663
        %680 = vst [vmem:[#allocation2 + $0x38] sm:$0xff] %v664
        %681 = vst [vmem:[#allocation2 + $0x40] sm:$0xff] %v665
        %682 = vst [vmem:[#allocation2 + $0x48] sm:$0xff] %v666
        %683 = vst [vmem:[#allocation2 + $0x50] sm:$0xff] %v667
        %684 = vst [vmem:[#allocation2 + $0x58] sm:$0xff] %v668
        %685 = vst [vmem:[#allocation2 + $0x60] sm:$0xff] %v669
        %686 = vst [vmem:[#allocation2 + $0x68] sm:$0xff] %v670
        %687 = vst [vmem:[#allocation2 + $0x70] sm:$0xff] %v671
        %688 = vst [vmem:[#allocation2 + $0x78] sm:$0xff] %v672
        %p689 = scmp.eq.s32.totalorder %s25, 1
        // Predicated region
        $region99: #{sage_forward.3} parent=89 // pred_check
          %p690 = pneg %p689
        $region100: #{sage_forward.3} parent=89 // pred_check_branch
          %692 = sbr.rel (%p690) target = $region102
        $region101: #{sage_forward.3} parent=89 // pred_region
          %v693 = vld [vmem:[#allocation2] sm:$0xff]
          %v694 = vld [vmem:[#allocation2 + $0x8] sm:$0xff]
          %v695 = vld [vmem:[#allocation2 + $0x10] sm:$0xff]
          %v696 = vld [vmem:[#allocation2 + $0x18] sm:$0xff]
          %v697 = vld [vmem:[#allocation2 + $0x20] sm:$0xff]
          %v698 = vld [vmem:[#allocation2 + $0x28] sm:$0xff]
          %v699 = vld [vmem:[#allocation2 + $0x30] sm:$0xff]
          %v700 = vld [vmem:[#allocation2 + $0x38] sm:$0xff]
          %v701 = vld [vmem:[#allocation2 + $0x40] sm:$0xff]
          %v702 = vld [vmem:[#allocation2 + $0x48] sm:$0xff]
          %v703 = vld [vmem:[#allocation2 + $0x50] sm:$0xff]
          %v704 = vld [vmem:[#allocation2 + $0x58] sm:$0xff]
          %v705 = vld [vmem:[#allocation2 + $0x60] sm:$0xff]
          %v706 = vld [vmem:[#allocation2 + $0x68] sm:$0xff]
          %v707 = vld [vmem:[#allocation2 + $0x70] sm:$0xff]
          %v708 = vld [vmem:[#allocation2 + $0x78] sm:$0xff]
          %v709 = vld [vmem:[%s434] sm:$0xff]
          %v710 = vld [vmem:[%s434 + $0x8] sm:$0xff]
          %v711 = vld [vmem:[%s434 + $0x10] sm:$0xff]
          %v712 = vld [vmem:[%s434 + $0x18] sm:$0xff]
          %v713 = vld [vmem:[%s434 + $0x20] sm:$0xff]
          %v714 = vld [vmem:[%s434 + $0x28] sm:$0xff]
          %v715 = vld [vmem:[%s434 + $0x30] sm:$0xff]
          %v716 = vld [vmem:[%s434 + $0x38] sm:$0xff]
          %v717 = vld [vmem:[%s434 + $0x40] sm:$0xff]
          %v718 = vld [vmem:[%s434 + $0x48] sm:$0xff]
          %v719 = vld [vmem:[%s434 + $0x50] sm:$0xff]
          %v720 = vld [vmem:[%s434 + $0x58] sm:$0xff]
          %v721 = vld [vmem:[%s434 + $0x60] sm:$0xff]
          %v722 = vld [vmem:[%s434 + $0x68] sm:$0xff]
          %v723 = vld [vmem:[%s434 + $0x70] sm:$0xff]
          %v724 = vld [vmem:[%s434 + $0x78] sm:$0xff]
          %726 = vset.pattern.permute.xlu0 0
          %727 = vperm.xlu0 %726, %v709
          %v728 = vpop.permute.xlu0 %727
          %731 = vset.pattern.permute.xlu0 0
          %732 = vperm.xlu0 %731, %v710
          %v733 = vpop.permute.xlu0 %732
          %736 = vset.pattern.permute.xlu0 0
          %737 = vperm.xlu0 %736, %v711
          %v738 = vpop.permute.xlu0 %737
          %741 = vset.pattern.permute.xlu0 0
          %742 = vperm.xlu0 %741, %v712
          %v743 = vpop.permute.xlu0 %742
          %746 = vset.pattern.permute.xlu0 0
          %747 = vperm.xlu0 %746, %v713
          %v748 = vpop.permute.xlu0 %747
          %751 = vset.pattern.permute.xlu0 0
          %752 = vperm.xlu0 %751, %v714
          %v753 = vpop.permute.xlu0 %752
          %756 = vset.pattern.permute.xlu0 0
          %757 = vperm.xlu0 %756, %v715
          %v758 = vpop.permute.xlu0 %757
          %761 = vset.pattern.permute.xlu0 0
          %762 = vperm.xlu0 %761, %v716
          %v763 = vpop.permute.xlu0 %762
          %766 = vset.pattern.permute.xlu0 0
          %767 = vperm.xlu0 %766, %v717
          %v768 = vpop.permute.xlu0 %767
          %771 = vset.pattern.permute.xlu0 0
          %772 = vperm.xlu0 %771, %v718
          %v773 = vpop.permute.xlu0 %772
          %776 = vset.pattern.permute.xlu0 0
          %777 = vperm.xlu0 %776, %v719
          %v778 = vpop.permute.xlu0 %777
          %781 = vset.pattern.permute.xlu0 0
          %782 = vperm.xlu0 %781, %v720
          %v783 = vpop.permute.xlu0 %782
          %786 = vset.pattern.permute.xlu0 0
          %787 = vperm.xlu0 %786, %v721
          %v788 = vpop.permute.xlu0 %787
          %791 = vset.pattern.permute.xlu0 0
          %792 = vperm.xlu0 %791, %v722
          %v793 = vpop.permute.xlu0 %792
          %796 = vset.pattern.permute.xlu0 0
          %797 = vperm.xlu0 %796, %v723
          %v798 = vpop.permute.xlu0 %797
          %801 = vset.pattern.permute.xlu0 0
          %802 = vperm.xlu0 %801, %v724
          %v803 = vpop.permute.xlu0 %802
          %v805 = vmul.f32 %v693, %v728
          %v806 = vmul.f32 %v694, %v733
          %v807 = vmul.f32 %v695, %v738
          %v808 = vmul.f32 %v696, %v743
          %v809 = vmul.f32 %v697, %v748
          %v810 = vmul.f32 %v698, %v753
          %v811 = vmul.f32 %v699, %v758
          %v812 = vmul.f32 %v700, %v763
          %v813 = vmul.f32 %v701, %v768
          %v814 = vmul.f32 %v702, %v773
          %v815 = vmul.f32 %v703, %v778
          %v816 = vmul.f32 %v704, %v783
          %v817 = vmul.f32 %v705, %v788
          %v818 = vmul.f32 %v706, %v793
          %v819 = vmul.f32 %v707, %v798
          %v820 = vmul.f32 %v708, %v803
          %v821 = vpack.c.bf16 %v806, %v805
          %v822 = vpack.c.bf16 %v808, %v807
          %v823 = vpack.c.bf16 %v810, %v809
          %v824 = vpack.c.bf16 %v812, %v811
          %v825 = vpack.c.bf16 %v814, %v813
          %v826 = vpack.c.bf16 %v816, %v815
          %v827 = vpack.c.bf16 %v818, %v817
          %v828 = vpack.c.bf16 %v820, %v819
          %v829 = vld [vmem:[%s4] sm:$0xf]
          %v830 = vld [vmem:[%s4 + $0x4] sm:$0xf]
          %v831 = vld [vmem:[%s4 + $0x8] sm:$0xf]
          %v832 = vld [vmem:[%s4 + $0xc] sm:$0xf]
          %v833 = vld [vmem:[%s4 + $0x10] sm:$0xf]
          %v834 = vld [vmem:[%s4 + $0x14] sm:$0xf]
          %v835 = vld [vmem:[%s4 + $0x18] sm:$0xf]
          %v836 = vld [vmem:[%s4 + $0x1c] sm:$0xf]
          %v837 = vld [vmem:[%s4 + $0x20] sm:$0xf]
          %v838 = vld [vmem:[%s4 + $0x24] sm:$0xf]
          %v839 = vld [vmem:[%s4 + $0x28] sm:$0xf]
          %v840 = vld [vmem:[%s4 + $0x2c] sm:$0xf]
          %v841 = vld [vmem:[%s4 + $0x30] sm:$0xf]
          %v842 = vld [vmem:[%s4 + $0x34] sm:$0xf]
          %v843 = vld [vmem:[%s4 + $0x38] sm:$0xf]
          %v844 = vld [vmem:[%s4 + $0x3c] sm:$0xf]
          %v845 = vld [vmem:[%s428] sm:$0xf]
          %v846 = vld [vmem:[%s428 + $0x4] sm:$0xf]
          %v847 = vld [vmem:[%s428 + $0x8] sm:$0xf]
          %v848 = vld [vmem:[%s428 + $0xc] sm:$0xf]
          %v849 = vld [vmem:[%s428 + $0x10] sm:$0xf]
          %v850 = vld [vmem:[%s428 + $0x14] sm:$0xf]
          %v851 = vld [vmem:[%s428 + $0x18] sm:$0xf]
          %v852 = vld [vmem:[%s428 + $0x1c] sm:$0xf]
          %v853 = vld [vmem:[%s428 + $0x20] sm:$0xf]
          %v854 = vld [vmem:[%s428 + $0x24] sm:$0xf]
          %v855 = vld [vmem:[%s428 + $0x28] sm:$0xf]
          %v856 = vld [vmem:[%s428 + $0x2c] sm:$0xf]
          %v857 = vld [vmem:[%s428 + $0x30] sm:$0xf]
          %v858 = vld [vmem:[%s428 + $0x34] sm:$0xf]
          %v859 = vld [vmem:[%s428 + $0x38] sm:$0xf]
          %v860 = vld [vmem:[%s428 + $0x3c] sm:$0xf]
          %v861 = vld [vmem:[%s5] sm:$0xf]
          %v862 = vld [vmem:[%s5 + $0x4] sm:$0xf]
          %v863 = vld [vmem:[%s5 + $0x8] sm:$0xf]
          %v864 = vld [vmem:[%s5 + $0xc] sm:$0xf]
          %v865 = vld [vmem:[%s5 + $0x10] sm:$0xf]
          %v866 = vld [vmem:[%s5 + $0x14] sm:$0xf]
          %v867 = vld [vmem:[%s5 + $0x18] sm:$0xf]
          %v868 = vld [vmem:[%s5 + $0x1c] sm:$0xf]
          %v869 = vld [vmem:[%s5 + $0x20] sm:$0xf]
          %v870 = vld [vmem:[%s5 + $0x24] sm:$0xf]
          %v871 = vld [vmem:[%s5 + $0x28] sm:$0xf]
          %v872 = vld [vmem:[%s5 + $0x2c] sm:$0xf]
          %v873 = vld [vmem:[%s5 + $0x30] sm:$0xf]
          %v874 = vld [vmem:[%s5 + $0x34] sm:$0xf]
          %v875 = vld [vmem:[%s5 + $0x38] sm:$0xf]
          %v876 = vld [vmem:[%s5 + $0x3c] sm:$0xf]
          %v893 = vunpack.c.l.b16 %v845
          %v894 = vunpack.c.l.b16 %v846
          %v895 = vunpack.c.l.b16 %v847
          %v896 = vunpack.c.l.b16 %v848
          %v897 = vunpack.c.l.b16 %v849
          %v898 = vunpack.c.l.b16 %v850
          %v899 = vunpack.c.l.b16 %v851
          %v900 = vunpack.c.l.b16 %v852
          %v901 = vunpack.c.l.b16 %v853
          %v902 = vunpack.c.l.b16 %v854
          %v903 = vunpack.c.l.b16 %v855
          %v904 = vunpack.c.l.b16 %v856
          %v905 = vunpack.c.l.b16 %v857
          %v906 = vunpack.c.l.b16 %v858
          %v907 = vunpack.c.l.b16 %v859
          %v908 = vunpack.c.l.b16 %v860
          %v909 = vpack.c.b16 %v894, %v893
          %v910 = vpack.c.b16 %v896, %v895
          %v911 = vpack.c.b16 %v898, %v897
          %v912 = vpack.c.b16 %v900, %v899
          %v913 = vpack.c.b16 %v902, %v901
          %v914 = vpack.c.b16 %v904, %v903
          %v915 = vpack.c.b16 %v906, %v905
          %v916 = vpack.c.b16 %v908, %v907
          %v941 = vunpack.c.l.b16 %v861
          %v942 = vunpack.c.l.b16 %v862
          %v943 = vunpack.c.l.b16 %v863
          %v944 = vunpack.c.l.b16 %v864
          %v945 = vunpack.c.l.b16 %v865
          %v946 = vunpack.c.l.b16 %v866
          %v947 = vunpack.c.l.b16 %v867
          %v948 = vunpack.c.l.b16 %v868
          %v949 = vunpack.c.l.b16 %v869
          %v950 = vunpack.c.l.b16 %v870
          %v951 = vunpack.c.l.b16 %v871
          %v952 = vunpack.c.l.b16 %v872
          %v953 = vunpack.c.l.b16 %v873
          %v954 = vunpack.c.l.b16 %v874
          %v955 = vunpack.c.l.b16 %v875
          %v956 = vunpack.c.l.b16 %v876
          %v957 = vpack.c.b16 %v942, %v941
          %v958 = vpack.c.b16 %v944, %v943
          %v959 = vpack.c.b16 %v946, %v945
          %v960 = vpack.c.b16 %v948, %v947
          %v961 = vpack.c.b16 %v950, %v949
          %v962 = vpack.c.b16 %v952, %v951
          %v963 = vpack.c.b16 %v954, %v953
          %v964 = vpack.c.b16 %v956, %v955
          %973 = vmatprep.subr.bf16.mxu0 0
          %974 = vmatpush1.bf16.msra.mxu0 %v957
          %975 = vmatprep.subr.bf16.mxu0 0
          %976 = vmatpush1.bf16.msra.mxu0 %v958
          %977 = vmatprep.subr.bf16.mxu0 0
          %978 = vmatpush1.bf16.msra.mxu0 %v959
          %979 = vmatprep.subr.bf16.mxu0 0
          %980 = vmatpush1.bf16.msra.mxu0 %v960
          %981 = vmatprep.subr.bf16.mxu0 0
          %982 = vmatpush1.bf16.msra.mxu0 %v961
          %983 = vmatprep.subr.bf16.mxu0 0
          %984 = vmatpush1.bf16.msra.mxu0 %v962
          %985 = vmatprep.subr.bf16.mxu0 0
          %986 = vmatpush1.bf16.msra.mxu0 %v963
          %987 = vmatprep.subr.bf16.mxu0 0
          %988 = vmatpush1.bf16.msra.mxu0 %v964
          %989 = vmatprep.subr.bf16.mxu0 0
          %990 = vmatpush1.bf16.msra.mxu0 0
          %991 = vmatprep.subr.bf16.mxu0 0
          %992 = vmatpush1.bf16.msra.mxu0 0
          %993 = vmatprep.subr.bf16.mxu0 0
          %994 = vmatpush1.bf16.msra.mxu0 0
          %995 = vmatprep.subr.bf16.mxu0 0
          %996 = vmatpush1.bf16.msra.mxu0 0
          %997 = vmatprep.subr.bf16.mxu0 0
          %998 = vmatpush1.bf16.msra.mxu0 0
          %999 = vmatprep.subr.bf16.mxu0 0
          %1000 = vmatpush1.bf16.msra.mxu0 0
          %1001 = vmatprep.subr.bf16.mxu0 0
          %1002 = vmatpush1.bf16.msra.mxu0 0
          %1003 = vmatprep.subr.bf16.mxu0 0
          %1004 = vmatpush1.bf16.msra.mxu0 0
          %1005 = vmatprep.mubr.bf16.mxu0 0
          %1006 = vmatmul.mubr.bf16.gmra.mrb[0].mxu0 %v909
          %v1007 = vpop.f32.mrb[0].mxu0
          %v1008 = vadd.f32 0.0, %v1007
          %v1009 = vpop.f32.mrb[0].mxu0
          %v1010 = vpop.f32.mrb[0].mxu0
          %v1011 = vadd.f32 0.0, %v1010
          %v1012 = vpop.f32.mrb[0].mxu0
          %1013 = vmatprep.mubr.bf16.mxu0 0
          %1014 = vmatmul.mubr.bf16.gmra.mrb[0].mxu0 %v910
          %v1015 = vpop.f32.mrb[0].mxu0
          %v1016 = vadd.f32 0.0, %v1015
          %v1017 = vpop.f32.mrb[0].mxu0
          %v1018 = vpop.f32.mrb[0].mxu0
          %v1019 = vadd.f32 0.0, %v1018
          %v1020 = vpop.f32.mrb[0].mxu0
          %1021 = vmatprep.mubr.bf16.mxu0 0
          %1022 = vmatmul.mubr.bf16.gmra.mrb[0].mxu0 %v911
          %v1023 = vpop.f32.mrb[0].mxu0
          %v1024 = vadd.f32 0.0, %v1023
          %v1025 = vpop.f32.mrb[0].mxu0
          %v1026 = vpop.f32.mrb[0].mxu0
          %v1027 = vadd.f32 0.0, %v1026
          %v1028 = vpop.f32.mrb[0].mxu0
          %1029 = vmatprep.mubr.bf16.mxu0 0
          %1030 = vmatmul.mubr.bf16.gmra.mrb[0].mxu0 %v912
          %v1031 = vpop.f32.mrb[0].mxu0
          %v1032 = vadd.f32 0.0, %v1031
          %v1033 = vpop.f32.mrb[0].mxu0
          %v1034 = vpop.f32.mrb[0].mxu0
          %v1035 = vadd.f32 0.0, %v1034
          %v1036 = vpop.f32.mrb[0].mxu0
          %1037 = vmatprep.mubr.bf16.mxu0 0
          %1038 = vmatmul.mubr.bf16.gmra.mrb[0].mxu0 %v913
          %v1039 = vpop.f32.mrb[0].mxu0
          %v1040 = vadd.f32 0.0, %v1039
          %v1041 = vpop.f32.mrb[0].mxu0
          %v1042 = vpop.f32.mrb[0].mxu0
          %v1043 = vadd.f32 0.0, %v1042
          %v1044 = vpop.f32.mrb[0].mxu0
          %1045 = vmatprep.mubr.bf16.mxu0 0
          %1046 = vmatmul.mubr.bf16.gmra.mrb[0].mxu0 %v914
          %v1047 = vpop.f32.mrb[0].mxu0
          %v1048 = vadd.f32 0.0, %v1047
          %v1049 = vpop.f32.mrb[0].mxu0
          %v1050 = vpop.f32.mrb[0].mxu0
          %v1051 = vadd.f32 0.0, %v1050
          %v1052 = vpop.f32.mrb[0].mxu0
          %1053 = vmatprep.mubr.bf16.mxu0 0
          %1054 = vmatmul.mubr.bf16.gmra.mrb[0].mxu0 %v915
          %v1055 = vpop.f32.mrb[0].mxu0
          %v1056 = vadd.f32 0.0, %v1055
          %v1057 = vpop.f32.mrb[0].mxu0
          %v1058 = vpop.f32.mrb[0].mxu0
          %v1059 = vadd.f32 0.0, %v1058
          %v1060 = vpop.f32.mrb[0].mxu0
          %1061 = vmatprep.mubr.bf16.mxu0 0
          %1062 = vmatmul.mubr.bf16.gmra.mrb[0].mxu0 %v916
          %v1063 = vpop.f32.mrb[0].mxu0
          %v1064 = vadd.f32 0.0, %v1063
          %v1065 = vpop.f32.mrb[0].mxu0
          %v1066 = vpop.f32.mrb[0].mxu0
          %v1067 = vadd.f32 0.0, %v1066
          %v1068 = vpop.f32.mrb[0].mxu0
          %1069 = vdwg.mxu0
          %v1086 = vunpack.c.l.b16 %v829
          %v1087 = vunpack.c.l.b16 %v830
          %v1088 = vunpack.c.l.b16 %v831
          %v1089 = vunpack.c.l.b16 %v832
          %v1090 = vunpack.c.l.b16 %v833
          %v1091 = vunpack.c.l.b16 %v834
          %v1092 = vunpack.c.l.b16 %v835
          %v1093 = vunpack.c.l.b16 %v836
          %v1094 = vunpack.c.l.b16 %v837
          %v1095 = vunpack.c.l.b16 %v838
          %v1096 = vunpack.c.l.b16 %v839
          %v1097 = vunpack.c.l.b16 %v840
          %v1098 = vunpack.c.l.b16 %v841
          %v1099 = vunpack.c.l.b16 %v842
          %v1100 = vunpack.c.l.b16 %v843
          %v1101 = vunpack.c.l.b16 %v844
          %v1102 = vpack.c.b16 %v1087, %v1086
          %v1103 = vpack.c.b16 %v1089, %v1088
          %v1104 = vpack.c.b16 %v1091, %v1090
          %v1105 = vpack.c.b16 %v1093, %v1092
          %v1106 = vpack.c.b16 %v1095, %v1094
          %v1107 = vpack.c.b16 %v1097, %v1096
          %v1108 = vpack.c.b16 %v1099, %v1098
          %v1109 = vpack.c.b16 %v1101, %v1100
          %1118 = vmatprep.subr.bf16.mxu0 0
          %1119 = vmatpush1.bf16.msra.mxu0 %v1102
          %1120 = vmatprep.subr.bf16.mxu0 0
          %1121 = vmatpush1.bf16.msra.mxu0 %v1103
          %1122 = vmatprep.subr.bf16.mxu0 0
          %1123 = vmatpush1.bf16.msra.mxu0 %v1104
          %1124 = vmatprep.subr.bf16.mxu0 0
          %1125 = vmatpush1.bf16.msra.mxu0 %v1105
          %1126 = vmatprep.subr.bf16.mxu0 0
          %1127 = vmatpush1.bf16.msra.mxu0 %v1106
          %1128 = vmatprep.subr.bf16.mxu0 0
          %1129 = vmatpush1.bf16.msra.mxu0 %v1107
          %1130 = vmatprep.subr.bf16.mxu0 0
          %1131 = vmatpush1.bf16.msra.mxu0 %v1108
          %1132 = vmatprep.subr.bf16.mxu0 0
          %1133 = vmatpush1.bf16.msra.mxu0 %v1109
          %1134 = vmatprep.subr.bf16.mxu0 0
          %1135 = vmatpush1.bf16.msra.mxu0 0
          %1136 = vmatprep.subr.bf16.mxu0 0
          %1137 = vmatpush1.bf16.msra.mxu0 0
          %1138 = vmatprep.subr.bf16.mxu0 0
          %1139 = vmatpush1.bf16.msra.mxu0 0
          %1140 = vmatprep.subr.bf16.mxu0 0
          %1141 = vmatpush1.bf16.msra.mxu0 0
          %1142 = vmatprep.subr.bf16.mxu0 0
          %1143 = vmatpush1.bf16.msra.mxu0 0
          %1144 = vmatprep.subr.bf16.mxu0 0
          %1145 = vmatpush1.bf16.msra.mxu0 0
          %1146 = vmatprep.subr.bf16.mxu0 0
          %1147 = vmatpush1.bf16.msra.mxu0 0
          %1148 = vmatprep.subr.bf16.mxu0 0
          %1149 = vmatpush1.bf16.msra.mxu0 0
          %1150 = vmatprep.mubr.bf16.mxu0 0
          %1151 = vmatmul.mubr.bf16.gmra.mrb[0].mxu0 %v821
          %v1152 = vpop.f32.mrb[0].mxu0
          %v1153 = vadd.f32 %v1008, %v1152
          %v1154 = vpop.f32.mrb[0].mxu0
          %v1155 = vpop.f32.mrb[0].mxu0
          %v1156 = vadd.f32 %v1011, %v1155
          %v1157 = vpop.f32.mrb[0].mxu0
          %1158 = vmatprep.mubr.bf16.mxu0 0
          %1159 = vmatmul.mubr.bf16.gmra.mrb[0].mxu0 %v822
          %v1160 = vpop.f32.mrb[0].mxu0
          %v1161 = vadd.f32 %v1016, %v1160
          %v1162 = vpop.f32.mrb[0].mxu0
          %v1163 = vpop.f32.mrb[0].mxu0
          %v1164 = vadd.f32 %v1019, %v1163
          %v1165 = vpop.f32.mrb[0].mxu0
          %1166 = vmatprep.mubr.bf16.mxu0 0
          %1167 = vmatmul.mubr.bf16.gmra.mrb[0].mxu0 %v823
          %v1168 = vpop.f32.mrb[0].mxu0
          %v1169 = vadd.f32 %v1024, %v1168
          %v1170 = vpop.f32.mrb[0].mxu0
          %v1171 = vpop.f32.mrb[0].mxu0
          %v1172 = vadd.f32 %v1027, %v1171
          %v1173 = vpop.f32.mrb[0].mxu0
          %1174 = vmatprep.mubr.bf16.mxu0 0
          %1175 = vmatmul.mubr.bf16.gmra.mrb[0].mxu0 %v824
          %v1176 = vpop.f32.mrb[0].mxu0
          %v1177 = vadd.f32 %v1032, %v1176
          %v1178 = vpop.f32.mrb[0].mxu0
          %v1179 = vpop.f32.mrb[0].mxu0
          %v1180 = vadd.f32 %v1035, %v1179
          %v1181 = vpop.f32.mrb[0].mxu0
          %1182 = vmatprep.mubr.bf16.mxu0 0
          %1183 = vmatmul.mubr.bf16.gmra.mrb[0].mxu0 %v825
          %v1184 = vpop.f32.mrb[0].mxu0
          %v1185 = vadd.f32 %v1040, %v1184
          %v1186 = vpop.f32.mrb[0].mxu0
          %v1187 = vpop.f32.mrb[0].mxu0
          %v1188 = vadd.f32 %v1043, %v1187
          %v1189 = vpop.f32.mrb[0].mxu0
          %1190 = vmatprep.mubr.bf16.mxu0 0
          %1191 = vmatmul.mubr.bf16.gmra.mrb[0].mxu0 %v826
          %v1192 = vpop.f32.mrb[0].mxu0
          %v1193 = vadd.f32 %v1048, %v1192
          %v1194 = vpop.f32.mrb[0].mxu0
          %v1195 = vpop.f32.mrb[0].mxu0
          %v1196 = vadd.f32 %v1051, %v1195
          %v1197 = vpop.f32.mrb[0].mxu0
          %1198 = vmatprep.mubr.bf16.mxu0 0
          %1199 = vmatmul.mubr.bf16.gmra.mrb[0].mxu0 %v827
          %v1200 = vpop.f32.mrb[0].mxu0
          %v1201 = vadd.f32 %v1056, %v1200
          %v1202 = vpop.f32.mrb[0].mxu0
          %v1203 = vpop.f32.mrb[0].mxu0
          %v1204 = vadd.f32 %v1059, %v1203
          %v1205 = vpop.f32.mrb[0].mxu0
          %1206 = vmatprep.mubr.bf16.mxu0 0
          %1207 = vmatmul.mubr.bf16.gmra.mrb[0].mxu0 %v828
          %v1208 = vpop.f32.mrb[0].mxu0
          %v1209 = vadd.f32 %v1064, %v1208
          %v1210 = vpop.f32.mrb[0].mxu0
          %v1211 = vpop.f32.mrb[0].mxu0
          %v1212 = vadd.f32 %v1067, %v1211
          %v1213 = vpop.f32.mrb[0].mxu0
          %1214 = vdwg.mxu0
          %v1215 = vld [vmem:[%s6] sm:$0x1]
          %v1217 = vlaneseq
          %v1218 = vshrl.u32 %v1217, 7
          %v1219 = vsub.s32 0, %v1218
          %v1220 = vrot.slane %v1215, %v1219
          %v1222 = vadd.f32 %v1153, %v1220
          %v1223 = vadd.f32 %v1156, %v1220
          %v1224 = vadd.f32 %v1161, %v1220
          %v1225 = vadd.f32 %v1164, %v1220
          %v1226 = vadd.f32 %v1169, %v1220
          %v1227 = vadd.f32 %v1172, %v1220
          %v1228 = vadd.f32 %v1177, %v1220
          %v1229 = vadd.f32 %v1180, %v1220
          %v1230 = vadd.f32 %v1185, %v1220
          %v1231 = vadd.f32 %v1188, %v1220
          %v1232 = vadd.f32 %v1193, %v1220
          %v1233 = vadd.f32 %v1196, %v1220
          %v1234 = vadd.f32 %v1201, %v1220
          %v1235 = vadd.f32 %v1204, %v1220
          %v1236 = vadd.f32 %v1209, %v1220
          %v1237 = vadd.f32 %v1212, %v1220
          %v1238 = vmax.f32 %v1222, 0.0
          %v1239 = vmax.f32 %v1223, 0.0
          %v1240 = vmax.f32 %v1224, 0.0
          %v1241 = vmax.f32 %v1225, 0.0
          %v1242 = vmax.f32 %v1226, 0.0
          %v1243 = vmax.f32 %v1227, 0.0
          %v1244 = vmax.f32 %v1228, 0.0
          %v1245 = vmax.f32 %v1229, 0.0
          %v1246 = vmax.f32 %v1230, 0.0
          %v1247 = vmax.f32 %v1231, 0.0
          %v1248 = vmax.f32 %v1232, 0.0
          %v1249 = vmax.f32 %v1233, 0.0
          %v1250 = vmax.f32 %v1234, 0.0
          %v1251 = vmax.f32 %v1235, 0.0
          %v1252 = vmax.f32 %v1236, 0.0
          %v1253 = vmax.f32 %v1237, 0.0
          %v1254 = vpack.c.bf16 %v1239, %v1238
          %v1255 = vpack.c.bf16 %v1241, %v1240
          %v1256 = vpack.c.bf16 %v1243, %v1242
          %v1257 = vpack.c.bf16 %v1245, %v1244
          %v1258 = vpack.c.bf16 %v1247, %v1246
          %v1259 = vpack.c.bf16 %v1249, %v1248
          %v1260 = vpack.c.bf16 %v1251, %v1250
          %v1261 = vpack.c.bf16 %v1253, %v1252
          %v1262 = vld [vmem:[%s7] sm:$0xf]
          %v1263 = vld [vmem:[%s7 + $0x4] sm:$0xf]
          %v1264 = vld [vmem:[%s7 + $0x8] sm:$0xf]
          %v1265 = vld [vmem:[%s7 + $0xc] sm:$0xf]
          %v1266 = vld [vmem:[%s7 + $0x10] sm:$0xf]
          %v1267 = vld [vmem:[%s7 + $0x14] sm:$0xf]
          %v1268 = vld [vmem:[%s7 + $0x18] sm:$0xf]
          %v1269 = vld [vmem:[%s7 + $0x1c] sm:$0xf]
          %v1270 = vld [vmem:[%s7 + $0x20] sm:$0xf]
          %v1271 = vld [vmem:[%s7 + $0x24] sm:$0xf]
          %v1272 = vld [vmem:[%s7 + $0x28] sm:$0xf]
          %v1273 = vld [vmem:[%s7 + $0x2c] sm:$0xf]
          %v1274 = vld [vmem:[%s7 + $0x30] sm:$0xf]
          %v1275 = vld [vmem:[%s7 + $0x34] sm:$0xf]
          %v1276 = vld [vmem:[%s7 + $0x38] sm:$0xf]
          %v1277 = vld [vmem:[%s7 + $0x3c] sm:$0xf]
          %v1278 = vld [vmem:[%s8] sm:$0x1]
          %v1280 = vlaneseq
          %v1281 = vshrl.u32 %v1280, 7
          %v1282 = vsub.s32 0, %v1281
          %v1283 = vrot.slane %v1278, %v1282
          %v1301 = vunpack.c.l.b16 %v1262
          %v1302 = vunpack.c.l.b16 %v1263
          %v1303 = vunpack.c.l.b16 %v1264
          %v1304 = vunpack.c.l.b16 %v1265
          %v1305 = vunpack.c.l.b16 %v1266
          %v1306 = vunpack.c.l.b16 %v1267
          %v1307 = vunpack.c.l.b16 %v1268
          %v1308 = vunpack.c.l.b16 %v1269
          %v1309 = vunpack.c.l.b16 %v1270
          %v1310 = vunpack.c.l.b16 %v1271
          %v1311 = vunpack.c.l.b16 %v1272
          %v1312 = vunpack.c.l.b16 %v1273
          %v1313 = vunpack.c.l.b16 %v1274
          %v1314 = vunpack.c.l.b16 %v1275
          %v1315 = vunpack.c.l.b16 %v1276
          %v1316 = vunpack.c.l.b16 %v1277
          %v1317 = vpack.c.b16 %v1302, %v1301
          %v1318 = vpack.c.b16 %v1304, %v1303
          %v1319 = vpack.c.b16 %v1306, %v1305
          %v1320 = vpack.c.b16 %v1308, %v1307
          %v1321 = vpack.c.b16 %v1310, %v1309
          %v1322 = vpack.c.b16 %v1312, %v1311
          %v1323 = vpack.c.b16 %v1314, %v1313
          %v1324 = vpack.c.b16 %v1316, %v1315
          %1333 = vmatprep.subr.bf16.mxu0 0
          %1334 = vmatpush1.bf16.msra.mxu0 %v1317
          %1335 = vmatprep.subr.bf16.mxu0 0
          %1336 = vmatpush1.bf16.msra.mxu0 %v1318
          %1337 = vmatprep.subr.bf16.mxu0 0
          %1338 = vmatpush1.bf16.msra.mxu0 %v1319
          %1339 = vmatprep.subr.bf16.mxu0 0
          %1340 = vmatpush1.bf16.msra.mxu0 %v1320
          %1341 = vmatprep.subr.bf16.mxu0 0
          %1342 = vmatpush1.bf16.msra.mxu0 %v1321
          %1343 = vmatprep.subr.bf16.mxu0 0
          %1344 = vmatpush1.bf16.msra.mxu0 %v1322
          %1345 = vmatprep.subr.bf16.mxu0 0
          %1346 = vmatpush1.bf16.msra.mxu0 %v1323
          %1347 = vmatprep.subr.bf16.mxu0 0
          %1348 = vmatpush1.bf16.msra.mxu0 %v1324
          %1349 = vmatprep.subr.bf16.mxu0 0
          %1350 = vmatpush1.bf16.msra.mxu0 0
          %1351 = vmatprep.subr.bf16.mxu0 0
          %1352 = vmatpush1.bf16.msra.mxu0 0
          %1353 = vmatprep.subr.bf16.mxu0 0
          %1354 = vmatpush1.bf16.msra.mxu0 0
          %1355 = vmatprep.subr.bf16.mxu0 0
          %1356 = vmatpush1.bf16.msra.mxu0 0
          %1357 = vmatprep.subr.bf16.mxu0 0
          %1358 = vmatpush1.bf16.msra.mxu0 0
          %1359 = vmatprep.subr.bf16.mxu0 0
          %1360 = vmatpush1.bf16.msra.mxu0 0
          %1361 = vmatprep.subr.bf16.mxu0 0
          %1362 = vmatpush1.bf16.msra.mxu0 0
          %1363 = vmatprep.subr.bf16.mxu0 0
          %1364 = vmatpush1.bf16.msra.mxu0 0
          %1365 = vmatprep.mubr.bf16.mxu0 0
          %1366 = vmatmul.mubr.bf16.gmra.mrb[0].mxu0 %v1254
          %v1367 = vpop.f32.mrb[0].mxu0
          %v1368 = vadd.f32 %v1283, %v1367
          %v1369 = vpop.f32.mrb[0].mxu0
          %v1370 = vpop.f32.mrb[0].mxu0
          %v1371 = vadd.f32 %v1283, %v1370
          %v1372 = vpop.f32.mrb[0].mxu0
          %1373 = vmatprep.mubr.bf16.mxu0 0
          %1374 = vmatmul.mubr.bf16.gmra.mrb[0].mxu0 %v1255
          %v1375 = vpop.f32.mrb[0].mxu0
          %v1376 = vadd.f32 %v1283, %v1375
          %v1377 = vpop.f32.mrb[0].mxu0
          %v1378 = vpop.f32.mrb[0].mxu0
          %v1379 = vadd.f32 %v1283, %v1378
          %v1380 = vpop.f32.mrb[0].mxu0
          %1381 = vmatprep.mubr.bf16.mxu0 0
          %1382 = vmatmul.mubr.bf16.gmra.mrb[0].mxu0 %v1256
          %v1383 = vpop.f32.mrb[0].mxu0
          %v1384 = vadd.f32 %v1283, %v1383
          %v1385 = vpop.f32.mrb[0].mxu0
          %v1386 = vpop.f32.mrb[0].mxu0
          %v1387 = vadd.f32 %v1283, %v1386
          %v1388 = vpop.f32.mrb[0].mxu0
          %1389 = vmatprep.mubr.bf16.mxu0 0
          %1390 = vmatmul.mubr.bf16.gmra.mrb[0].mxu0 %v1257
          %v1391 = vpop.f32.mrb[0].mxu0
          %v1392 = vadd.f32 %v1283, %v1391
          %v1393 = vpop.f32.mrb[0].mxu0
          %v1394 = vpop.f32.mrb[0].mxu0
          %v1395 = vadd.f32 %v1283, %v1394
          %v1396 = vpop.f32.mrb[0].mxu0
          %1397 = vmatprep.mubr.bf16.mxu0 0
          %1398 = vmatmul.mubr.bf16.gmra.mrb[0].mxu0 %v1258
          %v1399 = vpop.f32.mrb[0].mxu0
          %v1400 = vadd.f32 %v1283, %v1399
          %v1401 = vpop.f32.mrb[0].mxu0
          %v1402 = vpop.f32.mrb[0].mxu0
          %v1403 = vadd.f32 %v1283, %v1402
          %v1404 = vpop.f32.mrb[0].mxu0
          %1405 = vmatprep.mubr.bf16.mxu0 0
          %1406 = vmatmul.mubr.bf16.gmra.mrb[0].mxu0 %v1259
          %v1407 = vpop.f32.mrb[0].mxu0
          %v1408 = vadd.f32 %v1283, %v1407
          %v1409 = vpop.f32.mrb[0].mxu0
          %v1410 = vpop.f32.mrb[0].mxu0
          %v1411 = vadd.f32 %v1283, %v1410
          %v1412 = vpop.f32.mrb[0].mxu0
          %1413 = vmatprep.mubr.bf16.mxu0 0
          %1414 = vmatmul.mubr.bf16.gmra.mrb[0].mxu0 %v1260
          %v1415 = vpop.f32.mrb[0].mxu0
          %v1416 = vadd.f32 %v1283, %v1415
          %v1417 = vpop.f32.mrb[0].mxu0
          %v1418 = vpop.f32.mrb[0].mxu0
          %v1419 = vadd.f32 %v1283, %v1418
          %v1420 = vpop.f32.mrb[0].mxu0
          %1421 = vmatprep.mubr.bf16.mxu0 0
          %1422 = vmatmul.mubr.bf16.gmra.mrb[0].mxu0 %v1261
          %v1423 = vpop.f32.mrb[0].mxu0
          %v1424 = vadd.f32 %v1283, %v1423
          %v1425 = vpop.f32.mrb[0].mxu0
          %v1426 = vpop.f32.mrb[0].mxu0
          %v1427 = vadd.f32 %v1283, %v1426
          %v1428 = vpop.f32.mrb[0].mxu0
          %1429 = vdwg.mxu0
          %1430 = vmax.xlane.f32.xlu0 %v1368
          %v1431 = vpop.xlane.xlu0 %1430
          %1432 = vmax.xlane.f32.xlu0 %v1371
          %v1433 = vpop.xlane.xlu0 %1432
          %1434 = vmax.xlane.f32.xlu0 %v1376
          %v1435 = vpop.xlane.xlu0 %1434
          %1436 = vmax.xlane.f32.xlu0 %v1379
          %v1437 = vpop.xlane.xlu0 %1436
          %1438 = vmax.xlane.f32.xlu0 %v1384
          %v1439 = vpop.xlane.xlu0 %1438
          %1440 = vmax.xlane.f32.xlu0 %v1387
          %v1441 = vpop.xlane.xlu0 %1440
          %1442 = vmax.xlane.f32.xlu0 %v1392
          %v1443 = vpop.xlane.xlu0 %1442
          %1444 = vmax.xlane.f32.xlu0 %v1395
          %v1445 = vpop.xlane.xlu0 %1444
          %1446 = vmax.xlane.f32.xlu0 %v1400
          %v1447 = vpop.xlane.xlu0 %1446
          %1448 = vmax.xlane.f32.xlu0 %v1403
          %v1449 = vpop.xlane.xlu0 %1448
          %1450 = vmax.xlane.f32.xlu0 %v1408
          %v1451 = vpop.xlane.xlu0 %1450
          %1452 = vmax.xlane.f32.xlu0 %v1411
          %v1453 = vpop.xlane.xlu0 %1452
          %1454 = vmax.xlane.f32.xlu0 %v1416
          %v1455 = vpop.xlane.xlu0 %1454
          %1456 = vmax.xlane.f32.xlu0 %v1419
          %v1457 = vpop.xlane.xlu0 %1456
          %1458 = vmax.xlane.f32.xlu0 %v1424
          %v1459 = vpop.xlane.xlu0 %1458
          %1460 = vmax.xlane.f32.xlu0 %v1427
          %v1461 = vpop.xlane.xlu0 %1460
          %v1462 = vsub.f32 %v1368, %v1431
          %v1463 = vsub.f32 %v1371, %v1433
          %v1464 = vsub.f32 %v1376, %v1435
          %v1465 = vsub.f32 %v1379, %v1437
          %v1466 = vsub.f32 %v1384, %v1439
          %v1467 = vsub.f32 %v1387, %v1441
          %v1468 = vsub.f32 %v1392, %v1443
          %v1469 = vsub.f32 %v1395, %v1445
          %v1470 = vsub.f32 %v1400, %v1447
          %v1471 = vsub.f32 %v1403, %v1449
          %v1472 = vsub.f32 %v1408, %v1451
          %v1473 = vsub.f32 %v1411, %v1453
          %v1474 = vsub.f32 %v1416, %v1455
          %v1475 = vsub.f32 %v1419, %v1457
          %v1476 = vsub.f32 %v1424, %v1459
          %v1477 = vsub.f32 %v1427, %v1461
          %v1478 = vmul.f32 %v1462, 1.442695
          %v1479 = vpow.pop %v1478
          %v1480 = vmul.f32 %v1463, 1.442695
          %v1481 = vpow.pop %v1480
          %v1482 = vmul.f32 %v1464, 1.442695
          %v1483 = vpow.pop %v1482
          %v1484 = vmul.f32 %v1465, 1.442695
          %v1485 = vpow.pop %v1484
          %v1486 = vmul.f32 %v1466, 1.442695
          %v1487 = vpow.pop %v1486
          %v1488 = vmul.f32 %v1467, 1.442695
          %v1489 = vpow.pop %v1488
          %v1490 = vmul.f32 %v1468, 1.442695
          %v1491 = vpow.pop %v1490
          %v1492 = vmul.f32 %v1469, 1.442695
          %v1493 = vpow.pop %v1492
          %v1494 = vmul.f32 %v1470, 1.442695
          %v1495 = vpow.pop %v1494
          %v1496 = vmul.f32 %v1471, 1.442695
          %v1497 = vpow.pop %v1496
          %v1498 = vmul.f32 %v1472, 1.442695
          %v1499 = vpow.pop %v1498
          %v1500 = vmul.f32 %v1473, 1.442695
          %v1501 = vpow.pop %v1500
          %v1502 = vmul.f32 %v1474, 1.442695
          %v1503 = vpow.pop %v1502
          %v1504 = vmul.f32 %v1475, 1.442695
          %v1505 = vpow.pop %v1504
          %v1506 = vmul.f32 %v1476, 1.442695
          %v1507 = vpow.pop %v1506
          %v1508 = vmul.f32 %v1477, 1.442695
          %v1509 = vpow.pop %v1508
          %1510 = vadd.xlane.f32.xlu0 %v1479
          %v1511 = vpop.xlane.xlu0 %1510
          %1512 = vadd.xlane.f32.xlu0 %v1481
          %v1513 = vpop.xlane.xlu0 %1512
          %1514 = vadd.xlane.f32.xlu0 %v1483
          %v1515 = vpop.xlane.xlu0 %1514
          %1516 = vadd.xlane.f32.xlu0 %v1485
          %v1517 = vpop.xlane.xlu0 %1516
          %1518 = vadd.xlane.f32.xlu0 %v1487
          %v1519 = vpop.xlane.xlu0 %1518
          %1520 = vadd.xlane.f32.xlu0 %v1489
          %v1521 = vpop.xlane.xlu0 %1520
          %1522 = vadd.xlane.f32.xlu0 %v1491
          %v1523 = vpop.xlane.xlu0 %1522
          %1524 = vadd.xlane.f32.xlu0 %v1493
          %v1525 = vpop.xlane.xlu0 %1524
          %1526 = vadd.xlane.f32.xlu0 %v1495
          %v1527 = vpop.xlane.xlu0 %1526
          %1528 = vadd.xlane.f32.xlu0 %v1497
          %v1529 = vpop.xlane.xlu0 %1528
          %1530 = vadd.xlane.f32.xlu0 %v1499
          %v1531 = vpop.xlane.xlu0 %1530
          %1532 = vadd.xlane.f32.xlu0 %v1501
          %v1533 = vpop.xlane.xlu0 %1532
          %1534 = vadd.xlane.f32.xlu0 %v1503
          %v1535 = vpop.xlane.xlu0 %1534
          %1536 = vadd.xlane.f32.xlu0 %v1505
          %v1537 = vpop.xlane.xlu0 %1536
          %1538 = vadd.xlane.f32.xlu0 %v1507
          %v1539 = vpop.xlane.xlu0 %1538
          %1540 = vadd.xlane.f32.xlu0 %v1509
          %v1541 = vpop.xlane.xlu0 %1540
          %v1542 = vrcp.pop %v1511
          %v1543 = vrcp.pop %v1513
          %v1544 = vrcp.pop %v1515
          %v1545 = vrcp.pop %v1517
          %v1546 = vrcp.pop %v1519
          %v1547 = vrcp.pop %v1521
          %v1548 = vrcp.pop %v1523
          %v1549 = vrcp.pop %v1525
          %v1550 = vrcp.pop %v1527
          %v1551 = vrcp.pop %v1529
          %v1552 = vrcp.pop %v1531
          %v1553 = vrcp.pop %v1533
          %v1554 = vrcp.pop %v1535
          %v1555 = vrcp.pop %v1537
          %v1556 = vrcp.pop %v1539
          %v1557 = vrcp.pop %v1541
          %v1558 = vmul.f32 %v1479, %v1542
          %v1559 = vmul.f32 %v1481, %v1543
          %v1560 = vmul.f32 %v1483, %v1544
          %v1561 = vmul.f32 %v1485, %v1545
          %v1562 = vmul.f32 %v1487, %v1546
          %v1563 = vmul.f32 %v1489, %v1547
          %v1564 = vmul.f32 %v1491, %v1548
          %v1565 = vmul.f32 %v1493, %v1549
          %v1566 = vmul.f32 %v1495, %v1550
          %v1567 = vmul.f32 %v1497, %v1551
          %v1568 = vmul.f32 %v1499, %v1552
          %v1569 = vmul.f32 %v1501, %v1553
          %v1570 = vmul.f32 %v1503, %v1554
          %v1571 = vmul.f32 %v1505, %v1555
          %v1572 = vmul.f32 %v1507, %v1556
          %v1573 = vmul.f32 %v1509, %v1557
          %1574 = vst [vmem:[%s440] sm:$0xff] %v1558
          %1575 = vst [vmem:[%s440 + $0x8] sm:$0xff] %v1559
          %1576 = vst [vmem:[%s440 + $0x10] sm:$0xff] %v1560
          %1577 = vst [vmem:[%s440 + $0x18] sm:$0xff] %v1561
          %1578 = vst [vmem:[%s440 + $0x20] sm:$0xff] %v1562
          %1579 = vst [vmem:[%s440 + $0x28] sm:$0xff] %v1563
          %1580 = vst [vmem:[%s440 + $0x30] sm:$0xff] %v1564
          %1581 = vst [vmem:[%s440 + $0x38] sm:$0xff] %v1565
          %1582 = vst [vmem:[%s440 + $0x40] sm:$0xff] %v1566
          %1583 = vst [vmem:[%s440 + $0x48] sm:$0xff] %v1567
          %1584 = vst [vmem:[%s440 + $0x50] sm:$0xff] %v1568
          %1585 = vst [vmem:[%s440 + $0x58] sm:$0xff] %v1569
          %1586 = vst [vmem:[%s440 + $0x60] sm:$0xff] %v1570
          %1587 = vst [vmem:[%s440 + $0x68] sm:$0xff] %v1571
          %1588 = vst [vmem:[%s440 + $0x70] sm:$0xff] %v1572
          %1589 = vst [vmem:[%s440 + $0x78] sm:$0xff] %v1573
        $region102: #{sage_forward.3} parent=89 // pred_fallthru
          _
        %s1590 = smul.u32 16, %s24
        %p1591 = scmp.lt.s32.totalorder %s1590, 31
        %s1592 = scalar_select %p1591, %s1590, 31
        %s1593 = smul.addr %s1592, 8
        %s1594 = scalar_lea.vmem %s9, %s1593
        // Predicated region
        $region103: #{sage_forward.3} parent=89 // pred_check
          %p1595 = pneg %p256
        $region104: #{sage_forward.3} parent=89 // pred_check_branch
          %1597 = sbr.rel (%p1595) target = $region106
        $region105: #{sage_forward.3} parent=89 // pred_region
          %s1598 = smul.u32 16, %s24
        $region106: #{sage_forward.3} parent=89 // pred_fallthru
          _
      $region90: #{sage_forward.3} parent=5 // pred_fallthru
        _
      %p1599 = scmp.le.s32.totalorder 2, %s15
      // Predicated region
      $region107: #{sage_forward.3} parent=5 // pred_check
        %p1600 = pneg %p1599
      $region108: #{sage_forward.3} parent=5 // pred_check_branch
        %1602 = sbr.rel (%p1600) target = $region110
      $region109: #{sage_forward.3} parent=5 // pred_region
        %s1603 = ssub.s32 %s15, 2
        // Predicated region
        $region111: #{sage_forward.3} parent=109 // pred_check
          %p1604 = pneg %p262
        $region112: #{sage_forward.3} parent=109 // pred_check_branch
          %1606 = sbr.rel (%p1604) target = $region114
        $region113: #{sage_forward.3} parent=109 // pred_region
          %s1607 = smul.u32 16, %s26
          %p1608 = scmp.lt.s32.totalorder %s1607, 31
          %s1609 = scalar_select %p1608, %s1607, 31
          %s1610 = smul.addr %s1609, 8
          %s1611 = scalar_lea.vmem %s9, %s1610
        $region114: #{sage_forward.3} parent=109 // pred_fallthru
          _
      $region110: #{sage_forward.3} parent=5 // pred_fallthru
        _
    $region6: #{sage_forward.3} parent=1 // loop_footer
      %s19 = sadd.s32 1, %s15
    $region7: #{sage_forward.3} parent=1 // loop_footer_branch
      %14 = sbr.rel target = $region3
    $region8: #{sage_forward.3} parent=1 // loop_exit
      _

</llo_original>
